<compile_context>
chip_gen: v7x
topology: tpu7x:2x2x1
jax: 0.10.0
libtpu: 0.0.40
codegen_flags: <defaults>
</compile_context>

<pallas_src>
import functools

import jax
import jax.numpy as jnp
from jax.experimental import pallas as pl
from jax.experimental.pallas import tpu as pltpu


def _round_up(v, m):
    return v + (-v) % m


# --------------------------------------------------------------------------- #
# Pallas kernel: multi-tap (im2col-free) matmul + bias + PReLU
# --------------------------------------------------------------------------- #
def _tap_conv_kernel(x_ref, w_ref, b_ref, alpha_ref, o_ref, *, tap_offsets):
    # x_ref     : (1, K, Lin)     bf16  one image, padded flat spatial on lanes
    # w_ref     : (T, Cout, K)    bf16  per-tap weight matrices (stationary)
    # b_ref     : (Cout, 1)       f32   bias
    # alpha_ref : (1,)            f32   PReLU slope, in SMEM
    # o_ref     : (1, Cout, Lout) bf16
    l_out = o_ref.shape[2]
    xv = x_ref[0]                                   # (K, Lin) loaded once
    acc = jnp.zeros((o_ref.shape[1], l_out), jnp.float32)
    for t, ofs in enumerate(tap_offsets):           # unrolled static tap loop
        x_t = xv[:, ofs:ofs + l_out]                # static lane-offset slice
        acc = acc + jnp.dot(w_ref[t], x_t, preferred_element_type=jnp.float32)
    y = acc + b_ref[...]
    a = alpha_ref[0]
    o_ref[0] = jnp.where(y >= 0.0, y, a * y).astype(o_ref.dtype)


def _fused_conv(x3d, w_taps, b, alpha, tap_offsets, l_out,
                out_dtype=jnp.bfloat16):
    """out[n] = PReLU(sum_t w_taps[t] @ x3d[n, :, ofs_t:ofs_t+l_out] + b)."""
    n_img, k_in, l_in = x3d.shape
    n_tap, c_out, _ = w_taps.shape
    assert max(tap_offsets) + l_out <= l_in

    kernel = functools.partial(
        _tap_conv_kernel, tap_offsets=tuple(int(o) for o in tap_offsets))

    flops = 2 * n_img * n_tap * c_out * k_in * l_out
    bytes_accessed = (n_img * k_in * l_in * 2 + n_tap * c_out * k_in * 2
                      + n_img * c_out * l_out * 2 + c_out * 4)

    return pl.pallas_call(
        kernel,
        out_shape=jax.ShapeDtypeStruct((n_img, c_out, l_out), out_dtype),
        grid=(n_img,),
        in_specs=[
            pl.BlockSpec((1, k_in, l_in), lambda n: (n, 0, 0)),
            pl.BlockSpec((n_tap, c_out, k_in), lambda n: (0, 0, 0)),
            pl.BlockSpec((c_out, 1), lambda n: (0, 0)),
            pl.BlockSpec(memory_space=pltpu.MemorySpace.SMEM),
        ],
        out_specs=pl.BlockSpec((1, c_out, l_out), lambda n: (n, 0, 0)),
        compiler_params=pltpu.CompilerParams(
            dimension_semantics=("parallel",)),
        cost_estimate=pl.CostEstimate(flops=flops, transcendentals=0,
                                      bytes_accessed=bytes_accessed),
    )(x3d.astype(jnp.bfloat16), w_taps.astype(jnp.bfloat16),
      b.reshape(c_out, 1).astype(jnp.float32),
      jnp.reshape(jnp.asarray(alpha, jnp.float32), (1,)))


# --------------------------------------------------------------------------- #
# Layer wrappers (features kept as (N, C, H, W) bf16; all reshapes are layout
# plumbing at 1x the feature bytes — no im2col amplification)
# --------------------------------------------------------------------------- #
def _conv1x1_prelu(feat, w_oihw, b, alpha):
    n, c_in, h, w = feat.shape
    c_out = w_oihw.shape[0]
    l = h * w
    lp = _round_up(l, 128)
    x3 = feat.reshape(n, c_in, l)
    if lp != l:
        x3 = jnp.pad(x3, ((0, 0), (0, 0), (0, lp - l)))
    w1 = w_oihw.reshape(1, c_out, c_in)
    y = _fused_conv(x3, w1, b, alpha, (0,), lp)
    return y[:, :, :l].reshape(n, c_out, h, w)


def _conv3x3_same(x4d, w_taps, b, alpha):
    """3x3 stride-1 conv with implicit zero padding 1, fused in one kernel."""
    n, c_in, hs, ws = x4d.shape
    c_out = w_taps.shape[1]
    hp, wp = hs + 2, ws + 2
    l_out = _round_up(hs * wp, 128)
    max_ofs = 2 * wp + 2
    l_in = _round_up(max(hp * wp, l_out + max_ofs), 128)
    xp = jnp.pad(x4d, ((0, 0), (0, 0), (1, 1), (1, 1))).reshape(n, c_in, hp * wp)
    if l_in != hp * wp:
        xp = jnp.pad(xp, ((0, 0), (0, 0), (0, l_in - hp * wp)))
    offsets = tuple(a * wp + bb for a in range(3) for bb in range(3))
    y = _fused_conv(xp, w_taps, b, alpha, offsets, l_out)
    return y[:, :, :hs * wp].reshape(n, c_out, hs, wp)[:, :, :, :ws]


def _down_conv_prelu(feat_hr, w_oihw, b, alpha):
    """Conv2d(k=6, s=2, p=2) + PReLU via space-to-depth + fused 3x3 kernel."""
    n, c, h2, w2 = feat_hr.shape
    c_out = w_oihw.shape[0]
    h, w = h2 // 2, w2 // 2
    # space-to-depth: channel order (py, px, c)
    x = feat_hr.reshape(n, c, h, 2, w, 2).transpose(0, 3, 5, 1, 2, 4)
    x = x.reshape(n, 4 * c, h, w)
    # w[co, c, 2a+py, 2b+px] -> taps (a,b), rows co, cols (py, px, c)
    w9 = w_oihw.reshape(c_out, c, 3, 2, 3, 2).transpose(2, 4, 0, 3, 5, 1)
    w9 = w9.reshape(9, c_out, 4 * c)
    return _conv3x3_same(x, w9, b, alpha)


def _up_conv_prelu(feat_lr, wT_iohw, b, alpha):
    """ConvTranspose2d(k=6, s=2, p=2) + PReLU via sub-pixel decomposition."""
    n, c, h, w = feat_lr.shape
    c_out = wT_iohw.shape[1]
    # wT[c, co, 2*(2-a)+py, 2*(2-b)+px] -> taps (a,b), rows (py, px, co), cols c
    wr = jnp.flip(wT_iohw.reshape(c, c_out, 3, 2, 3, 2), axis=(2, 4))
    w9 = wr.transpose(2, 4, 3, 5, 1, 0).reshape(9, 4 * c_out, c)
    b4 = jnp.tile(b, 4)                      # phase order (py, px, co)
    y = _conv3x3_same(feat_lr, w9, b4, alpha)            # (N, 4*Cout, H, W)
    # pixel shuffle: out[n, co, 2u+py, 2v+px] = y[n, (py,px,co), u, v]
    y = y.reshape(n, 2, 2, c_out, h, w).transpose(0, 3, 4, 1, 5, 2)
    return y.reshape(n, c_out, 2 * h, 2 * w)


# --------------------------------------------------------------------------- #
# FeedbackBlockCustom forward (semantics of the PyTorch module)
# --------------------------------------------------------------------------- #
def feedback_block_custom_forward(x_nchw, params, *, num_blocks,
                                  upscale_factor, padding=2):
    assert upscale_factor == 2 and padding == 2, \
        "sub-pixel/space-to-depth path is specialized to s=2, k=6, p=2"
    x = x_nchw.astype(jnp.bfloat16)

    feat = _conv1x1_prelu(x, *params["conv_first"])
    lr_features = [feat]
    hr_features = []
    for idx in range(num_blocks):
        lr = lr_features[0] if idx == 0 else jnp.concatenate(lr_features, axis=1)
        if idx > 0:
            lr = _conv1x1_prelu(lr, *params["lr_blocks"][idx - 1])
        hr = _up_conv_prelu(lr, *params["up_blocks"][idx])
        hr_features.append(hr)
        hrc = hr if idx == 0 else jnp.concatenate(hr_features, axis=1)
        if idx > 0:
            hrc = _conv1x1_prelu(hrc, *params["hr_blocks"][idx - 1])
        lr_new = _down_conv_prelu(hrc, *params["down_blocks"][idx])
        lr_features.append(lr_new)

    out = jnp.concatenate(lr_features[1:], axis=1)
    out = _conv1x1_prelu(out, *params["conv_last"])
    return out.astype(jnp.float32)


# --------------------------------------------------------------------------- #
# Pure-JAX reference (XLA convs) with the SAME bf16 quantization points, so the
# comparison isolates kernel bugs from expected bf16 numerics.
# --------------------------------------------------------------------------- #
def feedback_block_custom_reference(x, params, *, num_blocks, upscale_factor,
                                    padding=2):
    s, p = upscale_factor, padding

    def q(t):
        return t.astype(jnp.bfloat16)

    def prelu_q(y, a):
        return q(jnp.where(y >= 0, y, a * y))

    def conv(xa, w, b, stride, pad):
        y = jax.lax.conv_general_dilated(
            q(xa), q(w), (stride, stride), [(pad, pad)] * 2,
            dimension_numbers=("NCHW", "OIHW", "NCHW"),
            preferred_element_type=jnp.float32)
        return y + b[None, :, None, None]

    def convT(xa, wT, b, stride, pad):
        k = wT.shape[2]
        w = jnp.flip(jnp.transpose(wT, (1, 0, 2, 3)), axis=(2, 3))
        y = jax.lax.conv_general_dilated(
            q(xa), q(w), (1, 1), [(k - 1 - pad, k - 1 - pad)] * 2,
            lhs_dilation=(stride, stride),
            dimension_numbers=("NCHW", "OIHW", "NCHW"),
            preferred_element_type=jnp.float32)
        return y + b[None, :, None, None]

    w, b, a = params["conv_first"]
    feat = prelu_q(conv(x, w, b, 1, 0), a)
    lr_features = [feat]
    hr_features = []
    for idx in range(num_blocks):
        lr = lr_features[0] if idx == 0 else jnp.concatenate(lr_features, axis=1)
        if idx > 0:
            w, b, a = params["lr_blocks"][idx - 1]
            lr = prelu_q(conv(lr, w, b, 1, 0), a)
        w, b, a = params["up_blocks"][idx]
        hr = prelu_q(convT(lr, w, b, s, p), a)
        hr_features.append(hr)
        hrc = hr if idx == 0 else jnp.concatenate(hr_features, axis=1)
        if idx > 0:
            w, b, a = params["hr_blocks"][idx - 1]
            hrc = prelu_q(conv(hrc, w, b, 1, 0), a)
        w, b, a = params["down_blocks"][idx]
        lr_new = prelu_q(conv(hrc, w, b, s, p), a)
        lr_features.append(lr_new)
    out = jnp.concatenate(lr_features[1:], axis=1)
    w, b, a = params["conv_last"]
    return prelu_q(conv(out, w, b, 1, 0), a).astype(jnp.float32)


# --------------------------------------------------------------------------- #
if __name__ == "__main__":
    in_channels = 8
    mid_channels = 8
    num_blocks = 2
    upscale_factor = 2
    N, H, W = 2, 16, 16
    ksz = upscale_factor + 4
    prelu_init = 0.2

    keys = iter(jax.random.split(jax.random.PRNGKey(0), 64))

    def rnd(shape, scale=0.1):
        return scale * jax.random.normal(next(keys), shape, jnp.float32)

    params = {
        "conv_first": (rnd((mid_channels, in_channels, 1, 1)),
                       rnd((mid_channels,)), jnp.float32(prelu_init)),
        "up_blocks": [], "down_blocks": [], "lr_blocks": [], "hr_blocks": [],
    }
    for idx in range(num_blocks):
        params["up_blocks"].append((rnd((mid_channels, mid_channels, ksz, ksz)),
                                    rnd((mid_channels,)), jnp.float32(prelu_init)))
        params["down_blocks"].append((rnd((mid_channels, mid_channels, ksz, ksz)),
                                      rnd((mid_channels,)), jnp.float32(prelu_init)))
        if idx > 0:
            params["lr_blocks"].append(
                (rnd((mid_channels, mid_channels * (idx + 1), 1, 1)),
                 rnd((mid_channels,)), jnp.float32(prelu_init)))
            params["hr_blocks"].append(
                (rnd((mid_channels, mid_channels * (idx + 1), 1, 1)),
                 rnd((mid_channels,)), jnp.float32(prelu_init)))
    params["conv_last"] = (rnd((mid_channels, mid_channels * num_blocks, 1, 1)),
                           rnd((mid_channels,)), jnp.float32(prelu_init))

    x = jax.random.normal(next(keys), (N, in_channels, H, W), jnp.float32)

    fwd = jax.jit(functools.partial(feedback_block_custom_forward,
                                    num_blocks=num_blocks,
                                    upscale_factor=upscale_factor))
    out = jax.block_until_ready(fwd(x, params))

    ref = feedback_block_custom_reference(x, params, num_blocks=num_blocks,
                                          upscale_factor=upscale_factor)
    assert out.shape == (N, mid_channels, H, W), out.shape
    err = float(jnp.max(jnp.abs(out - ref)))
    assert err < 1e-2, f"max abs err {err}"
    print("KERNEL_OK")
</pallas_src>

<mosaic_0001>
module attributes {stable_mosaic.version = 11 : i64} {
  func.func @_tap_conv_kernel(%arg0: i32, %arg1: memref<1x8x256xbf16, #tpu.memory_space<vmem>>, %arg2: memref<1x8x8xbf16, #tpu.memory_space<vmem>>, %arg3: memref<8x1xf32, #tpu.memory_space<vmem>>, %arg4: memref<1xf32, #tpu.memory_space<smem>>, %arg5: memref<1x8x256xbf16, #tpu.memory_space<vmem>>) attributes {dimension_semantics = [#tpu.dimension_semantics<parallel>], iteration_bounds = array<i64: 2>, scalar_prefetch = 0 : i64, scratch_operands = 0 : i64, tpu.core_type = #tpu.core_type<tc>, window_params = [{transform_indices = @transform_0, window_bounds = array<i64: 1, 8, 256>}, {pipeline_mode = #tpu.pipeline_mode<synchronous>, transform_indices = @transform_1, window_bounds = array<i64: 1, 8, 8>}, {pipeline_mode = #tpu.pipeline_mode<synchronous>, transform_indices = @transform_2, window_bounds = array<i64: 8, 1>}, {transform_indices = @transform_3, window_bounds = array<i64: 1>}, {transform_indices = @transform_4, window_bounds = array<i64: 1, 8, 256>}]} {
    %c0 = arith.constant 0 : index
    %c0_0 = arith.constant 0 : index
    %c0_1 = arith.constant 0 : index
    %0 = vector.load %arg1[%c0, %c0_0, %c0_1] : memref<1x8x256xbf16, #tpu.memory_space<vmem>>, vector<1x8x256xbf16>
    %1 = vector.shape_cast %0 : vector<1x8x256xbf16> to vector<8x256xbf16>
    %cst = arith.constant 0.000000e+00 : f32
    %2 = vector.broadcast %cst : f32 to vector<8x256xf32>
    %c0_2 = arith.constant 0 : index
    %c0_3 = arith.constant 0 : index
    %c0_4 = arith.constant 0 : index
    %3 = vector.load %arg2[%c0_2, %c0_3, %c0_4] : memref<1x8x8xbf16, #tpu.memory_space<vmem>>, vector<1x8x8xbf16>
    %4 = vector.shape_cast %3 : vector<1x8x8xbf16> to vector<8x8xbf16>
    %cst_5 = arith.constant dense<0.000000e+00> : vector<8x256xf32>
    %5 = tpu.matmul %4, %1, %cst_5 {dimension_numbers = #tpu.dot_dimension_numbers<[1], [0], [0], [1], [0, 0, 1, 1], [], []>} : vector<8x8xbf16>, vector<8x256xbf16>, vector<8x256xf32> -> vector<8x256xf32>
    %6 = arith.addf %2, %5 : vector<8x256xf32>
    %c0_6 = arith.constant 0 : index
    %c0_7 = arith.constant 0 : index
    %7 = vector.load %arg3[%c0_6, %c0_7] : memref<8x1xf32, #tpu.memory_space<vmem>>, vector<8x1xf32>
    %8 = vector.broadcast %7 : vector<8x1xf32> to vector<8x256xf32>
    %9 = arith.addf %6, %8 : vector<8x256xf32>
    %c0_8 = arith.constant 0 : index
    %10 = memref.load %arg4[%c0_8] : memref<1xf32, #tpu.memory_space<smem>>
    %cst_9 = arith.constant 0.000000e+00 : f32
    %11 = vector.broadcast %cst_9 : f32 to vector<8x256xf32>
    %12 = arith.cmpf oge, %9, %11 : vector<8x256xf32>
    %13 = vector.broadcast %10 : f32 to vector<8x256xf32>
    %14 = arith.mulf %13, %9 : vector<8x256xf32>
    %15 = arith.select %12, %9, %14 : vector<8x256xi1>, vector<8x256xf32>
    %16 = arith.truncf %15 : vector<8x256xf32> to vector<8x256xbf16>
    %c0_10 = arith.constant 0 : index
    %c0_11 = arith.constant 0 : index
    %c0_12 = arith.constant 0 : index
    %17 = vector.load %arg5[%c0_10, %c0_11, %c0_12] : memref<1x8x256xbf16, #tpu.memory_space<vmem>>, vector<1x8x256xbf16>
    %18 = vector.shape_cast %17 : vector<1x8x256xbf16> to vector<8x256xbf16>
    %19 = vector.shape_cast %16 : vector<8x256xbf16> to vector<1x8x256xbf16>
    tpu.vector_store %arg5[%c0_10, %c0_11, %c0_12], %19 {strides = array<i32>} : memref<1x8x256xbf16, #tpu.memory_space<vmem>>, vector<1x8x256xbf16>,
    return
  }
  func.func @transform_0(%arg0: i32) -> (i32, i32, i32) {
    %c0_i32 = arith.constant 0 : i32
    %c0_i32_0 = arith.constant 0 : i32
    %c0_i32_1 = arith.constant 0 : i32
    return %arg0, %c0_i32, %c0_i32_0 : i32, i32, i32
  }
  func.func @transform_1(%arg0: i32) -> (i32, i32, i32) {
    %c0_i32 = arith.constant 0 : i32
    %c0_i32_0 = arith.constant 0 : i32
    %c0_i32_1 = arith.constant 0 : i32
    %c0_i32_2 = arith.constant 0 : i32
    return %c0_i32, %c0_i32_0, %c0_i32_1 : i32, i32, i32
  }
  func.func @transform_2(%arg0: i32) -> (i32, i32) {
    %c0_i32 = arith.constant 0 : i32
    %c0_i32_0 = arith.constant 0 : i32
    %c0_i32_1 = arith.constant 0 : i32
    return %c0_i32, %c0_i32_0 : i32, i32
  }
  func.func @transform_3(%arg0: i32) -> i32 {
    %c0_i32 = arith.constant 0 : i32
    %c0_i32_0 = arith.constant 0 : i32
    return %c0_i32 : i32
  }
  func.func @transform_4(%arg0: i32) -> (i32, i32, i32) {
    %c0_i32 = arith.constant 0 : i32
    %c0_i32_0 = arith.constant 0 : i32
    %c0_i32_1 = arith.constant 0 : i32
    return %arg0, %c0_i32, %c0_i32_0 : i32, i32, i32
  }
}

module attributes {stable_mosaic.version = 11 : i64} {
  func.func @_tap_conv_kernel(%arg0: i32, %arg1: memref<1x8x512xbf16, #tpu.memory_space<vmem>>, %arg2: memref<9x32x8xbf16, #tpu.memory_space<vmem>>, %arg3: memref<32x1xf32, #tpu.memory_space<vmem>>, %arg4: memref<1xf32, #tpu.memory_space<smem>>, %arg5: memref<1x32x384xbf16, #tpu.memory_space<vmem>>) attributes {dimension_semantics = [#tpu.dimension_semantics<parallel>], iteration_bounds = array<i64: 2>, scalar_prefetch = 0 : i64, scratch_operands = 0 : i64, tpu.core_type = #tpu.core_type<tc>, window_params = [{transform_indices = @transform_0, window_bounds = array<i64: 1, 8, 512>}, {pipeline_mode = #tpu.pipeline_mode<synchronous>, transform_indices = @transform_1, window_bounds = array<i64: 9, 32, 8>}, {pipeline_mode = #tpu.pipeline_mode<synchronous>, transform_indices = @transform_2, window_bounds = array<i64: 32, 1>}, {transform_indices = @transform_3, window_bounds = array<i64: 1>}, {transform_indices = @transform_4, window_bounds = array<i64: 1, 32, 384>}]} {
    %c0 = arith.constant 0 : index
    %c0_0 = arith.constant 0 : index
    %c0_1 = arith.constant 0 : index
    %0 = vector.load %arg1[%c0, %c0_0, %c0_1] : memref<1x8x512xbf16, #tpu.memory_space<vmem>>, vector<1x8x512xbf16>
    %1 = vector.shape_cast %0 : vector<1x8x512xbf16> to vector<8x512xbf16>
    %cst = arith.constant 0.000000e+00 : f32
    %2 = vector.broadcast %cst : f32 to vector<32x384xf32>
    %3 = vector.extract_strided_slice %1 {offsets = [0, 0], sizes = [8, 384], strides = [1, 1]} : vector<8x512xbf16> to vector<8x384xbf16>
    %c0_2 = arith.constant 0 : index
    %c0_3 = arith.constant 0 : index
    %c0_4 = arith.constant 0 : index
    %4 = vector.load %arg2[%c0_2, %c0_3, %c0_4] : memref<9x32x8xbf16, #tpu.memory_space<vmem>>, vector<1x32x8xbf16>
    %5 = vector.shape_cast %4 : vector<1x32x8xbf16> to vector<32x8xbf16>
    %cst_5 = arith.constant dense<0.000000e+00> : vector<32x384xf32>
    %6 = tpu.matmul %5, %3, %cst_5 {dimension_numbers = #tpu.dot_dimension_numbers<[1], [0], [0], [1], [0, 0, 1, 1], [], []>} : vector<32x8xbf16>, vector<8x384xbf16>, vector<32x384xf32> -> vector<32x384xf32>
    %7 = arith.addf %2, %6 : vector<32x384xf32>
    %8 = vector.extract_strided_slice %1 {offsets = [0, 1], sizes = [8, 384], strides = [1, 1]} : vector<8x512xbf16> to vector<8x384xbf16>
    %c1 = arith.constant 1 : index
    %c0_6 = arith.constant 0 : index
    %c0_7 = arith.constant 0 : index
    %9 = vector.load %arg2[%c1, %c0_6, %c0_7] : memref<9x32x8xbf16, #tpu.memory_space<vmem>>, vector<1x32x8xbf16>
    %10 = vector.shape_cast %9 : vector<1x32x8xbf16> to vector<32x8xbf16>
    %cst_8 = arith.constant dense<0.000000e+00> : vector<32x384xf32>
    %11 = tpu.matmul %10, %8, %cst_8 {dimension_numbers = #tpu.dot_dimension_numbers<[1], [0], [0], [1], [0, 0, 1, 1], [], []>} : vector<32x8xbf16>, vector<8x384xbf16>, vector<32x384xf32> -> vector<32x384xf32>
    %12 = arith.addf %7, %11 : vector<32x384xf32>
    %13 = vector.extract_strided_slice %1 {offsets = [0, 2], sizes = [8, 384], strides = [1, 1]} : vector<8x512xbf16> to vector<8x384xbf16>
    %c2 = arith.constant 2 : index
    %c0_9 = arith.constant 0 : index
    %c0_10 = arith.constant 0 : index
    %14 = vector.load %arg2[%c2, %c0_9, %c0_10] : memref<9x32x8xbf16, #tpu.memory_space<vmem>>, vector<1x32x8xbf16>
    %15 = vector.shape_cast %14 : vector<1x32x8xbf16> to vector<32x8xbf16>
    %cst_11 = arith.constant dense<0.000000e+00> : vector<32x384xf32>
    %16 = tpu.matmul %15, %13, %cst_11 {dimension_numbers = #tpu.dot_dimension_numbers<[1], [0], [0], [1], [0, 0, 1, 1], [], []>} : vector<32x8xbf16>, vector<8x384xbf16>, vector<32x384xf32> -> vector<32x384xf32>
    %17 = arith.addf %12, %16 : vector<32x384xf32>
    %18 = vector.extract_strided_slice %1 {offsets = [0, 18], sizes = [8, 384], strides = [1, 1]} : vector<8x512xbf16> to vector<8x384xbf16>
    %c3 = arith.constant 3 : index
    %c0_12 = arith.constant 0 : index
    %c0_13 = arith.constant 0 : index
    %19 = vector.load %arg2[%c3, %c0_12, %c0_13] : memref<9x32x8xbf16, #tpu.memory_space<vmem>>, vector<1x32x8xbf16>
    %20 = vector.shape_cast %19 : vector<1x32x8xbf16> to vector<32x8xbf16>
    %cst_14 = arith.constant dense<0.000000e+00> : vector<32x384xf32>
    %21 = tpu.matmul %20, %18, %cst_14 {dimension_numbers = #tpu.dot_dimension_numbers<[1], [0], [0], [1], [0, 0, 1, 1], [], []>} : vector<32x8xbf16>, vector<8x384xbf16>, vector<32x384xf32> -> vector<32x384xf32>
    %22 = arith.addf %17, %21 : vector<32x384xf32>
    %23 = vector.extract_strided_slice %1 {offsets = [0, 19], sizes = [8, 384], strides = [1, 1]} : vector<8x512xbf16> to vector<8x384xbf16>
    %c4 = arith.constant 4 : index
    %c0_15 = arith.constant 0 : index
    %c0_16 = arith.constant 0 : index
    %24 = vector.load %arg2[%c4, %c0_15, %c0_16] : memref<9x32x8xbf16, #tpu.memory_space<vmem>>, vector<1x32x8xbf16>
    %25 = vector.shape_cast %24 : vector<1x32x8xbf16> to vector<32x8xbf16>
    %cst_17 = arith.constant dense<0.000000e+00> : vector<32x384xf32>
    %26 = tpu.matmul %25, %23, %cst_17 {dimension_numbers = #tpu.dot_dimension_numbers<[1], [0], [0], [1], [0, 0, 1, 1], [], []>} : vector<32x8xbf16>, vector<8x384xbf16>, vector<32x384xf32> -> vector<32x384xf32>
    %27 = arith.addf %22, %26 : vector<32x384xf32>
    %28 = vector.extract_strided_slice %1 {offsets = [0, 20], sizes = [8, 384], strides = [1, 1]} : vector<8x512xbf16> to vector<8x384xbf16>
    %c5 = arith.constant 5 : index
    %c0_18 = arith.constant 0 : index
    %c0_19 = arith.constant 0 : index
    %29 = vector.load %arg2[%c5, %c0_18, %c0_19] : memref<9x32x8xbf16, #tpu.memory_space<vmem>>, vector<1x32x8xbf16>
    %30 = vector.shape_cast %29 : vector<1x32x8xbf16> to vector<32x8xbf16>
    %cst_20 = arith.constant dense<0.000000e+00> : vector<32x384xf32>
    %31 = tpu.matmul %30, %28, %cst_20 {dimension_numbers = #tpu.dot_dimension_numbers<[1], [0], [0], [1], [0, 0, 1, 1], [], []>} : vector<32x8xbf16>, vector<8x384xbf16>, vector<32x384xf32> -> vector<32x384xf32>
    %32 = arith.addf %27, %31 : vector<32x384xf32>
    %33 = vector.extract_strided_slice %1 {offsets = [0, 36], sizes = [8, 384], strides = [1, 1]} : vector<8x512xbf16> to vector<8x384xbf16>
    %c6 = arith.constant 6 : index
    %c0_21 = arith.constant 0 : index
    %c0_22 = arith.constant 0 : index
    %34 = vector.load %arg2[%c6, %c0_21, %c0_22] : memref<9x32x8xbf16, #tpu.memory_space<vmem>>, vector<1x32x8xbf16>
    %35 = vector.shape_cast %34 : vector<1x32x8xbf16> to vector<32x8xbf16>
    %cst_23 = arith.constant dense<0.000000e+00> : vector<32x384xf32>
    %36 = tpu.matmul %35, %33, %cst_23 {dimension_numbers = #tpu.dot_dimension_numbers<[1], [0], [0], [1], [0, 0, 1, 1], [], []>} : vector<32x8xbf16>, vector<8x384xbf16>, vector<32x384xf32> -> vector<32x384xf32>
    %37 = arith.addf %32, %36 : vector<32x384xf32>
    %38 = vector.extract_strided_slice %1 {offsets = [0, 37], sizes = [8, 384], strides = [1, 1]} : vector<8x512xbf16> to vector<8x384xbf16>
    %c7 = arith.constant 7 : index
    %c0_24 = arith.constant 0 : index
    %c0_25 = arith.constant 0 : index
    %39 = vector.load %arg2[%c7, %c0_24, %c0_25] : memref<9x32x8xbf16, #tpu.memory_space<vmem>>, vector<1x32x8xbf16>
    %40 = vector.shape_cast %39 : vector<1x32x8xbf16> to vector<32x8xbf16>
    %cst_26 = arith.constant dense<0.000000e+00> : vector<32x384xf32>
    %41 = tpu.matmul %40, %38, %cst_26 {dimension_numbers = #tpu.dot_dimension_numbers<[1], [0], [0], [1], [0, 0, 1, 1], [], []>} : vector<32x8xbf16>, vector<8x384xbf16>, vector<32x384xf32> -> vector<32x384xf32>
    %42 = arith.addf %37, %41 : vector<32x384xf32>
    %43 = vector.extract_strided_slice %1 {offsets = [0, 38], sizes = [8, 384], strides = [1, 1]} : vector<8x512xbf16> to vector<8x384xbf16>
    %c8 = arith.constant 8 : index
    %c0_27 = arith.constant 0 : index
    %c0_28 = arith.constant 0 : index
    %44 = vector.load %arg2[%c8, %c0_27, %c0_28] : memref<9x32x8xbf16, #tpu.memory_space<vmem>>, vector<1x32x8xbf16>
    %45 = vector.shape_cast %44 : vector<1x32x8xbf16> to vector<32x8xbf16>
    %cst_29 = arith.constant dense<0.000000e+00> : vector<32x384xf32>
    %46 = tpu.matmul %45, %43, %cst_29 {dimension_numbers = #tpu.dot_dimension_numbers<[1], [0], [0], [1], [0, 0, 1, 1], [], []>} : vector<32x8xbf16>, vector<8x384xbf16>, vector<32x384xf32> -> vector<32x384xf32>
    %47 = arith.addf %42, %46 : vector<32x384xf32>
    %c0_30 = arith.constant 0 : index
    %c0_31 = arith.constant 0 : index
    %48 = vector.load %arg3[%c0_30, %c0_31] : memref<32x1xf32, #tpu.memory_space<vmem>>, vector<32x1xf32>
    %49 = vector.broadcast %48 : vector<32x1xf32> to vector<32x384xf32>
    %50 = arith.addf %47, %49 : vector<32x384xf32>
    %c0_32 = arith.constant 0 : index
    %51 = memref.load %arg4[%c0_32] : memref<1xf32, #tpu.memory_space<smem>>
    %cst_33 = arith.constant 0.000000e+00 : f32
    %52 = vector.broadcast %cst_33 : f32 to vector<32x384xf32>
    %53 = arith.cmpf oge, %50, %52 : vector<32x384xf32>
    %54 = vector.broadcast %51 : f32 to vector<32x384xf32>
    %55 = arith.mulf %54, %50 : vector<32x384xf32>
    %56 = arith.select %53, %50, %55 : vector<32x384xi1>, vector<32x384xf32>
    %57 = arith.truncf %56 : vector<32x384xf32> to vector<32x384xbf16>
    %c0_34 = arith.constant 0 : index
    %c0_35 = arith.constant 0 : index
    %c0_36 = arith.constant 0 : index
    %58 = vector.load %arg5[%c0_34, %c0_35, %c0_36] : memref<1x32x384xbf16, #tpu.memory_space<vmem>>, vector<1x32x384xbf16>
    %59 = vector.shape_cast %58 : vector<1x32x384xbf16> to vector<32x384xbf16>
    %60 = vector.shape_cast %57 : vector<32x384xbf16> to vector<1x32x384xbf16>
    tpu.vector_store %arg5[%c0_34, %c0_35, %c0_36], %60 {strides = array<i32>} : memref<1x32x384xbf16, #tpu.memory_space<vmem>>, vector<1x32x384xbf16>,
    return
  }
  func.func @transform_0(%arg0: i32) -> (i32, i32, i32) {
    %c0_i32 = arith.constant 0 : i32
    %c0_i32_0 = arith.constant 0 : i32
    %c0_i32_1 = arith.constant 0 : i32
    return %arg0, %c0_i32, %c0_i32_0 : i32, i32, i32
  }
  func.func @transform_1(%arg0: i32) -> (i32, i32, i32) {
    %c0_i32 = arith.constant 0 : i32
    %c0_i32_0 = arith.constant 0 : i32
    %c0_i32_1 = arith.constant 0 : i32
    %c0_i32_2 = arith.constant 0 : i32
    return %c0_i32, %c0_i32_0, %c0_i32_1 : i32, i32, i32
  }
  func.func @transform_2(%arg0: i32) -> (i32, i32) {
    %c0_i32 = arith.constant 0 : i32
    %c0_i32_0 = arith.constant 0 : i32
    %c0_i32_1 = arith.constant 0 : i32
    return %c0_i32, %c0_i32_0 : i32, i32
  }
  func.func @transform_3(%arg0: i32) -> i32 {
    %c0_i32 = arith.constant 0 : i32
    %c0_i32_0 = arith.constant 0 : i32
    return %c0_i32 : i32
  }
  func.func @transform_4(%arg0: i32) -> (i32, i32, i32) {
    %c0_i32 = arith.constant 0 : i32
    %c0_i32_0 = arith.constant 0 : i32
    %c0_i32_1 = arith.constant 0 : i32
    return %arg0, %c0_i32, %c0_i32_0 : i32, i32, i32
  }
}

module attributes {stable_mosaic.version = 11 : i64} {
  func.func @_tap_conv_kernel(%arg0: i32, %arg1: memref<1x32x512xbf16, #tpu.memory_space<vmem>>, %arg2: memref<9x8x32xbf16, #tpu.memory_space<vmem>>, %arg3: memref<8x1xf32, #tpu.memory_space<vmem>>, %arg4: memref<1xf32, #tpu.memory_space<smem>>, %arg5: memref<1x8x384xbf16, #tpu.memory_space<vmem>>) attributes {dimension_semantics = [#tpu.dimension_semantics<parallel>], iteration_bounds = array<i64: 2>, scalar_prefetch = 0 : i64, scratch_operands = 0 : i64, tpu.core_type = #tpu.core_type<tc>, window_params = [{transform_indices = @transform_0, window_bounds = array<i64: 1, 32, 512>}, {pipeline_mode = #tpu.pipeline_mode<synchronous>, transform_indices = @transform_1, window_bounds = array<i64: 9, 8, 32>}, {pipeline_mode = #tpu.pipeline_mode<synchronous>, transform_indices = @transform_2, window_bounds = array<i64: 8, 1>}, {transform_indices = @transform_3, window_bounds = array<i64: 1>}, {transform_indices = @transform_4, window_bounds = array<i64: 1, 8, 384>}]} {
    %c0 = arith.constant 0 : index
    %c0_0 = arith.constant 0 : index
    %c0_1 = arith.constant 0 : index
    %0 = vector.load %arg1[%c0, %c0_0, %c0_1] : memref<1x32x512xbf16, #tpu.memory_space<vmem>>, vector<1x32x512xbf16>
    %1 = vector.shape_cast %0 : vector<1x32x512xbf16> to vector<32x512xbf16>
    %cst = arith.constant 0.000000e+00 : f32
    %2 = vector.broadcast %cst : f32 to vector<8x384xf32>
    %3 = vector.extract_strided_slice %1 {offsets = [0, 0], sizes = [32, 384], strides = [1, 1]} : vector<32x512xbf16> to vector<32x384xbf16>
    %c0_2 = arith.constant 0 : index
    %c0_3 = arith.constant 0 : index
    %c0_4 = arith.constant 0 : index
    %4 = vector.load %arg2[%c0_2, %c0_3, %c0_4] : memref<9x8x32xbf16, #tpu.memory_space<vmem>>, vector<1x8x32xbf16>
    %5 = vector.shape_cast %4 : vector<1x8x32xbf16> to vector<8x32xbf16>
    %cst_5 = arith.constant dense<0.000000e+00> : vector<8x384xf32>
    %6 = tpu.matmul %5, %3, %cst_5 {dimension_numbers = #tpu.dot_dimension_numbers<[1], [0], [0], [1], [0, 0, 1, 1], [], []>} : vector<8x32xbf16>, vector<32x384xbf16>, vector<8x384xf32> -> vector<8x384xf32>
    %7 = arith.addf %2, %6 : vector<8x384xf32>
    %8 = vector.extract_strided_slice %1 {offsets = [0, 1], sizes = [32, 384], strides = [1, 1]} : vector<32x512xbf16> to vector<32x384xbf16>
    %c1 = arith.constant 1 : index
    %c0_6 = arith.constant 0 : index
    %c0_7 = arith.constant 0 : index
    %9 = vector.load %arg2[%c1, %c0_6, %c0_7] : memref<9x8x32xbf16, #tpu.memory_space<vmem>>, vector<1x8x32xbf16>
    %10 = vector.shape_cast %9 : vector<1x8x32xbf16> to vector<8x32xbf16>
    %cst_8 = arith.constant dense<0.000000e+00> : vector<8x384xf32>
    %11 = tpu.matmul %10, %8, %cst_8 {dimension_numbers = #tpu.dot_dimension_numbers<[1], [0], [0], [1], [0, 0, 1, 1], [], []>} : vector<8x32xbf16>, vector<32x384xbf16>, vector<8x384xf32> -> vector<8x384xf32>
    %12 = arith.addf %7, %11 : vector<8x384xf32>
    %13 = vector.extract_strided_slice %1 {offsets = [0, 2], sizes = [32, 384], strides = [1, 1]} : vector<32x512xbf16> to vector<32x384xbf16>
    %c2 = arith.constant 2 : index
    %c0_9 = arith.constant 0 : index
    %c0_10 = arith.constant 0 : index
    %14 = vector.load %arg2[%c2, %c0_9, %c0_10] : memref<9x8x32xbf16, #tpu.memory_space<vmem>>, vector<1x8x32xbf16>
    %15 = vector.shape_cast %14 : vector<1x8x32xbf16> to vector<8x32xbf16>
    %cst_11 = arith.constant dense<0.000000e+00> : vector<8x384xf32>
    %16 = tpu.matmul %15, %13, %cst_11 {dimension_numbers = #tpu.dot_dimension_numbers<[1], [0], [0], [1], [0, 0, 1, 1], [], []>} : vector<8x32xbf16>, vector<32x384xbf16>, vector<8x384xf32> -> vector<8x384xf32>
    %17 = arith.addf %12, %16 : vector<8x384xf32>
    %18 = vector.extract_strided_slice %1 {offsets = [0, 18], sizes = [32, 384], strides = [1, 1]} : vector<32x512xbf16> to vector<32x384xbf16>
    %c3 = arith.constant 3 : index
    %c0_12 = arith.constant 0 : index
    %c0_13 = arith.constant 0 : index
    %19 = vector.load %arg2[%c3, %c0_12, %c0_13] : memref<9x8x32xbf16, #tpu.memory_space<vmem>>, vector<1x8x32xbf16>
    %20 = vector.shape_cast %19 : vector<1x8x32xbf16> to vector<8x32xbf16>
    %cst_14 = arith.constant dense<0.000000e+00> : vector<8x384xf32>
    %21 = tpu.matmul %20, %18, %cst_14 {dimension_numbers = #tpu.dot_dimension_numbers<[1], [0], [0], [1], [0, 0, 1, 1], [], []>} : vector<8x32xbf16>, vector<32x384xbf16>, vector<8x384xf32> -> vector<8x384xf32>
    %22 = arith.addf %17, %21 : vector<8x384xf32>
    %23 = vector.extract_strided_slice %1 {offsets = [0, 19], sizes = [32, 384], strides = [1, 1]} : vector<32x512xbf16> to vector<32x384xbf16>
    %c4 = arith.constant 4 : index
    %c0_15 = arith.constant 0 : index
    %c0_16 = arith.constant 0 : index
    %24 = vector.load %arg2[%c4, %c0_15, %c0_16] : memref<9x8x32xbf16, #tpu.memory_space<vmem>>, vector<1x8x32xbf16>
    %25 = vector.shape_cast %24 : vector<1x8x32xbf16> to vector<8x32xbf16>
    %cst_17 = arith.constant dense<0.000000e+00> : vector<8x384xf32>
    %26 = tpu.matmul %25, %23, %cst_17 {dimension_numbers = #tpu.dot_dimension_numbers<[1], [0], [0], [1], [0, 0, 1, 1], [], []>} : vector<8x32xbf16>, vector<32x384xbf16>, vector<8x384xf32> -> vector<8x384xf32>
    %27 = arith.addf %22, %26 : vector<8x384xf32>
    %28 = vector.extract_strided_slice %1 {offsets = [0, 20], sizes = [32, 384], strides = [1, 1]} : vector<32x512xbf16> to vector<32x384xbf16>
    %c5 = arith.constant 5 : index
    %c0_18 = arith.constant 0 : index
    %c0_19 = arith.constant 0 : index
    %29 = vector.load %arg2[%c5, %c0_18, %c0_19] : memref<9x8x32xbf16, #tpu.memory_space<vmem>>, vector<1x8x32xbf16>
    %30 = vector.shape_cast %29 : vector<1x8x32xbf16> to vector<8x32xbf16>
    %cst_20 = arith.constant dense<0.000000e+00> : vector<8x384xf32>
    %31 = tpu.matmul %30, %28, %cst_20 {dimension_numbers = #tpu.dot_dimension_numbers<[1], [0], [0], [1], [0, 0, 1, 1], [], []>} : vector<8x32xbf16>, vector<32x384xbf16>, vector<8x384xf32> -> vector<8x384xf32>
    %32 = arith.addf %27, %31 : vector<8x384xf32>
    %33 = vector.extract_strided_slice %1 {offsets = [0, 36], sizes = [32, 384], strides = [1, 1]} : vector<32x512xbf16> to vector<32x384xbf16>
    %c6 = arith.constant 6 : index
    %c0_21 = arith.constant 0 : index
    %c0_22 = arith.constant 0 : index
    %34 = vector.load %arg2[%c6, %c0_21, %c0_22] : memref<9x8x32xbf16, #tpu.memory_space<vmem>>, vector<1x8x32xbf16>
    %35 = vector.shape_cast %34 : vector<1x8x32xbf16> to vector<8x32xbf16>
    %cst_23 = arith.constant dense<0.000000e+00> : vector<8x384xf32>
    %36 = tpu.matmul %35, %33, %cst_23 {dimension_numbers = #tpu.dot_dimension_numbers<[1], [0], [0], [1], [0, 0, 1, 1], [], []>} : vector<8x32xbf16>, vector<32x384xbf16>, vector<8x384xf32> -> vector<8x384xf32>
    %37 = arith.addf %32, %36 : vector<8x384xf32>
    %38 = vector.extract_strided_slice %1 {offsets = [0, 37], sizes = [32, 384], strides = [1, 1]} : vector<32x512xbf16> to vector<32x384xbf16>
    %c7 = arith.constant 7 : index
    %c0_24 = arith.constant 0 : index
    %c0_25 = arith.constant 0 : index
    %39 = vector.load %arg2[%c7, %c0_24, %c0_25] : memref<9x8x32xbf16, #tpu.memory_space<vmem>>, vector<1x8x32xbf16>
    %40 = vector.shape_cast %39 : vector<1x8x32xbf16> to vector<8x32xbf16>
    %cst_26 = arith.constant dense<0.000000e+00> : vector<8x384xf32>
    %41 = tpu.matmul %40, %38, %cst_26 {dimension_numbers = #tpu.dot_dimension_numbers<[1], [0], [0], [1], [0, 0, 1, 1], [], []>} : vector<8x32xbf16>, vector<32x384xbf16>, vector<8x384xf32> -> vector<8x384xf32>
    %42 = arith.addf %37, %41 : vector<8x384xf32>
    %43 = vector.extract_strided_slice %1 {offsets = [0, 38], sizes = [32, 384], strides = [1, 1]} : vector<32x512xbf16> to vector<32x384xbf16>
    %c8 = arith.constant 8 : index
    %c0_27 = arith.constant 0 : index
    %c0_28 = arith.constant 0 : index
    %44 = vector.load %arg2[%c8, %c0_27, %c0_28] : memref<9x8x32xbf16, #tpu.memory_space<vmem>>, vector<1x8x32xbf16>
    %45 = vector.shape_cast %44 : vector<1x8x32xbf16> to vector<8x32xbf16>
    %cst_29 = arith.constant dense<0.000000e+00> : vector<8x384xf32>
    %46 = tpu.matmul %45, %43, %cst_29 {dimension_numbers = #tpu.dot_dimension_numbers<[1], [0], [0], [1], [0, 0, 1, 1], [], []>} : vector<8x32xbf16>, vector<32x384xbf16>, vector<8x384xf32> -> vector<8x384xf32>
    %47 = arith.addf %42, %46 : vector<8x384xf32>
    %c0_30 = arith.constant 0 : index
    %c0_31 = arith.constant 0 : index
    %48 = vector.load %arg3[%c0_30, %c0_31] : memref<8x1xf32, #tpu.memory_space<vmem>>, vector<8x1xf32>
    %49 = vector.broadcast %48 : vector<8x1xf32> to vector<8x384xf32>
    %50 = arith.addf %47, %49 : vector<8x384xf32>
    %c0_32 = arith.constant 0 : index
    %51 = memref.load %arg4[%c0_32] : memref<1xf32, #tpu.memory_space<smem>>
    %cst_33 = arith.constant 0.000000e+00 : f32
    %52 = vector.broadcast %cst_33 : f32 to vector<8x384xf32>
    %53 = arith.cmpf oge, %50, %52 : vector<8x384xf32>
    %54 = vector.broadcast %51 : f32 to vector<8x384xf32>
    %55 = arith.mulf %54, %50 : vector<8x384xf32>
    %56 = arith.select %53, %50, %55 : vector<8x384xi1>, vector<8x384xf32>
    %57 = arith.truncf %56 : vector<8x384xf32> to vector<8x384xbf16>
    %c0_34 = arith.constant 0 : index
    %c0_35 = arith.constant 0 : index
    %c0_36 = arith.constant 0 : index
    %58 = vector.load %arg5[%c0_34, %c0_35, %c0_36] : memref<1x8x384xbf16, #tpu.memory_space<vmem>>, vector<1x8x384xbf16>
    %59 = vector.shape_cast %58 : vector<1x8x384xbf16> to vector<8x384xbf16>
    %60 = vector.shape_cast %57 : vector<8x384xbf16> to vector<1x8x384xbf16>
    tpu.vector_store %arg5[%c0_34, %c0_35, %c0_36], %60 {strides = array<i32>} : memref<1x8x384xbf16, #tpu.memory_space<vmem>>, vector<1x8x384xbf16>,
    return
  }
  func.func @transform_0(%arg0: i32) -> (i32, i32, i32) {
    %c0_i32 = arith.constant 0 : i32
    %c0_i32_0 = arith.constant 0 : i32
    %c0_i32_1 = arith.constant 0 : i32
    return %arg0, %c0_i32, %c0_i32_0 : i32, i32, i32
  }
  func.func @transform_1(%arg0: i32) -> (i32, i32, i32) {
    %c0_i32 = arith.constant 0 : i32
    %c0_i32_0 = arith.constant 0 : i32
    %c0_i32_1 = arith.constant 0 : i32
    %c0_i32_2 = arith.constant 0 : i32
    return %c0_i32, %c0_i32_0, %c0_i32_1 : i32, i32, i32
  }
  func.func @transform_2(%arg0: i32) -> (i32, i32) {
    %c0_i32 = arith.constant 0 : i32
    %c0_i32_0 = arith.constant 0 : i32
    %c0_i32_1 = arith.constant 0 : i32
    return %c0_i32, %c0_i32_0 : i32, i32
  }
  func.func @transform_3(%arg0: i32) -> i32 {
    %c0_i32 = arith.constant 0 : i32
    %c0_i32_0 = arith.constant 0 : i32
    return %c0_i32 : i32
  }
  func.func @transform_4(%arg0: i32) -> (i32, i32, i32) {
    %c0_i32 = arith.constant 0 : i32
    %c0_i32_0 = arith.constant 0 : i32
    %c0_i32_1 = arith.constant 0 : i32
    return %arg0, %c0_i32, %c0_i32_0 : i32, i32, i32
  }
}

module attributes {stable_mosaic.version = 11 : i64} {
  func.func @_tap_conv_kernel(%arg0: i32, %arg1: memref<1x16x256xbf16, #tpu.memory_space<vmem>>, %arg2: memref<1x8x16xbf16, #tpu.memory_space<vmem>>, %arg3: memref<8x1xf32, #tpu.memory_space<vmem>>, %arg4: memref<1xf32, #tpu.memory_space<smem>>, %arg5: memref<1x8x256xbf16, #tpu.memory_space<vmem>>) attributes {dimension_semantics = [#tpu.dimension_semantics<parallel>], iteration_bounds = array<i64: 2>, scalar_prefetch = 0 : i64, scratch_operands = 0 : i64, tpu.core_type = #tpu.core_type<tc>, window_params = [{transform_indices = @transform_0, window_bounds = array<i64: 1, 16, 256>}, {pipeline_mode = #tpu.pipeline_mode<synchronous>, transform_indices = @transform_1, window_bounds = array<i64: 1, 8, 16>}, {pipeline_mode = #tpu.pipeline_mode<synchronous>, transform_indices = @transform_2, window_bounds = array<i64: 8, 1>}, {transform_indices = @transform_3, window_bounds = array<i64: 1>}, {transform_indices = @transform_4, window_bounds = array<i64: 1, 8, 256>}]} {
    %c0 = arith.constant 0 : index
    %c0_0 = arith.constant 0 : index
    %c0_1 = arith.constant 0 : index
    %0 = vector.load %arg1[%c0, %c0_0, %c0_1] : memref<1x16x256xbf16, #tpu.memory_space<vmem>>, vector<1x16x256xbf16>
    %1 = vector.shape_cast %0 : vector<1x16x256xbf16> to vector<16x256xbf16>
    %cst = arith.constant 0.000000e+00 : f32
    %2 = vector.broadcast %cst : f32 to vector<8x256xf32>
    %c0_2 = arith.constant 0 : index
    %c0_3 = arith.constant 0 : index
    %c0_4 = arith.constant 0 : index
    %3 = vector.load %arg2[%c0_2, %c0_3, %c0_4] : memref<1x8x16xbf16, #tpu.memory_space<vmem>>, vector<1x8x16xbf16>
    %4 = vector.shape_cast %3 : vector<1x8x16xbf16> to vector<8x16xbf16>
    %cst_5 = arith.constant dense<0.000000e+00> : vector<8x256xf32>
    %5 = tpu.matmul %4, %1, %cst_5 {dimension_numbers = #tpu.dot_dimension_numbers<[1], [0], [0], [1], [0, 0, 1, 1], [], []>} : vector<8x16xbf16>, vector<16x256xbf16>, vector<8x256xf32> -> vector<8x256xf32>
    %6 = arith.addf %2, %5 : vector<8x256xf32>
    %c0_6 = arith.constant 0 : index
    %c0_7 = arith.constant 0 : index
    %7 = vector.load %arg3[%c0_6, %c0_7] : memref<8x1xf32, #tpu.memory_space<vmem>>, vector<8x1xf32>
    %8 = vector.broadcast %7 : vector<8x1xf32> to vector<8x256xf32>
    %9 = arith.addf %6, %8 : vector<8x256xf32>
    %c0_8 = arith.constant 0 : index
    %10 = memref.load %arg4[%c0_8] : memref<1xf32, #tpu.memory_space<smem>>
    %cst_9 = arith.constant 0.000000e+00 : f32
    %11 = vector.broadcast %cst_9 : f32 to vector<8x256xf32>
    %12 = arith.cmpf oge, %9, %11 : vector<8x256xf32>
    %13 = vector.broadcast %10 : f32 to vector<8x256xf32>
    %14 = arith.mulf %13, %9 : vector<8x256xf32>
    %15 = arith.select %12, %9, %14 : vector<8x256xi1>, vector<8x256xf32>
    %16 = arith.truncf %15 : vector<8x256xf32> to vector<8x256xbf16>
    %c0_10 = arith.constant 0 : index
    %c0_11 = arith.constant 0 : index
    %c0_12 = arith.constant 0 : index
    %17 = vector.load %arg5[%c0_10, %c0_11, %c0_12] : memref<1x8x256xbf16, #tpu.memory_space<vmem>>, vector<1x8x256xbf16>
    %18 = vector.shape_cast %17 : vector<1x8x256xbf16> to vector<8x256xbf16>
    %19 = vector.shape_cast %16 : vector<8x256xbf16> to vector<1x8x256xbf16>
    tpu.vector_store %arg5[%c0_10, %c0_11, %c0_12], %19 {strides = array<i32>} : memref<1x8x256xbf16, #tpu.memory_space<vmem>>, vector<1x8x256xbf16>,
    return
  }
  func.func @transform_0(%arg0: i32) -> (i32, i32, i32) {
    %c0_i32 = arith.constant 0 : i32
    %c0_i32_0 = arith.constant 0 : i32
    %c0_i32_1 = arith.constant 0 : i32
    return %arg0, %c0_i32, %c0_i32_0 : i32, i32, i32
  }
  func.func @transform_1(%arg0: i32) -> (i32, i32, i32) {
    %c0_i32 = arith.constant 0 : i32
    %c0_i32_0 = arith.constant 0 : i32
    %c0_i32_1 = arith.constant 0 : i32
    %c0_i32_2 = arith.constant 0 : i32
    return %c0_i32, %c0_i32_0, %c0_i32_1 : i32, i32, i32
  }
  func.func @transform_2(%arg0: i32) -> (i32, i32) {
    %c0_i32 = arith.constant 0 : i32
    %c0_i32_0 = arith.constant 0 : i32
    %c0_i32_1 = arith.constant 0 : i32
    return %c0_i32, %c0_i32_0 : i32, i32
  }
  func.func @transform_3(%arg0: i32) -> i32 {
    %c0_i32 = arith.constant 0 : i32
    %c0_i32_0 = arith.constant 0 : i32
    return %c0_i32 : i32
  }
  func.func @transform_4(%arg0: i32) -> (i32, i32, i32) {
    %c0_i32 = arith.constant 0 : i32
    %c0_i32_0 = arith.constant 0 : i32
    %c0_i32_1 = arith.constant 0 : i32
    return %arg0, %c0_i32, %c0_i32_0 : i32, i32, i32
  }
}

module attributes {stable_mosaic.version = 11 : i64} {
  func.func @_tap_conv_kernel(%arg0: i32, %arg1: memref<1x16x1024xbf16, #tpu.memory_space<vmem>>, %arg2: memref<1x8x16xbf16, #tpu.memory_space<vmem>>, %arg3: memref<8x1xf32, #tpu.memory_space<vmem>>, %arg4: memref<1xf32, #tpu.memory_space<smem>>, %arg5: memref<1x8x1024xbf16, #tpu.memory_space<vmem>>) attributes {dimension_semantics = [#tpu.dimension_semantics<parallel>], iteration_bounds = array<i64: 2>, scalar_prefetch = 0 : i64, scratch_operands = 0 : i64, tpu.core_type = #tpu.core_type<tc>, window_params = [{transform_indices = @transform_0, window_bounds = array<i64: 1, 16, 1024>}, {pipeline_mode = #tpu.pipeline_mode<synchronous>, transform_indices = @transform_1, window_bounds = array<i64: 1, 8, 16>}, {pipeline_mode = #tpu.pipeline_mode<synchronous>, transform_indices = @transform_2, window_bounds = array<i64: 8, 1>}, {transform_indices = @transform_3, window_bounds = array<i64: 1>}, {transform_indices = @transform_4, window_bounds = array<i64: 1, 8, 1024>}]} {
    %c0 = arith.constant 0 : index
    %c0_0 = arith.constant 0 : index
    %c0_1 = arith.constant 0 : index
    %0 = vector.load %arg1[%c0, %c0_0, %c0_1] : memref<1x16x1024xbf16, #tpu.memory_space<vmem>>, vector<1x16x1024xbf16>
    %1 = vector.shape_cast %0 : vector<1x16x1024xbf16> to vector<16x1024xbf16>
    %cst = arith.constant 0.000000e+00 : f32
    %2 = vector.broadcast %cst : f32 to vector<8x1024xf32>
    %c0_2 = arith.constant 0 : index
    %c0_3 = arith.constant 0 : index
    %c0_4 = arith.constant 0 : index
    %3 = vector.load %arg2[%c0_2, %c0_3, %c0_4] : memref<1x8x16xbf16, #tpu.memory_space<vmem>>, vector<1x8x16xbf16>
    %4 = vector.shape_cast %3 : vector<1x8x16xbf16> to vector<8x16xbf16>
    %cst_5 = arith.constant dense<0.000000e+00> : vector<8x1024xf32>
    %5 = tpu.matmul %4, %1, %cst_5 {dimension_numbers = #tpu.dot_dimension_numbers<[1], [0], [0], [1], [0, 0, 1, 1], [], []>} : vector<8x16xbf16>, vector<16x1024xbf16>, vector<8x1024xf32> -> vector<8x1024xf32>
    %6 = arith.addf %2, %5 : vector<8x1024xf32>
    %c0_6 = arith.constant 0 : index
    %c0_7 = arith.constant 0 : index
    %7 = vector.load %arg3[%c0_6, %c0_7] : memref<8x1xf32, #tpu.memory_space<vmem>>, vector<8x1xf32>
    %8 = vector.broadcast %7 : vector<8x1xf32> to vector<8x1024xf32>
    %9 = arith.addf %6, %8 : vector<8x1024xf32>
    %c0_8 = arith.constant 0 : index
    %10 = memref.load %arg4[%c0_8] : memref<1xf32, #tpu.memory_space<smem>>
    %cst_9 = arith.constant 0.000000e+00 : f32
    %11 = vector.broadcast %cst_9 : f32 to vector<8x1024xf32>
    %12 = arith.cmpf oge, %9, %11 : vector<8x1024xf32>
    %13 = vector.broadcast %10 : f32 to vector<8x1024xf32>
    %14 = arith.mulf %13, %9 : vector<8x1024xf32>
    %15 = arith.select %12, %9, %14 : vector<8x1024xi1>, vector<8x1024xf32>
    %16 = arith.truncf %15 : vector<8x1024xf32> to vector<8x1024xbf16>
    %c0_10 = arith.constant 0 : index
    %c0_11 = arith.constant 0 : index
    %c0_12 = arith.constant 0 : index
    %17 = vector.load %arg5[%c0_10, %c0_11, %c0_12] : memref<1x8x1024xbf16, #tpu.memory_space<vmem>>, vector<1x8x1024xbf16>
    %18 = vector.shape_cast %17 : vector<1x8x1024xbf16> to vector<8x1024xbf16>
    %19 = vector.shape_cast %16 : vector<8x1024xbf16> to vector<1x8x1024xbf16>
    tpu.vector_store %arg5[%c0_10, %c0_11, %c0_12], %19 {strides = array<i32>} : memref<1x8x1024xbf16, #tpu.memory_space<vmem>>, vector<1x8x1024xbf16>,
    return
  }
  func.func @transform_0(%arg0: i32) -> (i32, i32, i32) {
    %c0_i32 = arith.constant 0 : i32
    %c0_i32_0 = arith.constant 0 : i32
    %c0_i32_1 = arith.constant 0 : i32
    return %arg0, %c0_i32, %c0_i32_0 : i32, i32, i32
  }
  func.func @transform_1(%arg0: i32) -> (i32, i32, i32) {
    %c0_i32 = arith.constant 0 : i32
    %c0_i32_0 = arith.constant 0 : i32
    %c0_i32_1 = arith.constant 0 : i32
    %c0_i32_2 = arith.constant 0 : i32
    return %c0_i32, %c0_i32_0, %c0_i32_1 : i32, i32, i32
  }
  func.func @transform_2(%arg0: i32) -> (i32, i32) {
    %c0_i32 = arith.constant 0 : i32
    %c0_i32_0 = arith.constant 0 : i32
    %c0_i32_1 = arith.constant 0 : i32
    return %c0_i32, %c0_i32_0 : i32, i32
  }
  func.func @transform_3(%arg0: i32) -> i32 {
    %c0_i32 = arith.constant 0 : i32
    %c0_i32_0 = arith.constant 0 : i32
    return %c0_i32 : i32
  }
  func.func @transform_4(%arg0: i32) -> (i32, i32, i32) {
    %c0_i32 = arith.constant 0 : i32
    %c0_i32_0 = arith.constant 0 : i32
    %c0_i32_1 = arith.constant 0 : i32
    return %arg0, %c0_i32, %c0_i32_0 : i32, i32, i32
  }
}

</mosaic_0001>

<llo_original>
// kernel: tile.13
$region0: #{tile.13}
  #allocation0 [shape = 's32[1]{0}', space=sflag, size = 0x4, scoped, tag = 'scoped memory for tile.13']
  %s0 = inlined_call_operand.vmem [shape: f32[8], index: 0, kind: input, shape index: {}]
  %s1 = inlined_call_operand.vmem [shape: f32[4,8], index: 1, kind: output, shape index: {}]
  // Predicated region
  $region2: #{tile.13} parent=0 // pred_check
    _
  $region3: #{tile.13} parent=0 // pred_check_branch
    %3 = sbr.rel (0) target = $region5
  $region4: #{tile.13} parent=0 // pred_region
    _
  $region5: #{tile.13} parent=0 // pred_fallthru
    _
  %v4 = vld [vmem:[%s0] ss:$0 sm:$0xff]
  %5 = vst [vmem:[%s1] sm:$0xf] %v4

// kernel: tile.0
$region0: #{tile.0}
  %s0 = inlined_call_operand.vmem [shape: f32[4,8], index: 0, kind: input, shape index: {}]
  %s1 = inlined_call_operand.vmem [shape: f32[32,1], index: 1, kind: output, shape index: {}]
  $region1: #{tile.0} parent=0
    #allocation0 [shape = 'u8[4096]{0}', space=vmem, size = 0x1000, scoped, tag = 'scoped mem for input reshape']
    %s3 = sshllo.u32 0, 4
    %v4 = vld [vmem:[%s0] sm:%s3]
    %5 = vst [vmem:[#allocation0] sm:%s3] %v4
    %v6 = vld [vmem:[#allocation0] sm:$0xf]
    %vm7 = vcmask 7168
    %8 = vst.msk [vmem:[%s1] ss:$8 sm:$0xf] %vm7, %v6
    %v9 = vld [vmem:[#allocation0] sm:$0xf]
    %10 = vrot.lane.b32.xlu0 %v9, 127
    %v11 = vpop.permute.xlu0 %10
    %vm12 = vcmask 7168
    %s13 = scalar_lea.vmem %s1, 1
    %14 = vst.msk [vmem:[%s13] ss:$8 sm:$0xf] %vm12, %v11
    %v15 = vld [vmem:[#allocation0] sm:$0xf]
    %16 = vrot.lane.b32.xlu0 %v15, 126
    %v17 = vpop.permute.xlu0 %16
    %vm18 = vcmask 7168
    %s19 = scalar_lea.vmem %s1, 2
    %20 = vst.msk [vmem:[%s19] ss:$8 sm:$0xf] %vm18, %v17
    %v21 = vld [vmem:[#allocation0] sm:$0xf]
    %22 = vrot.lane.b32.xlu0 %v21, 125
    %v23 = vpop.permute.xlu0 %22
    %vm24 = vcmask 7168
    %s25 = scalar_lea.vmem %s1, 3
    %26 = vst.msk [vmem:[%s25] ss:$8 sm:$0xf] %vm24, %v23
    %v27 = vld [vmem:[#allocation0] sm:$0xf]
    %28 = vrot.lane.b32.xlu0 %v27, 124
    %v29 = vpop.permute.xlu0 %28
    %vm30 = vcmask 7168
    %s31 = scalar_lea.vmem %s1, 4
    %32 = vst.msk [vmem:[%s31] ss:$8 sm:$0xf] %vm30, %v29
    %v33 = vld [vmem:[#allocation0] sm:$0xf]
    %34 = vrot.lane.b32.xlu0 %v33, 123
    %v35 = vpop.permute.xlu0 %34
    %vm36 = vcmask 7168
    %s37 = scalar_lea.vmem %s1, 5
    %38 = vst.msk [vmem:[%s37] ss:$8 sm:$0xf] %vm36, %v35
    %v39 = vld [vmem:[#allocation0] sm:$0xf]
    %40 = vrot.lane.b32.xlu0 %v39, 122
    %v41 = vpop.permute.xlu0 %40
    %vm42 = vcmask 7168
    %s43 = scalar_lea.vmem %s1, 6
    %44 = vst.msk [vmem:[%s43] ss:$8 sm:$0xf] %vm42, %v41
    %v45 = vld [vmem:[#allocation0] sm:$0xf]
    %46 = vrot.lane.b32.xlu0 %v45, 121
    %v47 = vpop.permute.xlu0 %46
    %vm48 = vcmask 7168
    %s49 = scalar_lea.vmem %s1, 7
    %50 = vst.msk [vmem:[%s49] ss:$8 sm:$0xf] %vm48, %v47

// kernel: feedback_block_custom_forward.8
$region0: #{feedback_block_custom_forward.8}
  #allocation0 [shape = 'u32[]', space=smem, size = 0x4, offset = 0x4, fixed_abs, tag = 'smem constant byte address 0x4 - core index']
  #allocation1 [shape = 'u32[144,128]{1,0:T(1,128)}', space=vmem, size = 0x12000, scoped, tag = 'internal scratch']
  #allocation2 [shape = 'f32[1]{0:T(128)S(6)}', space=smem, size = 0x200, scoped, tag = 'scoped memory for feedback_block_custom_forward.8']
  %s0 = inlined_call_operand.vmem [shape: bf16[2,8,256], index: 0, kind: input, shape index: {}]
  %s1 = inlined_call_operand.vmem [shape: bf16[1,8,8], index: 1, kind: input, shape index: {}]
  %s2 = inlined_call_operand.vmem [shape: f32[8,1], index: 2, kind: input, shape index: {}]
  %s3 = inlined_call_operand.<no memory space> [shape: f32[1], index: 3, kind: input, shape index: {}]
  %s4 = inlined_call_operand.vmem [shape: bf16[2,8,256], index: 4, kind: output, shape index: {}]
  %s5 = sld [smem:[#allocation0]]
  $region49: #{feedback_block_custom_forward.8} parent=0
    _
  %s7 = ssub.s32 1, %s5
  %s8 = scalar_select 0, %s7, %s5
  %9 = sst [smem:[#allocation2]] %s3
  loop: start=0, step=1, limit=4
  $region2: #{feedback_block_custom_forward.8} parent=0 // loop_pre_header
    _
  $region3: #{feedback_block_custom_forward.8} parent=0 // loop_header
    %s11 = sphi 0, %s15
    %p12 = scmp.ge.s32.totalorder %s11, 4
    %s21 = sphi 0, %s23
    %s24 = sphi 0, %s21
    %s25 = sphi 0, %s24
    %s41 = sphi 0, %s25
    %s45 = sphi 0, %s45
    %s47 = sphi 0, %s45
    %s48 = sphi 0, %s47
    %s62 = sphi 0, %s48
    %s66 = sphi 0, %s66
    %s68 = sphi 0, %s66
    %s69 = sphi 0, %s68
    %s83 = sphi 0, %s69
    %s87 = sphi 0, %s87
    %s89 = sphi 0, %s87
    %s90 = sphi 0, %s89
    %s104 = sphi 0, %s90
    %s110 = sphi 0, %s112
    %s113 = sphi 0, %s110
    %s114 = sphi 0, %s113
    %s130 = sphi 0, %s114
  $region4: #{feedback_block_custom_forward.8} parent=0 // loop_header_branch
    %14 = sbr.rel (%p12) target = $region8
  $region5: #{feedback_block_custom_forward.8} parent=0 // loop_body
    %s16 = ssub.s32 %s11, 1
    %s17 = ssub.s32 %s11, 2
    %s18 = sadd.s32 %s11, 1
    %s19 = ssub.s32 %s11, %s18
    %p20 = scmp.eq.s32.totalorder %s19, 0
    %s22 = sadd.s32 %s21, 1
    %s23 = scalar_select %p20, %s21, %s22
    %p26 = pneg %p20
    %p27 = scmp.eq.s32.totalorder %s11, 1
    %p28 = por %p26, %p27
    %p29 = scmp.ne.s32.totalorder %s21, %s24
    %p30 = scmp.eq.s32.totalorder %s11, 0
    %p31 = por %p29, %p30
    %p32 = scmp.ne.s32.totalorder %s21, %s24
    %p33 = scmp.eq.s32.totalorder %s16, 1
    %p34 = por %p32, %p33
    %p35 = scmp.ne.s32.totalorder %s24, %s25
    %p36 = scmp.eq.s32.totalorder %s16, 0
    %p37 = por %p35, %p36
    %p38 = scmp.ne.s32.totalorder %s24, %s25
    %p39 = scmp.eq.s32.totalorder %s17, 1
    %p40 = por %p38, %p39
    %p42 = scmp.ne.s32.totalorder %s25, %s41
    %p43 = scmp.eq.s32.totalorder %s17, 0
    %p44 = por %p42, %p43
    %s46 = sadd.s32 %s45, 1
    %p49 = scmp.eq.s32.totalorder %s11, 1
    %p50 = scmp.ne.s32.totalorder %s45, %s47
    %p51 = scmp.eq.s32.totalorder %s11, 0
    %p52 = por %p50, %p51
    %p53 = scmp.ne.s32.totalorder %s45, %s47
    %p54 = scmp.eq.s32.totalorder %s16, 1
    %p55 = por %p53, %p54
    %p56 = scmp.ne.s32.totalorder %s47, %s48
    %p57 = scmp.eq.s32.totalorder %s16, 0
    %p58 = por %p56, %p57
    %p59 = scmp.ne.s32.totalorder %s47, %s48
    %p60 = scmp.eq.s32.totalorder %s17, 1
    %p61 = por %p59, %p60
    %p63 = scmp.ne.s32.totalorder %s48, %s62
    %p64 = scmp.eq.s32.totalorder %s17, 0
    %p65 = por %p63, %p64
    %s67 = sadd.s32 %s66, 1
    %p70 = scmp.eq.s32.totalorder %s11, 1
    %p71 = scmp.ne.s32.totalorder %s66, %s68
    %p72 = scmp.eq.s32.totalorder %s11, 0
    %p73 = por %p71, %p72
    %p74 = scmp.ne.s32.totalorder %s66, %s68
    %p75 = scmp.eq.s32.totalorder %s16, 1
    %p76 = por %p74, %p75
    %p77 = scmp.ne.s32.totalorder %s68, %s69
    %p78 = scmp.eq.s32.totalorder %s16, 0
    %p79 = por %p77, %p78
    %p80 = scmp.ne.s32.totalorder %s68, %s69
    %p81 = scmp.eq.s32.totalorder %s17, 1
    %p82 = por %p80, %p81
    %p84 = scmp.ne.s32.totalorder %s69, %s83
    %p85 = scmp.eq.s32.totalorder %s17, 0
    %p86 = por %p84, %p85
    %s88 = sadd.s32 %s87, 1
    %p91 = scmp.eq.s32.totalorder %s11, 1
    %p92 = scmp.ne.s32.totalorder %s87, %s89
    %p93 = scmp.eq.s32.totalorder %s11, 0
    %p94 = por %p92, %p93
    %p95 = scmp.ne.s32.totalorder %s87, %s89
    %p96 = scmp.eq.s32.totalorder %s16, 1
    %p97 = por %p95, %p96
    %p98 = scmp.ne.s32.totalorder %s89, %s90
    %p99 = scmp.eq.s32.totalorder %s16, 0
    %p100 = por %p98, %p99
    %p101 = scmp.ne.s32.totalorder %s89, %s90
    %p102 = scmp.eq.s32.totalorder %s17, 1
    %p103 = por %p101, %p102
    %p105 = scmp.ne.s32.totalorder %s90, %s104
    %p106 = scmp.eq.s32.totalorder %s17, 0
    %p107 = por %p105, %p106
    %s108 = ssub.s32 %s11, %s18
    %p109 = scmp.eq.s32.totalorder %s108, 0
    %s111 = sadd.s32 %s110, 1
    %s112 = scalar_select %p109, %s110, %s111
    %p115 = pneg %p109
    %p116 = scmp.eq.s32.totalorder %s11, 1
    %p117 = por %p115, %p116
    %p118 = scmp.ne.s32.totalorder %s110, %s113
    %p119 = scmp.eq.s32.totalorder %s11, 0
    %p120 = por %p118, %p119
    %p121 = scmp.ne.s32.totalorder %s110, %s113
    %p122 = scmp.eq.s32.totalorder %s16, 1
    %p123 = por %p121, %p122
    %p124 = scmp.ne.s32.totalorder %s113, %s114
    %p125 = scmp.eq.s32.totalorder %s16, 0
    %p126 = por %p124, %p125
    %p127 = scmp.ne.s32.totalorder %s113, %s114
    %p128 = scmp.eq.s32.totalorder %s17, 1
    %p129 = por %p127, %p128
    %p131 = scmp.ne.s32.totalorder %s114, %s130
    %p132 = scmp.eq.s32.totalorder %s17, 0
    %p133 = por %p131, %p132
    %p134 = scmp.le.s32.totalorder 1, %s11
    %p135 = scmp.lt.s32.totalorder %s11, 3
    %p136 = pnand %p134, %p135
    %p137 = pneg %p136
    // Predicated region
    $region9: #{feedback_block_custom_forward.8} parent=5 // pred_check
      _
    $region10: #{feedback_block_custom_forward.8} parent=5 // pred_check_branch
      %139 = sbr.rel (%p136) target = $region12
    $region11: #{feedback_block_custom_forward.8} parent=5 // pred_region
      %s140 = ssub.s32 %s11, 1
      // Predicated region
      $region13: #{feedback_block_custom_forward.8} parent=11 // pred_check
        %p141 = pneg %p58
      $region14: #{feedback_block_custom_forward.8} parent=11 // pred_check_branch
        %143 = sbr.rel (%p141) target = $region16
      $region15: #{feedback_block_custom_forward.8} parent=11 // pred_region
        _
      $region16: #{feedback_block_custom_forward.8} parent=11 // pred_fallthru
        _
      // Predicated region
      $region17: #{feedback_block_custom_forward.8} parent=11 // pred_check
        %p144 = pneg %p79
      $region18: #{feedback_block_custom_forward.8} parent=11 // pred_check_branch
        %146 = sbr.rel (%p144) target = $region20
      $region19: #{feedback_block_custom_forward.8} parent=11 // pred_region
        _
      $region20: #{feedback_block_custom_forward.8} parent=11 // pred_fallthru
        _
      // Predicated region
      $region21: #{feedback_block_custom_forward.8} parent=11 // pred_check
        %p147 = pneg %p100
      $region22: #{feedback_block_custom_forward.8} parent=11 // pred_check_branch
        %149 = sbr.rel (%p147) target = $region24
      $region23: #{feedback_block_custom_forward.8} parent=11 // pred_region
        _
      $region24: #{feedback_block_custom_forward.8} parent=11 // pred_fallthru
        _
    $region12: #{feedback_block_custom_forward.8} parent=5 // pred_fallthru
      _
    %p150 = scmp.lt.s32.totalorder %s11, 2
    // Predicated region
    $region25: #{feedback_block_custom_forward.8} parent=5 // pred_check
      %p151 = pneg %p150
    $region26: #{feedback_block_custom_forward.8} parent=5 // pred_check_branch
      %153 = sbr.rel (%p151) target = $region28
    $region27: #{feedback_block_custom_forward.8} parent=5 // pred_region
      // Predicated region
      $region29: #{feedback_block_custom_forward.8} parent=27 // pred_check
        %p154 = pneg %p31
      $region30: #{feedback_block_custom_forward.8} parent=27 // pred_check_branch
        %156 = sbr.rel (%p154) target = $region32
      $region31: #{feedback_block_custom_forward.8} parent=27 // pred_region
        %p157 = scmp.lt.s32.totalorder %s11, 1
        %s158 = scalar_select %p157, %s11, 1
        %s159 = smul.addr %s158, 2
        %s160 = smul.addr %s159, 4
        %s161 = scalar_lea.vmem %s0, %s160
      $region32: #{feedback_block_custom_forward.8} parent=27 // pred_fallthru
        _
    $region28: #{feedback_block_custom_forward.8} parent=5 // pred_fallthru
      _
    %p162 = scmp.le.s32.totalorder 1, %s11
    %p163 = scmp.lt.s32.totalorder %s11, 3
    %p164 = pnand %p162, %p163
    %p165 = pneg %p164
    // Predicated region
    $region33: #{feedback_block_custom_forward.8} parent=5 // pred_check
      _
    $region34: #{feedback_block_custom_forward.8} parent=5 // pred_check_branch
      %167 = sbr.rel (%p164) target = $region36
    $region35: #{feedback_block_custom_forward.8} parent=5 // pred_region
      %s168 = ssub.s32 %s11, 1
      %p169 = scmp.lt.s32.totalorder %s16, 1
      %s170 = scalar_select %p169, %s16, 1
      %s171 = smul.addr %s170, 2
      %s172 = smul.addr %s171, 4
      %s173 = scalar_lea.vmem %s0, %s172
      %p174 = pneg %p37
      %p175 = pneg %p34
      %p176 = pneg %p58
      %p177 = pneg %p55
      %p178 = pneg %p79
      %p179 = pneg %p76
      %p180 = pneg %p100
      %p181 = pneg %p97
      %p182 = pneg %p126
      %p183 = pneg %p123
      %p184 = scmp.lt.s32.totalorder %s16, 1
      %s185 = scalar_select %p184, %s16, 1
      %s186 = smul.addr %s185, 2
      %s187 = smul.addr %s186, 4
      %s188 = scalar_lea.vmem %s4, %s187
      %p189 = scmp.lt.s32.totalorder %s16, 1
      %s190 = scalar_select %p189, %s16, 1
      %s191 = smul.addr %s190, 2
      %s192 = smul.addr %s191, 4
      %s193 = scalar_lea.vmem %s0, %s192
      %p194 = scmp.lt.s32.totalorder %s16, 1
      %s195 = scalar_select %p194, %s16, 1
      %s196 = smul.addr %s195, 2
      %s197 = smul.addr %s196, 4
      %s198 = scalar_lea.vmem %s4, %s197
      %v200 = vld [vmem:[%s193] sm:$0xff]
      %v201 = vld [vmem:[%s1] sm:$0xf]
      %v202 = vld [vmem:[%s2] sm:$0xff]
      %204 = vset.pattern.permute.xlu0 0
      %205 = vperm.xlu0 %204, %v202
      %v206 = vpop.permute.xlu0 %205
      %v209 = vunpack.c.l.b16 %v200
      %v210 = vunpack.c.h.b16 %v200
      %v211 = vpack.c.b16 %v209, %v209
      %v212 = vpack.c.b16 %v210, %v210
      %vm213 = vcmask 64512
      %v215 = vsel %vm213, %v201, 0
      %vm217 = vcmask 1043456
      %v219 = vsel %vm217, %v211, 0
      %v222 = vsel %vm217, %v212, 0
      %224 = vmatprep.subr.bf16.mxu0 %v222
      %225 = vmatpush1.bf16.msra.mxu0 %v219
      %226 = vmatprep.subr.bf16.mxu0 0
      %227 = vmatpush1.bf16.msra.mxu0 0
      %228 = vmatprep.subr.bf16.mxu0 0
      %229 = vmatpush1.bf16.msra.mxu0 0
      %230 = vmatprep.subr.bf16.mxu0 0
      %231 = vmatpush1.bf16.msra.mxu0 0
      %232 = vmatprep.subr.bf16.mxu0 0
      %233 = vmatpush1.bf16.msra.mxu0 0
      %234 = vmatprep.subr.bf16.mxu0 0
      %235 = vmatpush1.bf16.msra.mxu0 0
      %236 = vmatprep.subr.bf16.mxu0 0
      %237 = vmatpush1.bf16.msra.mxu0 0
      %238 = vmatprep.subr.bf16.mxu0 0
      %239 = vmatpush1.bf16.msra.mxu0 0
      %240 = vmatprep.subr.bf16.mxu0 0
      %241 = vmatpush1.bf16.msra.mxu0 0
      %242 = vmatprep.subr.bf16.mxu0 0
      %243 = vmatpush1.bf16.msra.mxu0 0
      %244 = vmatprep.subr.bf16.mxu0 0
      %245 = vmatpush1.bf16.msra.mxu0 0
      %246 = vmatprep.subr.bf16.mxu0 0
      %247 = vmatpush1.bf16.msra.mxu0 0
      %248 = vmatprep.subr.bf16.mxu0 0
      %249 = vmatpush1.bf16.msra.mxu0 0
      %250 = vmatprep.subr.bf16.mxu0 0
      %251 = vmatpush1.bf16.msra.mxu0 0
      %252 = vmatprep.subr.bf16.mxu0 0
      %253 = vmatpush1.bf16.msra.mxu0 0
      %254 = vmatprep.subr.bf16.mxu0 0
      %255 = vmatpush1.bf16.msra.mxu0 0
      %256 = vmatprep.mubr.bf16.mxu0 0
      %257 = vmatmul.mubr.bf16.gmra.mrb[0].mxu0 %v215
      %v258 = vpop.f32.mrb[0].mxu0
      %v259 = vadd.f32 %v206, %v258
      %v260 = vpop.f32.mrb[0].mxu0
      %v261 = vadd.f32 %v206, %v260
      %v262 = vpop.f32.mrb[0].mxu0
      %v263 = vpop.f32.mrb[0].mxu0
      %264 = vdwg.mxu0
      %s265 = sld [smem:[#allocation2]]
      %vm266 = vcmp.ge.f32.partialorder %v259, 0.0
      %vm267 = vcmp.ge.f32.partialorder %v261, 0.0
      %v268 = vstv %s265
      %v269 = vmul.f32 %v268, %v259
      %v270 = vmul.f32 %v268, %v261
      %v271 = vsel %vm266, %v259, %v269
      %v272 = vsel %vm267, %v261, %v270
      %v273 = vpack.c.bf16 %v271, %v271
      %v274 = vpack.c.bf16 %v272, %v272
      %v277 = vunpack.c.l.b16 %v273
      %v278 = vunpack.c.l.b16 %v274
      %v279 = vpack.c.b16 %v278, %v277
      %281 = vst [vmem:[%s198] sm:$0xff] %v279
      %p282 = scmp.lt.s32.totalorder %s16, 1
      %s283 = scalar_select %p282, %s16, 1
      %s284 = smul.addr %s283, 2
      %s285 = smul.addr %s284, 4
      %s286 = scalar_lea.vmem %s4, %s285
      // Predicated region
      $region37: #{feedback_block_custom_forward.8} parent=35 // pred_check
        %p287 = pneg %p123
      $region38: #{feedback_block_custom_forward.8} parent=35 // pred_check_branch
        %289 = sbr.rel (%p287) target = $region40
      $region39: #{feedback_block_custom_forward.8} parent=35 // pred_region
        _
      $region40: #{feedback_block_custom_forward.8} parent=35 // pred_fallthru
        _
    $region36: #{feedback_block_custom_forward.8} parent=5 // pred_fallthru
      _
    %p290 = scmp.le.s32.totalorder 2, %s11
    // Predicated region
    $region41: #{feedback_block_custom_forward.8} parent=5 // pred_check
      %p291 = pneg %p290
    $region42: #{feedback_block_custom_forward.8} parent=5 // pred_check_branch
      %293 = sbr.rel (%p291) target = $region44
    $region43: #{feedback_block_custom_forward.8} parent=5 // pred_region
      %s294 = ssub.s32 %s11, 2
      // Predicated region
      $region45: #{feedback_block_custom_forward.8} parent=43 // pred_check
        %p295 = pneg %p129
      $region46: #{feedback_block_custom_forward.8} parent=43 // pred_check_branch
        %297 = sbr.rel (%p295) target = $region48
      $region47: #{feedback_block_custom_forward.8} parent=43 // pred_region
        %p298 = scmp.lt.s32.totalorder %s17, 1
        %s299 = scalar_select %p298, %s17, 1
        %s300 = smul.addr %s299, 2
        %s301 = smul.addr %s300, 4
        %s302 = scalar_lea.vmem %s4, %s301
      $region48: #{feedback_block_custom_forward.8} parent=43 // pred_fallthru
        _
    $region44: #{feedback_block_custom_forward.8} parent=5 // pred_fallthru
      _
  $region6: #{feedback_block_custom_forward.8} parent=0 // loop_footer
    %s15 = sadd.s32 1, %s11
  $region7: #{feedback_block_custom_forward.8} parent=0 // loop_footer_branch
    %10 = sbr.rel target = $region3
  $region8: #{feedback_block_custom_forward.8} parent=0 // loop_exit
    _

// kernel: feedback_block_custom_forward.9
$region0: #{feedback_block_custom_forward.9}
  #allocation0 [shape = 'u32[]', space=smem, size = 0x4, offset = 0x4, fixed_abs, tag = 'smem constant byte address 0x4 - core index']
  #allocation1 [shape = 'u32[144,128]{1,0:T(1,128)}', space=vmem, size = 0x12000, scoped, tag = 'internal scratch']
  #allocation2 [shape = 'f32[1]{0:T(128)S(6)}', space=smem, size = 0x200, scoped, tag = 'scoped memory for feedback_block_custom_forward.9']
  %s0 = inlined_call_operand.vmem [shape: bf16[2,8,512], index: 0, kind: input, shape index: {}]
  %s1 = inlined_call_operand.vmem [shape: bf16[9,32,8], index: 1, kind: input, shape index: {}]
  %s2 = inlined_call_operand.vmem [shape: f32[32,1], index: 2, kind: input, shape index: {}]
  %s3 = inlined_call_operand.<no memory space> [shape: f32[1], index: 3, kind: input, shape index: {}]
  %s4 = inlined_call_operand.vmem [shape: bf16[2,32,384], index: 4, kind: output, shape index: {}]
  %s5 = sld [smem:[#allocation0]]
  $region49: #{feedback_block_custom_forward.9} parent=0
    _
  %s7 = ssub.s32 1, %s5
  %s8 = scalar_select 0, %s7, %s5
  %9 = sst [smem:[#allocation2]] %s3
  loop: start=0, step=1, limit=4
  $region2: #{feedback_block_custom_forward.9} parent=0 // loop_pre_header
    _
  $region3: #{feedback_block_custom_forward.9} parent=0 // loop_header
    %s11 = sphi 0, %s15
    %p12 = scmp.ge.s32.totalorder %s11, 4
    %s21 = sphi 0, %s23
    %s24 = sphi 0, %s21
    %s25 = sphi 0, %s24
    %s41 = sphi 0, %s25
    %s45 = sphi 0, %s45
    %s47 = sphi 0, %s45
    %s48 = sphi 0, %s47
    %s62 = sphi 0, %s48
    %s66 = sphi 0, %s66
    %s68 = sphi 0, %s66
    %s69 = sphi 0, %s68
    %s83 = sphi 0, %s69
    %s87 = sphi 0, %s87
    %s89 = sphi 0, %s87
    %s90 = sphi 0, %s89
    %s104 = sphi 0, %s90
    %s110 = sphi 0, %s112
    %s113 = sphi 0, %s110
    %s114 = sphi 0, %s113
    %s130 = sphi 0, %s114
  $region4: #{feedback_block_custom_forward.9} parent=0 // loop_header_branch
    %14 = sbr.rel (%p12) target = $region8
  $region5: #{feedback_block_custom_forward.9} parent=0 // loop_body
    %s16 = ssub.s32 %s11, 1
    %s17 = ssub.s32 %s11, 2
    %s18 = sadd.s32 %s11, 1
    %s19 = ssub.s32 %s11, %s18
    %p20 = scmp.eq.s32.totalorder %s19, 0
    %s22 = sadd.s32 %s21, 1
    %s23 = scalar_select %p20, %s21, %s22
    %p26 = pneg %p20
    %p27 = scmp.eq.s32.totalorder %s11, 1
    %p28 = por %p26, %p27
    %p29 = scmp.ne.s32.totalorder %s21, %s24
    %p30 = scmp.eq.s32.totalorder %s11, 0
    %p31 = por %p29, %p30
    %p32 = scmp.ne.s32.totalorder %s21, %s24
    %p33 = scmp.eq.s32.totalorder %s16, 1
    %p34 = por %p32, %p33
    %p35 = scmp.ne.s32.totalorder %s24, %s25
    %p36 = scmp.eq.s32.totalorder %s16, 0
    %p37 = por %p35, %p36
    %p38 = scmp.ne.s32.totalorder %s24, %s25
    %p39 = scmp.eq.s32.totalorder %s17, 1
    %p40 = por %p38, %p39
    %p42 = scmp.ne.s32.totalorder %s25, %s41
    %p43 = scmp.eq.s32.totalorder %s17, 0
    %p44 = por %p42, %p43
    %s46 = sadd.s32 %s45, 1
    %p49 = scmp.eq.s32.totalorder %s11, 1
    %p50 = scmp.ne.s32.totalorder %s45, %s47
    %p51 = scmp.eq.s32.totalorder %s11, 0
    %p52 = por %p50, %p51
    %p53 = scmp.ne.s32.totalorder %s45, %s47
    %p54 = scmp.eq.s32.totalorder %s16, 1
    %p55 = por %p53, %p54
    %p56 = scmp.ne.s32.totalorder %s47, %s48
    %p57 = scmp.eq.s32.totalorder %s16, 0
    %p58 = por %p56, %p57
    %p59 = scmp.ne.s32.totalorder %s47, %s48
    %p60 = scmp.eq.s32.totalorder %s17, 1
    %p61 = por %p59, %p60
    %p63 = scmp.ne.s32.totalorder %s48, %s62
    %p64 = scmp.eq.s32.totalorder %s17, 0
    %p65 = por %p63, %p64
    %s67 = sadd.s32 %s66, 1
    %p70 = scmp.eq.s32.totalorder %s11, 1
    %p71 = scmp.ne.s32.totalorder %s66, %s68
    %p72 = scmp.eq.s32.totalorder %s11, 0
    %p73 = por %p71, %p72
    %p74 = scmp.ne.s32.totalorder %s66, %s68
    %p75 = scmp.eq.s32.totalorder %s16, 1
    %p76 = por %p74, %p75
    %p77 = scmp.ne.s32.totalorder %s68, %s69
    %p78 = scmp.eq.s32.totalorder %s16, 0
    %p79 = por %p77, %p78
    %p80 = scmp.ne.s32.totalorder %s68, %s69
    %p81 = scmp.eq.s32.totalorder %s17, 1
    %p82 = por %p80, %p81
    %p84 = scmp.ne.s32.totalorder %s69, %s83
    %p85 = scmp.eq.s32.totalorder %s17, 0
    %p86 = por %p84, %p85
    %s88 = sadd.s32 %s87, 1
    %p91 = scmp.eq.s32.totalorder %s11, 1
    %p92 = scmp.ne.s32.totalorder %s87, %s89
    %p93 = scmp.eq.s32.totalorder %s11, 0
    %p94 = por %p92, %p93
    %p95 = scmp.ne.s32.totalorder %s87, %s89
    %p96 = scmp.eq.s32.totalorder %s16, 1
    %p97 = por %p95, %p96
    %p98 = scmp.ne.s32.totalorder %s89, %s90
    %p99 = scmp.eq.s32.totalorder %s16, 0
    %p100 = por %p98, %p99
    %p101 = scmp.ne.s32.totalorder %s89, %s90
    %p102 = scmp.eq.s32.totalorder %s17, 1
    %p103 = por %p101, %p102
    %p105 = scmp.ne.s32.totalorder %s90, %s104
    %p106 = scmp.eq.s32.totalorder %s17, 0
    %p107 = por %p105, %p106
    %s108 = ssub.s32 %s11, %s18
    %p109 = scmp.eq.s32.totalorder %s108, 0
    %s111 = sadd.s32 %s110, 1
    %s112 = scalar_select %p109, %s110, %s111
    %p115 = pneg %p109
    %p116 = scmp.eq.s32.totalorder %s11, 1
    %p117 = por %p115, %p116
    %p118 = scmp.ne.s32.totalorder %s110, %s113
    %p119 = scmp.eq.s32.totalorder %s11, 0
    %p120 = por %p118, %p119
    %p121 = scmp.ne.s32.totalorder %s110, %s113
    %p122 = scmp.eq.s32.totalorder %s16, 1
    %p123 = por %p121, %p122
    %p124 = scmp.ne.s32.totalorder %s113, %s114
    %p125 = scmp.eq.s32.totalorder %s16, 0
    %p126 = por %p124, %p125
    %p127 = scmp.ne.s32.totalorder %s113, %s114
    %p128 = scmp.eq.s32.totalorder %s17, 1
    %p129 = por %p127, %p128
    %p131 = scmp.ne.s32.totalorder %s114, %s130
    %p132 = scmp.eq.s32.totalorder %s17, 0
    %p133 = por %p131, %p132
    %p134 = scmp.le.s32.totalorder 1, %s11
    %p135 = scmp.lt.s32.totalorder %s11, 3
    %p136 = pnand %p134, %p135
    %p137 = pneg %p136
    // Predicated region
    $region9: #{feedback_block_custom_forward.9} parent=5 // pred_check
      _
    $region10: #{feedback_block_custom_forward.9} parent=5 // pred_check_branch
      %139 = sbr.rel (%p136) target = $region12
    $region11: #{feedback_block_custom_forward.9} parent=5 // pred_region
      %s140 = ssub.s32 %s11, 1
      // Predicated region
      $region13: #{feedback_block_custom_forward.9} parent=11 // pred_check
        %p141 = pneg %p58
      $region14: #{feedback_block_custom_forward.9} parent=11 // pred_check_branch
        %143 = sbr.rel (%p141) target = $region16
      $region15: #{feedback_block_custom_forward.9} parent=11 // pred_region
        _
      $region16: #{feedback_block_custom_forward.9} parent=11 // pred_fallthru
        _
      // Predicated region
      $region17: #{feedback_block_custom_forward.9} parent=11 // pred_check
        %p144 = pneg %p79
      $region18: #{feedback_block_custom_forward.9} parent=11 // pred_check_branch
        %146 = sbr.rel (%p144) target = $region20
      $region19: #{feedback_block_custom_forward.9} parent=11 // pred_region
        _
      $region20: #{feedback_block_custom_forward.9} parent=11 // pred_fallthru
        _
      // Predicated region
      $region21: #{feedback_block_custom_forward.9} parent=11 // pred_check
        %p147 = pneg %p100
      $region22: #{feedback_block_custom_forward.9} parent=11 // pred_check_branch
        %149 = sbr.rel (%p147) target = $region24
      $region23: #{feedback_block_custom_forward.9} parent=11 // pred_region
        _
      $region24: #{feedback_block_custom_forward.9} parent=11 // pred_fallthru
        _
    $region12: #{feedback_block_custom_forward.9} parent=5 // pred_fallthru
      _
    %p150 = scmp.lt.s32.totalorder %s11, 2
    // Predicated region
    $region25: #{feedback_block_custom_forward.9} parent=5 // pred_check
      %p151 = pneg %p150
    $region26: #{feedback_block_custom_forward.9} parent=5 // pred_check_branch
      %153 = sbr.rel (%p151) target = $region28
    $region27: #{feedback_block_custom_forward.9} parent=5 // pred_region
      // Predicated region
      $region29: #{feedback_block_custom_forward.9} parent=27 // pred_check
        %p154 = pneg %p31
      $region30: #{feedback_block_custom_forward.9} parent=27 // pred_check_branch
        %156 = sbr.rel (%p154) target = $region32
      $region31: #{feedback_block_custom_forward.9} parent=27 // pred_region
        %p157 = scmp.lt.s32.totalorder %s11, 1
        %s158 = scalar_select %p157, %s11, 1
        %s159 = smul.addr %s158, 4
        %s160 = smul.addr %s159, 4
        %s161 = scalar_lea.vmem %s0, %s160
      $region32: #{feedback_block_custom_forward.9} parent=27 // pred_fallthru
        _
    $region28: #{feedback_block_custom_forward.9} parent=5 // pred_fallthru
      _
    %p162 = scmp.le.s32.totalorder 1, %s11
    %p163 = scmp.lt.s32.totalorder %s11, 3
    %p164 = pnand %p162, %p163
    %p165 = pneg %p164
    // Predicated region
    $region33: #{feedback_block_custom_forward.9} parent=5 // pred_check
      _
    $region34: #{feedback_block_custom_forward.9} parent=5 // pred_check_branch
      %167 = sbr.rel (%p164) target = $region36
    $region35: #{feedback_block_custom_forward.9} parent=5 // pred_region
      %s168 = ssub.s32 %s11, 1
      %p169 = scmp.lt.s32.totalorder %s16, 1
      %s170 = scalar_select %p169, %s16, 1
      %s171 = smul.addr %s170, 4
      %s172 = smul.addr %s171, 4
      %s173 = scalar_lea.vmem %s0, %s172
      %p174 = pneg %p37
      %p175 = pneg %p34
      %p176 = pneg %p58
      %p177 = pneg %p55
      %p178 = pneg %p79
      %p179 = pneg %p76
      %p180 = pneg %p100
      %p181 = pneg %p97
      %p182 = pneg %p126
      %p183 = pneg %p123
      %p184 = scmp.lt.s32.totalorder %s16, 1
      %s185 = scalar_select %p184, %s16, 1
      %s186 = smul.addr %s185, 12
      %s187 = smul.addr %s186, 4
      %s188 = scalar_lea.vmem %s4, %s187
      %p189 = scmp.lt.s32.totalorder %s16, 1
      %s190 = scalar_select %p189, %s16, 1
      %s191 = smul.addr %s190, 4
      %s192 = smul.addr %s191, 4
      %s193 = scalar_lea.vmem %s0, %s192
      %p194 = scmp.lt.s32.totalorder %s16, 1
      %s195 = scalar_select %p194, %s16, 1
      %s196 = smul.addr %s195, 12
      %s197 = smul.addr %s196, 4
      %s198 = scalar_lea.vmem %s4, %s197
      %v200 = vld [vmem:[%s193] sm:$0xff]
      %v201 = vld [vmem:[%s193 + $0x8] sm:$0xff]
      %v202 = vld [vmem:[%s1] sm:$0xf]
      %v203 = vld [vmem:[%s1 + $0x4] sm:$0xf]
      %v204 = vld [vmem:[%s1 + $0x8] sm:$0xf]
      %v205 = vld [vmem:[%s1 + $0xc] sm:$0xf]
      %s206 = scalar_lea.vmem %s1, 16
      %v207 = vld [vmem:[%s206] sm:$0xf]
      %v208 = vld [vmem:[%s206 + $0x4] sm:$0xf]
      %v209 = vld [vmem:[%s206 + $0x8] sm:$0xf]
      %v210 = vld [vmem:[%s206 + $0xc] sm:$0xf]
      %v215 = vunpack.c.l.b16 %v207
      %v216 = vunpack.c.l.b16 %v208
      %v217 = vunpack.c.l.b16 %v209
      %v218 = vunpack.c.l.b16 %v210
      %v219 = vpack.c.b16 %v216, %v215
      %v220 = vpack.c.b16 %v218, %v217
      %v223 = vunpack.c.l.b16 %v200
      %v224 = vunpack.c.h.b16 %v200
      %v225 = vunpack.c.l.b16 %v201
      %v226 = vunpack.c.h.b16 %v201
      %v227 = vpack.c.b16 %v223, %v223
      %v228 = vpack.c.b16 %v224, %v224
      %v229 = vpack.c.b16 %v225, %v225
      %v230 = vpack.c.b16 %v226, %v226
      %231 = vrot.lane.b32.xlu0 %v227, 127
      %v232 = vpop.permute.xlu0 %231
      %233 = vrot.lane.b32.xlu0 %v228, 127
      %v234 = vpop.permute.xlu0 %233
      %235 = vrot.lane.b32.xlu0 %v229, 127
      %v236 = vpop.permute.xlu0 %235
      %237 = vrot.lane.b32.xlu0 %v230, 127
      %v238 = vpop.permute.xlu0 %237
      %vm239 = vcmask 1039360
      %v240 = vsel %vm239, %v232, %v234
      %v241 = vsel %vm239, %v234, %v236
      %v242 = vsel %vm239, %v236, %v238
      %vm243 = vcmask 64512
      %v245 = vsel %vm243, %v219, 0
      %v248 = vsel %vm243, %v220, 0
      %vm250 = vcmask 1043456
      %v252 = vsel %vm250, %v240, 0
      %v255 = vsel %vm250, %v241, 0
      %v258 = vsel %vm250, %v242, 0
      %260 = vmatprep.subr.bf16.mxu0 %v255
      %261 = vmatpush1.bf16.msra.mxu0 %v252
      %262 = vmatprep.subr.bf16.mxu0 0
      %263 = vmatpush1.bf16.msra.mxu0 0
      %264 = vmatprep.subr.bf16.mxu0 0
      %265 = vmatpush1.bf16.msra.mxu0 0
      %266 = vmatprep.subr.bf16.mxu0 0
      %267 = vmatpush1.bf16.msra.mxu0 0
      %268 = vmatprep.subr.bf16.mxu0 0
      %269 = vmatpush1.bf16.msra.mxu0 0
      %270 = vmatprep.subr.bf16.mxu0 0
      %271 = vmatpush1.bf16.msra.mxu0 0
      %272 = vmatprep.subr.bf16.mxu0 0
      %273 = vmatpush1.bf16.msra.mxu0 0
      %274 = vmatprep.subr.bf16.mxu0 0
      %275 = vmatpush1.bf16.msra.mxu0 0
      %276 = vmatprep.subr.bf16.mxu0 0
      %277 = vmatpush1.bf16.msra.mxu0 0
      %278 = vmatprep.subr.bf16.mxu0 0
      %279 = vmatpush1.bf16.msra.mxu0 0
      %280 = vmatprep.subr.bf16.mxu0 0
      %281 = vmatpush1.bf16.msra.mxu0 0
      %282 = vmatprep.subr.bf16.mxu0 0
      %283 = vmatpush1.bf16.msra.mxu0 0
      %284 = vmatprep.subr.bf16.mxu0 0
      %285 = vmatpush1.bf16.msra.mxu0 0
      %286 = vmatprep.subr.bf16.mxu0 0
      %287 = vmatpush1.bf16.msra.mxu0 0
      %288 = vmatprep.subr.bf16.mxu0 0
      %289 = vmatpush1.bf16.msra.mxu0 0
      %290 = vmatprep.subr.bf16.mxu0 0
      %291 = vmatpush1.bf16.msra.mxu0 0
      %292 = vmatprep.mubr.bf16.mxu0 0
      %293 = vmatmul.mubr.bf16.gmra.mrb[0].mxu0 %v245
      %v294 = vpop.f32.mrb[0].mxu0
      %v295 = vadd.f32 0.0, %v294
      %v296 = vpop.f32.mrb[0].mxu0
      %v297 = vadd.f32 0.0, %v296
      %v298 = vpop.f32.mrb[0].mxu0
      %v299 = vadd.f32 0.0, %v298
      %v300 = vpop.f32.mrb[0].mxu0
      %v301 = vadd.f32 0.0, %v300
      %302 = vmatprep.mubr.bf16.mxu0 0
      %303 = vmatmul.mubr.bf16.gmra.mrb[0].mxu0 %v248
      %v304 = vpop.f32.mrb[0].mxu0
      %v305 = vadd.f32 0.0, %v304
      %v306 = vpop.f32.mrb[0].mxu0
      %v307 = vadd.f32 0.0, %v306
      %v308 = vpop.f32.mrb[0].mxu0
      %v309 = vadd.f32 0.0, %v308
      %v310 = vpop.f32.mrb[0].mxu0
      %v311 = vadd.f32 0.0, %v310
      %312 = vdwg.mxu0
      %313 = vmatprep.subr.bf16.mxu0 0
      %314 = vmatpush1.bf16.msra.mxu0 %v258
      %315 = vmatprep.subr.bf16.mxu0 0
      %316 = vmatpush1.bf16.msra.mxu0 0
      %317 = vmatprep.subr.bf16.mxu0 0
      %318 = vmatpush1.bf16.msra.mxu0 0
      %319 = vmatprep.subr.bf16.mxu0 0
      %320 = vmatpush1.bf16.msra.mxu0 0
      %321 = vmatprep.subr.bf16.mxu0 0
      %322 = vmatpush1.bf16.msra.mxu0 0
      %323 = vmatprep.subr.bf16.mxu0 0
      %324 = vmatpush1.bf16.msra.mxu0 0
      %325 = vmatprep.subr.bf16.mxu0 0
      %326 = vmatpush1.bf16.msra.mxu0 0
      %327 = vmatprep.subr.bf16.mxu0 0
      %328 = vmatpush1.bf16.msra.mxu0 0
      %329 = vmatprep.subr.bf16.mxu0 0
      %330 = vmatpush1.bf16.msra.mxu0 0
      %331 = vmatprep.subr.bf16.mxu0 0
      %332 = vmatpush1.bf16.msra.mxu0 0
      %333 = vmatprep.subr.bf16.mxu0 0
      %334 = vmatpush1.bf16.msra.mxu0 0
      %335 = vmatprep.subr.bf16.mxu0 0
      %336 = vmatpush1.bf16.msra.mxu0 0
      %337 = vmatprep.subr.bf16.mxu0 0
      %338 = vmatpush1.bf16.msra.mxu0 0
      %339 = vmatprep.subr.bf16.mxu0 0
      %340 = vmatpush1.bf16.msra.mxu0 0
      %341 = vmatprep.subr.bf16.mxu0 0
      %342 = vmatpush1.bf16.msra.mxu0 0
      %343 = vmatprep.subr.bf16.mxu0 0
      %344 = vmatpush1.bf16.msra.mxu0 0
      %345 = vmatprep.mubr.bf16.mxu0 0
      %346 = vmatmul.mubr.bf16.gmra.mrb[0].mxu0 %v245
      %v347 = vpop.f32.mrb[0].mxu0
      %v348 = vadd.f32 0.0, %v347
      %v349 = vpop.f32.mrb[0].mxu0
      %v350 = vpop.f32.mrb[0].mxu0
      %v351 = vadd.f32 0.0, %v350
      %v352 = vpop.f32.mrb[0].mxu0
      %353 = vmatprep.mubr.bf16.mxu0 0
      %354 = vmatmul.mubr.bf16.gmra.mrb[0].mxu0 %v248
      %v355 = vpop.f32.mrb[0].mxu0
      %v356 = vadd.f32 0.0, %v355
      %v357 = vpop.f32.mrb[0].mxu0
      %v358 = vpop.f32.mrb[0].mxu0
      %v359 = vadd.f32 0.0, %v358
      %v360 = vpop.f32.mrb[0].mxu0
      %361 = vdwg.mxu0
      %v366 = vunpack.c.l.b16 %v202
      %v367 = vunpack.c.l.b16 %v203
      %v368 = vunpack.c.l.b16 %v204
      %v369 = vunpack.c.l.b16 %v205
      %v370 = vpack.c.b16 %v367, %v366
      %v371 = vpack.c.b16 %v369, %v368
      %v373 = vsel %vm243, %v370, 0
      %v376 = vsel %vm243, %v371, 0
      %v379 = vsel %vm250, %v227, 0
      %v382 = vsel %vm250, %v228, 0
      %v385 = vsel %vm250, %v229, 0
      %387 = vmatprep.subr.bf16.mxu0 %v382
      %388 = vmatpush1.bf16.msra.mxu0 %v379
      %389 = vmatprep.subr.bf16.mxu0 0
      %390 = vmatpush1.bf16.msra.mxu0 0
      %391 = vmatprep.subr.bf16.mxu0 0
      %392 = vmatpush1.bf16.msra.mxu0 0
      %393 = vmatprep.subr.bf16.mxu0 0
      %394 = vmatpush1.bf16.msra.mxu0 0
      %395 = vmatprep.subr.bf16.mxu0 0
      %396 = vmatpush1.bf16.msra.mxu0 0
      %397 = vmatprep.subr.bf16.mxu0 0
      %398 = vmatpush1.bf16.msra.mxu0 0
      %399 = vmatprep.subr.bf16.mxu0 0
      %400 = vmatpush1.bf16.msra.mxu0 0
      %401 = vmatprep.subr.bf16.mxu0 0
      %402 = vmatpush1.bf16.msra.mxu0 0
      %403 = vmatprep.subr.bf16.mxu0 0
      %404 = vmatpush1.bf16.msra.mxu0 0
      %405 = vmatprep.subr.bf16.mxu0 0
      %406 = vmatpush1.bf16.msra.mxu0 0
      %407 = vmatprep.subr.bf16.mxu0 0
      %408 = vmatpush1.bf16.msra.mxu0 0
      %409 = vmatprep.subr.bf16.mxu0 0
      %410 = vmatpush1.bf16.msra.mxu0 0
      %411 = vmatprep.subr.bf16.mxu0 0
      %412 = vmatpush1.bf16.msra.mxu0 0
      %413 = vmatprep.subr.bf16.mxu0 0
      %414 = vmatpush1.bf16.msra.mxu0 0
      %415 = vmatprep.subr.bf16.mxu0 0
      %416 = vmatpush1.bf16.msra.mxu0 0
      %417 = vmatprep.subr.bf16.mxu0 0
      %418 = vmatpush1.bf16.msra.mxu0 0
      %419 = vmatprep.mubr.bf16.mxu0 0
      %420 = vmatmul.mubr.bf16.gmra.mrb[0].mxu0 %v373
      %v421 = vpop.f32.mrb[0].mxu0
      %v422 = vadd.f32 %v295, %v421
      %v423 = vpop.f32.mrb[0].mxu0
      %v424 = vadd.f32 %v297, %v423
      %v425 = vpop.f32.mrb[0].mxu0
      %v426 = vadd.f32 %v299, %v425
      %v427 = vpop.f32.mrb[0].mxu0
      %v428 = vadd.f32 %v301, %v427
      %429 = vmatprep.mubr.bf16.mxu0 0
      %430 = vmatmul.mubr.bf16.gmra.mrb[0].mxu0 %v376
      %v431 = vpop.f32.mrb[0].mxu0
      %v432 = vadd.f32 %v305, %v431
      %v433 = vpop.f32.mrb[0].mxu0
      %v434 = vadd.f32 %v307, %v433
      %v435 = vpop.f32.mrb[0].mxu0
      %v436 = vadd.f32 %v309, %v435
      %v437 = vpop.f32.mrb[0].mxu0
      %v438 = vadd.f32 %v311, %v437
      %439 = vdwg.mxu0
      %440 = vmatprep.subr.bf16.mxu0 0
      %441 = vmatpush1.bf16.msra.mxu0 %v385
      %442 = vmatprep.subr.bf16.mxu0 0
      %443 = vmatpush1.bf16.msra.mxu0 0
      %444 = vmatprep.subr.bf16.mxu0 0
      %445 = vmatpush1.bf16.msra.mxu0 0
      %446 = vmatprep.subr.bf16.mxu0 0
      %447 = vmatpush1.bf16.msra.mxu0 0
      %448 = vmatprep.subr.bf16.mxu0 0
      %449 = vmatpush1.bf16.msra.mxu0 0
      %450 = vmatprep.subr.bf16.mxu0 0
      %451 = vmatpush1.bf16.msra.mxu0 0
      %452 = vmatprep.subr.bf16.mxu0 0
      %453 = vmatpush1.bf16.msra.mxu0 0
      %454 = vmatprep.subr.bf16.mxu0 0
      %455 = vmatpush1.bf16.msra.mxu0 0
      %456 = vmatprep.subr.bf16.mxu0 0
      %457 = vmatpush1.bf16.msra.mxu0 0
      %458 = vmatprep.subr.bf16.mxu0 0
      %459 = vmatpush1.bf16.msra.mxu0 0
      %460 = vmatprep.subr.bf16.mxu0 0
      %461 = vmatpush1.bf16.msra.mxu0 0
      %462 = vmatprep.subr.bf16.mxu0 0
      %463 = vmatpush1.bf16.msra.mxu0 0
      %464 = vmatprep.subr.bf16.mxu0 0
      %465 = vmatpush1.bf16.msra.mxu0 0
      %466 = vmatprep.subr.bf16.mxu0 0
      %467 = vmatpush1.bf16.msra.mxu0 0
      %468 = vmatprep.subr.bf16.mxu0 0
      %469 = vmatpush1.bf16.msra.mxu0 0
      %470 = vmatprep.subr.bf16.mxu0 0
      %471 = vmatpush1.bf16.msra.mxu0 0
      %472 = vmatprep.mubr.bf16.mxu0 0
      %473 = vmatmul.mubr.bf16.gmra.mrb[0].mxu0 %v373
      %v474 = vpop.f32.mrb[0].mxu0
      %v475 = vadd.f32 %v348, %v474
      %v476 = vpop.f32.mrb[0].mxu0
      %v477 = vpop.f32.mrb[0].mxu0
      %v478 = vadd.f32 %v351, %v477
      %v479 = vpop.f32.mrb[0].mxu0
      %480 = vmatprep.mubr.bf16.mxu0 0
      %481 = vmatmul.mubr.bf16.gmra.mrb[0].mxu0 %v376
      %v482 = vpop.f32.mrb[0].mxu0
      %v483 = vadd.f32 %v356, %v482
      %v484 = vpop.f32.mrb[0].mxu0
      %v485 = vpop.f32.mrb[0].mxu0
      %v486 = vadd.f32 %v359, %v485
      %v487 = vpop.f32.mrb[0].mxu0
      %488 = vdwg.mxu0
      %s489 = scalar_lea.vmem %s1, 32
      %v490 = vld [vmem:[%s489] sm:$0xf]
      %v491 = vld [vmem:[%s489 + $0x4] sm:$0xf]
      %v492 = vld [vmem:[%s489 + $0x8] sm:$0xf]
      %v493 = vld [vmem:[%s489 + $0xc] sm:$0xf]
      %v498 = vunpack.c.l.b16 %v490
      %v499 = vunpack.c.l.b16 %v491
      %v500 = vunpack.c.l.b16 %v492
      %v501 = vunpack.c.l.b16 %v493
      %v502 = vpack.c.b16 %v499, %v498
      %v503 = vpack.c.b16 %v501, %v500
      %504 = vrot.lane.b32.xlu0 %v227, 126
      %v505 = vpop.permute.xlu0 %504
      %506 = vrot.lane.b32.xlu0 %v228, 126
      %v507 = vpop.permute.xlu0 %506
      %508 = vrot.lane.b32.xlu0 %v229, 126
      %v509 = vpop.permute.xlu0 %508
      %510 = vrot.lane.b32.xlu0 %v230, 126
      %v511 = vpop.permute.xlu0 %510
      %vm512 = vcmask 1031168
      %v513 = vsel %vm512, %v505, %v507
      %v514 = vsel %vm512, %v507, %v509
      %v515 = vsel %vm512, %v509, %v511
      %v517 = vsel %vm243, %v502, 0
      %v520 = vsel %vm243, %v503, 0
      %v523 = vsel %vm250, %v513, 0
      %v526 = vsel %vm250, %v514, 0
      %v529 = vsel %vm250, %v515, 0
      %531 = vmatprep.subr.bf16.mxu0 %v526
      %532 = vmatpush1.bf16.msra.mxu0 %v523
      %533 = vmatprep.subr.bf16.mxu0 0
      %534 = vmatpush1.bf16.msra.mxu0 0
      %535 = vmatprep.subr.bf16.mxu0 0
      %536 = vmatpush1.bf16.msra.mxu0 0
      %537 = vmatprep.subr.bf16.mxu0 0
      %538 = vmatpush1.bf16.msra.mxu0 0
      %539 = vmatprep.subr.bf16.mxu0 0
      %540 = vmatpush1.bf16.msra.mxu0 0
      %541 = vmatprep.subr.bf16.mxu0 0
      %542 = vmatpush1.bf16.msra.mxu0 0
      %543 = vmatprep.subr.bf16.mxu0 0
      %544 = vmatpush1.bf16.msra.mxu0 0
      %545 = vmatprep.subr.bf16.mxu0 0
      %546 = vmatpush1.bf16.msra.mxu0 0
      %547 = vmatprep.subr.bf16.mxu0 0
      %548 = vmatpush1.bf16.msra.mxu0 0
      %549 = vmatprep.subr.bf16.mxu0 0
      %550 = vmatpush1.bf16.msra.mxu0 0
      %551 = vmatprep.subr.bf16.mxu0 0
      %552 = vmatpush1.bf16.msra.mxu0 0
      %553 = vmatprep.subr.bf16.mxu0 0
      %554 = vmatpush1.bf16.msra.mxu0 0
      %555 = vmatprep.subr.bf16.mxu0 0
      %556 = vmatpush1.bf16.msra.mxu0 0
      %557 = vmatprep.subr.bf16.mxu0 0
      %558 = vmatpush1.bf16.msra.mxu0 0
      %559 = vmatprep.subr.bf16.mxu0 0
      %560 = vmatpush1.bf16.msra.mxu0 0
      %561 = vmatprep.subr.bf16.mxu0 0
      %562 = vmatpush1.bf16.msra.mxu0 0
      %563 = vmatprep.mubr.bf16.mxu0 0
      %564 = vmatmul.mubr.bf16.gmra.mrb[0].mxu0 %v517
      %v565 = vpop.f32.mrb[0].mxu0
      %v566 = vadd.f32 0.0, %v565
      %v567 = vpop.f32.mrb[0].mxu0
      %v568 = vadd.f32 0.0, %v567
      %v569 = vpop.f32.mrb[0].mxu0
      %v570 = vadd.f32 0.0, %v569
      %v571 = vpop.f32.mrb[0].mxu0
      %v572 = vadd.f32 0.0, %v571
      %573 = vmatprep.mubr.bf16.mxu0 0
      %574 = vmatmul.mubr.bf16.gmra.mrb[0].mxu0 %v520
      %v575 = vpop.f32.mrb[0].mxu0
      %v576 = vadd.f32 0.0, %v575
      %v577 = vpop.f32.mrb[0].mxu0
      %v578 = vadd.f32 0.0, %v577
      %v579 = vpop.f32.mrb[0].mxu0
      %v580 = vadd.f32 0.0, %v579
      %v581 = vpop.f32.mrb[0].mxu0
      %v582 = vadd.f32 0.0, %v581
      %583 = vdwg.mxu0
      %584 = vmatprep.subr.bf16.mxu0 0
      %585 = vmatpush1.bf16.msra.mxu0 %v529
      %586 = vmatprep.subr.bf16.mxu0 0
      %587 = vmatpush1.bf16.msra.mxu0 0
      %588 = vmatprep.subr.bf16.mxu0 0
      %589 = vmatpush1.bf16.msra.mxu0 0
      %590 = vmatprep.subr.bf16.mxu0 0
      %591 = vmatpush1.bf16.msra.mxu0 0
      %592 = vmatprep.subr.bf16.mxu0 0
      %593 = vmatpush1.bf16.msra.mxu0 0
      %594 = vmatprep.subr.bf16.mxu0 0
      %595 = vmatpush1.bf16.msra.mxu0 0
      %596 = vmatprep.subr.bf16.mxu0 0
      %597 = vmatpush1.bf16.msra.mxu0 0
      %598 = vmatprep.subr.bf16.mxu0 0
      %599 = vmatpush1.bf16.msra.mxu0 0
      %600 = vmatprep.subr.bf16.mxu0 0
      %601 = vmatpush1.bf16.msra.mxu0 0
      %602 = vmatprep.subr.bf16.mxu0 0
      %603 = vmatpush1.bf16.msra.mxu0 0
      %604 = vmatprep.subr.bf16.mxu0 0
      %605 = vmatpush1.bf16.msra.mxu0 0
      %606 = vmatprep.subr.bf16.mxu0 0
      %607 = vmatpush1.bf16.msra.mxu0 0
      %608 = vmatprep.subr.bf16.mxu0 0
      %609 = vmatpush1.bf16.msra.mxu0 0
      %610 = vmatprep.subr.bf16.mxu0 0
      %611 = vmatpush1.bf16.msra.mxu0 0
      %612 = vmatprep.subr.bf16.mxu0 0
      %613 = vmatpush1.bf16.msra.mxu0 0
      %614 = vmatprep.subr.bf16.mxu0 0
      %615 = vmatpush1.bf16.msra.mxu0 0
      %616 = vmatprep.mubr.bf16.mxu0 0
      %617 = vmatmul.mubr.bf16.gmra.mrb[0].mxu0 %v517
      %v618 = vpop.f32.mrb[0].mxu0
      %v619 = vadd.f32 0.0, %v618
      %v620 = vpop.f32.mrb[0].mxu0
      %v621 = vpop.f32.mrb[0].mxu0
      %v622 = vadd.f32 0.0, %v621
      %v623 = vpop.f32.mrb[0].mxu0
      %624 = vmatprep.mubr.bf16.mxu0 0
      %625 = vmatmul.mubr.bf16.gmra.mrb[0].mxu0 %v520
      %v626 = vpop.f32.mrb[0].mxu0
      %v627 = vadd.f32 0.0, %v626
      %v628 = vpop.f32.mrb[0].mxu0
      %v629 = vpop.f32.mrb[0].mxu0
      %v630 = vadd.f32 0.0, %v629
      %v631 = vpop.f32.mrb[0].mxu0
      %632 = vdwg.mxu0
      %v633 = vadd.f32 %v422, %v566
      %v634 = vadd.f32 %v424, %v568
      %v635 = vadd.f32 %v475, %v619
      %v636 = vadd.f32 %v426, %v570
      %v637 = vadd.f32 %v428, %v572
      %v638 = vadd.f32 %v478, %v622
      %v639 = vadd.f32 %v432, %v576
      %v640 = vadd.f32 %v434, %v578
      %v641 = vadd.f32 %v483, %v627
      %v642 = vadd.f32 %v436, %v580
      %v643 = vadd.f32 %v438, %v582
      %v644 = vadd.f32 %v486, %v630
      %s645 = scalar_lea.vmem %s1, 48
      %v646 = vld [vmem:[%s645] sm:$0xf]
      %v647 = vld [vmem:[%s645 + $0x4] sm:$0xf]
      %v648 = vld [vmem:[%s645 + $0x8] sm:$0xf]
      %v649 = vld [vmem:[%s645 + $0xc] sm:$0xf]
      %v654 = vunpack.c.l.b16 %v646
      %v655 = vunpack.c.l.b16 %v647
      %v656 = vunpack.c.l.b16 %v648
      %v657 = vunpack.c.l.b16 %v649
      %v658 = vpack.c.b16 %v655, %v654
      %v659 = vpack.c.b16 %v657, %v656
      %660 = vrot.lane.b32.xlu0 %v227, 110
      %v661 = vpop.permute.xlu0 %660
      %662 = vrot.lane.b32.xlu0 %v228, 110
      %v663 = vpop.permute.xlu0 %662
      %664 = vrot.lane.b32.xlu0 %v229, 110
      %v665 = vpop.permute.xlu0 %664
      %666 = vrot.lane.b32.xlu0 %v230, 110
      %v667 = vpop.permute.xlu0 %666
      %vm668 = vcmask 900096
      %v669 = vsel %vm668, %v661, %v663
      %v670 = vsel %vm668, %v663, %v665
      %v671 = vsel %vm668, %v665, %v667
      %v673 = vsel %vm243, %v658, 0
      %v676 = vsel %vm243, %v659, 0
      %v679 = vsel %vm250, %v669, 0
      %v682 = vsel %vm250, %v670, 0
      %v685 = vsel %vm250, %v671, 0
      %687 = vmatprep.subr.bf16.mxu0 %v682
      %688 = vmatpush1.bf16.msra.mxu0 %v679
      %689 = vmatprep.subr.bf16.mxu0 0
      %690 = vmatpush1.bf16.msra.mxu0 0
      %691 = vmatprep.subr.bf16.mxu0 0
      %692 = vmatpush1.bf16.msra.mxu0 0
      %693 = vmatprep.subr.bf16.mxu0 0
      %694 = vmatpush1.bf16.msra.mxu0 0
      %695 = vmatprep.subr.bf16.mxu0 0
      %696 = vmatpush1.bf16.msra.mxu0 0
      %697 = vmatprep.subr.bf16.mxu0 0
      %698 = vmatpush1.bf16.msra.mxu0 0
      %699 = vmatprep.subr.bf16.mxu0 0
      %700 = vmatpush1.bf16.msra.mxu0 0
      %701 = vmatprep.subr.bf16.mxu0 0
      %702 = vmatpush1.bf16.msra.mxu0 0
      %703 = vmatprep.subr.bf16.mxu0 0
      %704 = vmatpush1.bf16.msra.mxu0 0
      %705 = vmatprep.subr.bf16.mxu0 0
      %706 = vmatpush1.bf16.msra.mxu0 0
      %707 = vmatprep.subr.bf16.mxu0 0
      %708 = vmatpush1.bf16.msra.mxu0 0
      %709 = vmatprep.subr.bf16.mxu0 0
      %710 = vmatpush1.bf16.msra.mxu0 0
      %711 = vmatprep.subr.bf16.mxu0 0
      %712 = vmatpush1.bf16.msra.mxu0 0
      %713 = vmatprep.subr.bf16.mxu0 0
      %714 = vmatpush1.bf16.msra.mxu0 0
      %715 = vmatprep.subr.bf16.mxu0 0
      %716 = vmatpush1.bf16.msra.mxu0 0
      %717 = vmatprep.subr.bf16.mxu0 0
      %718 = vmatpush1.bf16.msra.mxu0 0
      %719 = vmatprep.mubr.bf16.mxu0 0
      %720 = vmatmul.mubr.bf16.gmra.mrb[0].mxu0 %v673
      %v721 = vpop.f32.mrb[0].mxu0
      %v722 = vadd.f32 0.0, %v721
      %v723 = vpop.f32.mrb[0].mxu0
      %v724 = vadd.f32 0.0, %v723
      %v725 = vpop.f32.mrb[0].mxu0
      %v726 = vadd.f32 0.0, %v725
      %v727 = vpop.f32.mrb[0].mxu0
      %v728 = vadd.f32 0.0, %v727
      %729 = vmatprep.mubr.bf16.mxu0 0
      %730 = vmatmul.mubr.bf16.gmra.mrb[0].mxu0 %v676
      %v731 = vpop.f32.mrb[0].mxu0
      %v732 = vadd.f32 0.0, %v731
      %v733 = vpop.f32.mrb[0].mxu0
      %v734 = vadd.f32 0.0, %v733
      %v735 = vpop.f32.mrb[0].mxu0
      %v736 = vadd.f32 0.0, %v735
      %v737 = vpop.f32.mrb[0].mxu0
      %v738 = vadd.f32 0.0, %v737
      %739 = vdwg.mxu0
      %740 = vmatprep.subr.bf16.mxu0 0
      %741 = vmatpush1.bf16.msra.mxu0 %v685
      %742 = vmatprep.subr.bf16.mxu0 0
      %743 = vmatpush1.bf16.msra.mxu0 0
      %744 = vmatprep.subr.bf16.mxu0 0
      %745 = vmatpush1.bf16.msra.mxu0 0
      %746 = vmatprep.subr.bf16.mxu0 0
      %747 = vmatpush1.bf16.msra.mxu0 0
      %748 = vmatprep.subr.bf16.mxu0 0
      %749 = vmatpush1.bf16.msra.mxu0 0
      %750 = vmatprep.subr.bf16.mxu0 0
      %751 = vmatpush1.bf16.msra.mxu0 0
      %752 = vmatprep.subr.bf16.mxu0 0
      %753 = vmatpush1.bf16.msra.mxu0 0
      %754 = vmatprep.subr.bf16.mxu0 0
      %755 = vmatpush1.bf16.msra.mxu0 0
      %756 = vmatprep.subr.bf16.mxu0 0
      %757 = vmatpush1.bf16.msra.mxu0 0
      %758 = vmatprep.subr.bf16.mxu0 0
      %759 = vmatpush1.bf16.msra.mxu0 0
      %760 = vmatprep.subr.bf16.mxu0 0
      %761 = vmatpush1.bf16.msra.mxu0 0
      %762 = vmatprep.subr.bf16.mxu0 0
      %763 = vmatpush1.bf16.msra.mxu0 0
      %764 = vmatprep.subr.bf16.mxu0 0
      %765 = vmatpush1.bf16.msra.mxu0 0
      %766 = vmatprep.subr.bf16.mxu0 0
      %767 = vmatpush1.bf16.msra.mxu0 0
      %768 = vmatprep.subr.bf16.mxu0 0
      %769 = vmatpush1.bf16.msra.mxu0 0
      %770 = vmatprep.subr.bf16.mxu0 0
      %771 = vmatpush1.bf16.msra.mxu0 0
      %772 = vmatprep.mubr.bf16.mxu0 0
      %773 = vmatmul.mubr.bf16.gmra.mrb[0].mxu0 %v673
      %v774 = vpop.f32.mrb[0].mxu0
      %v775 = vadd.f32 0.0, %v774
      %v776 = vpop.f32.mrb[0].mxu0
      %v777 = vpop.f32.mrb[0].mxu0
      %v778 = vadd.f32 0.0, %v777
      %v779 = vpop.f32.mrb[0].mxu0
      %780 = vmatprep.mubr.bf16.mxu0 0
      %781 = vmatmul.mubr.bf16.gmra.mrb[0].mxu0 %v676
      %v782 = vpop.f32.mrb[0].mxu0
      %v783 = vadd.f32 0.0, %v782
      %v784 = vpop.f32.mrb[0].mxu0
      %v785 = vpop.f32.mrb[0].mxu0
      %v786 = vadd.f32 0.0, %v785
      %v787 = vpop.f32.mrb[0].mxu0
      %788 = vdwg.mxu0
      %v789 = vadd.f32 %v633, %v722
      %v790 = vadd.f32 %v634, %v724
      %v791 = vadd.f32 %v635, %v775
      %v792 = vadd.f32 %v636, %v726
      %v793 = vadd.f32 %v637, %v728
      %v794 = vadd.f32 %v638, %v778
      %v795 = vadd.f32 %v639, %v732
      %v796 = vadd.f32 %v640, %v734
      %v797 = vadd.f32 %v641, %v783
      %v798 = vadd.f32 %v642, %v736
      %v799 = vadd.f32 %v643, %v738
      %v800 = vadd.f32 %v644, %v786
      %s801 = scalar_lea.vmem %s1, 64
      %v802 = vld [vmem:[%s801] sm:$0xf]
      %v803 = vld [vmem:[%s801 + $0x4] sm:$0xf]
      %v804 = vld [vmem:[%s801 + $0x8] sm:$0xf]
      %v805 = vld [vmem:[%s801 + $0xc] sm:$0xf]
      %v810 = vunpack.c.l.b16 %v802
      %v811 = vunpack.c.l.b16 %v803
      %v812 = vunpack.c.l.b16 %v804
      %v813 = vunpack.c.l.b16 %v805
      %v814 = vpack.c.b16 %v811, %v810
      %v815 = vpack.c.b16 %v813, %v812
      %816 = vrot.lane.b32.xlu0 %v227, 109
      %v817 = vpop.permute.xlu0 %816
      %818 = vrot.lane.b32.xlu0 %v228, 109
      %v819 = vpop.permute.xlu0 %818
      %820 = vrot.lane.b32.xlu0 %v229, 109
      %v821 = vpop.permute.xlu0 %820
      %822 = vrot.lane.b32.xlu0 %v230, 109
      %v823 = vpop.permute.xlu0 %822
      %vm824 = vcmask 891904
      %v825 = vsel %vm824, %v817, %v819
      %v826 = vsel %vm824, %v819, %v821
      %v827 = vsel %vm824, %v821, %v823
      %v829 = vsel %vm243, %v814, 0
      %v832 = vsel %vm243, %v815, 0
      %v835 = vsel %vm250, %v825, 0
      %v838 = vsel %vm250, %v826, 0
      %v841 = vsel %vm250, %v827, 0
      %843 = vmatprep.subr.bf16.mxu0 %v838
      %844 = vmatpush1.bf16.msra.mxu0 %v835
      %845 = vmatprep.subr.bf16.mxu0 0
      %846 = vmatpush1.bf16.msra.mxu0 0
      %847 = vmatprep.subr.bf16.mxu0 0
      %848 = vmatpush1.bf16.msra.mxu0 0
      %849 = vmatprep.subr.bf16.mxu0 0
      %850 = vmatpush1.bf16.msra.mxu0 0
      %851 = vmatprep.subr.bf16.mxu0 0
      %852 = vmatpush1.bf16.msra.mxu0 0
      %853 = vmatprep.subr.bf16.mxu0 0
      %854 = vmatpush1.bf16.msra.mxu0 0
      %855 = vmatprep.subr.bf16.mxu0 0
      %856 = vmatpush1.bf16.msra.mxu0 0
      %857 = vmatprep.subr.bf16.mxu0 0
      %858 = vmatpush1.bf16.msra.mxu0 0
      %859 = vmatprep.subr.bf16.mxu0 0
      %860 = vmatpush1.bf16.msra.mxu0 0
      %861 = vmatprep.subr.bf16.mxu0 0
      %862 = vmatpush1.bf16.msra.mxu0 0
      %863 = vmatprep.subr.bf16.mxu0 0
      %864 = vmatpush1.bf16.msra.mxu0 0
      %865 = vmatprep.subr.bf16.mxu0 0
      %866 = vmatpush1.bf16.msra.mxu0 0
      %867 = vmatprep.subr.bf16.mxu0 0
      %868 = vmatpush1.bf16.msra.mxu0 0
      %869 = vmatprep.subr.bf16.mxu0 0
      %870 = vmatpush1.bf16.msra.mxu0 0
      %871 = vmatprep.subr.bf16.mxu0 0
      %872 = vmatpush1.bf16.msra.mxu0 0
      %873 = vmatprep.subr.bf16.mxu0 0
      %874 = vmatpush1.bf16.msra.mxu0 0
      %875 = vmatprep.mubr.bf16.mxu0 0
      %876 = vmatmul.mubr.bf16.gmra.mrb[0].mxu0 %v829
      %v877 = vpop.f32.mrb[0].mxu0
      %v878 = vadd.f32 0.0, %v877
      %v879 = vpop.f32.mrb[0].mxu0
      %v880 = vadd.f32 0.0, %v879
      %v881 = vpop.f32.mrb[0].mxu0
      %v882 = vadd.f32 0.0, %v881
      %v883 = vpop.f32.mrb[0].mxu0
      %v884 = vadd.f32 0.0, %v883
      %885 = vmatprep.mubr.bf16.mxu0 0
      %886 = vmatmul.mubr.bf16.gmra.mrb[0].mxu0 %v832
      %v887 = vpop.f32.mrb[0].mxu0
      %v888 = vadd.f32 0.0, %v887
      %v889 = vpop.f32.mrb[0].mxu0
      %v890 = vadd.f32 0.0, %v889
      %v891 = vpop.f32.mrb[0].mxu0
      %v892 = vadd.f32 0.0, %v891
      %v893 = vpop.f32.mrb[0].mxu0
      %v894 = vadd.f32 0.0, %v893
      %895 = vdwg.mxu0
      %896 = vmatprep.subr.bf16.mxu0 0
      %897 = vmatpush1.bf16.msra.mxu0 %v841
      %898 = vmatprep.subr.bf16.mxu0 0
      %899 = vmatpush1.bf16.msra.mxu0 0
      %900 = vmatprep.subr.bf16.mxu0 0
      %901 = vmatpush1.bf16.msra.mxu0 0
      %902 = vmatprep.subr.bf16.mxu0 0
      %903 = vmatpush1.bf16.msra.mxu0 0
      %904 = vmatprep.subr.bf16.mxu0 0
      %905 = vmatpush1.bf16.msra.mxu0 0
      %906 = vmatprep.subr.bf16.mxu0 0
      %907 = vmatpush1.bf16.msra.mxu0 0
      %908 = vmatprep.subr.bf16.mxu0 0
      %909 = vmatpush1.bf16.msra.mxu0 0
      %910 = vmatprep.subr.bf16.mxu0 0
      %911 = vmatpush1.bf16.msra.mxu0 0
      %912 = vmatprep.subr.bf16.mxu0 0
      %913 = vmatpush1.bf16.msra.mxu0 0
      %914 = vmatprep.subr.bf16.mxu0 0
      %915 = vmatpush1.bf16.msra.mxu0 0
      %916 = vmatprep.subr.bf16.mxu0 0
      %917 = vmatpush1.bf16.msra.mxu0 0
      %918 = vmatprep.subr.bf16.mxu0 0
      %919 = vmatpush1.bf16.msra.mxu0 0
      %920 = vmatprep.subr.bf16.mxu0 0
      %921 = vmatpush1.bf16.msra.mxu0 0
      %922 = vmatprep.subr.bf16.mxu0 0
      %923 = vmatpush1.bf16.msra.mxu0 0
      %924 = vmatprep.subr.bf16.mxu0 0
      %925 = vmatpush1.bf16.msra.mxu0 0
      %926 = vmatprep.subr.bf16.mxu0 0
      %927 = vmatpush1.bf16.msra.mxu0 0
      %928 = vmatprep.mubr.bf16.mxu0 0
      %929 = vmatmul.mubr.bf16.gmra.mrb[0].mxu0 %v829
      %v930 = vpop.f32.mrb[0].mxu0
      %v931 = vadd.f32 0.0, %v930
      %v932 = vpop.f32.mrb[0].mxu0
      %v933 = vpop.f32.mrb[0].mxu0
      %v934 = vadd.f32 0.0, %v933
      %v935 = vpop.f32.mrb[0].mxu0
      %936 = vmatprep.mubr.bf16.mxu0 0
      %937 = vmatmul.mubr.bf16.gmra.mrb[0].mxu0 %v832
      %v938 = vpop.f32.mrb[0].mxu0
      %v939 = vadd.f32 0.0, %v938
      %v940 = vpop.f32.mrb[0].mxu0
      %v941 = vpop.f32.mrb[0].mxu0
      %v942 = vadd.f32 0.0, %v941
      %v943 = vpop.f32.mrb[0].mxu0
      %944 = vdwg.mxu0
      %v945 = vadd.f32 %v789, %v878
      %v946 = vadd.f32 %v790, %v880
      %v947 = vadd.f32 %v791, %v931
      %v948 = vadd.f32 %v792, %v882
      %v949 = vadd.f32 %v793, %v884
      %v950 = vadd.f32 %v794, %v934
      %v951 = vadd.f32 %v795, %v888
      %v952 = vadd.f32 %v796, %v890
      %v953 = vadd.f32 %v797, %v939
      %v954 = vadd.f32 %v798, %v892
      %v955 = vadd.f32 %v799, %v894
      %v956 = vadd.f32 %v800, %v942
      %s957 = scalar_lea.vmem %s1, 80
      %v958 = vld [vmem:[%s957] sm:$0xf]
      %v959 = vld [vmem:[%s957 + $0x4] sm:$0xf]
      %v960 = vld [vmem:[%s957 + $0x8] sm:$0xf]
      %v961 = vld [vmem:[%s957 + $0xc] sm:$0xf]
      %v966 = vunpack.c.l.b16 %v958
      %v967 = vunpack.c.l.b16 %v959
      %v968 = vunpack.c.l.b16 %v960
      %v969 = vunpack.c.l.b16 %v961
      %v970 = vpack.c.b16 %v967, %v966
      %v971 = vpack.c.b16 %v969, %v968
      %972 = vrot.lane.b32.xlu0 %v227, 108
      %v973 = vpop.permute.xlu0 %972
      %974 = vrot.lane.b32.xlu0 %v228, 108
      %v975 = vpop.permute.xlu0 %974
      %976 = vrot.lane.b32.xlu0 %v229, 108
      %v977 = vpop.permute.xlu0 %976
      %978 = vrot.lane.b32.xlu0 %v230, 108
      %v979 = vpop.permute.xlu0 %978
      %vm980 = vcmask 883712
      %v981 = vsel %vm980, %v973, %v975
      %v982 = vsel %vm980, %v975, %v977
      %v983 = vsel %vm980, %v977, %v979
      %v985 = vsel %vm243, %v970, 0
      %v988 = vsel %vm243, %v971, 0
      %v991 = vsel %vm250, %v981, 0
      %v994 = vsel %vm250, %v982, 0
      %v997 = vsel %vm250, %v983, 0
      %999 = vmatprep.subr.bf16.mxu0 %v994
      %1000 = vmatpush1.bf16.msra.mxu0 %v991
      %1001 = vmatprep.subr.bf16.mxu0 0
      %1002 = vmatpush1.bf16.msra.mxu0 0
      %1003 = vmatprep.subr.bf16.mxu0 0
      %1004 = vmatpush1.bf16.msra.mxu0 0
      %1005 = vmatprep.subr.bf16.mxu0 0
      %1006 = vmatpush1.bf16.msra.mxu0 0
      %1007 = vmatprep.subr.bf16.mxu0 0
      %1008 = vmatpush1.bf16.msra.mxu0 0
      %1009 = vmatprep.subr.bf16.mxu0 0
      %1010 = vmatpush1.bf16.msra.mxu0 0
      %1011 = vmatprep.subr.bf16.mxu0 0
      %1012 = vmatpush1.bf16.msra.mxu0 0
      %1013 = vmatprep.subr.bf16.mxu0 0
      %1014 = vmatpush1.bf16.msra.mxu0 0
      %1015 = vmatprep.subr.bf16.mxu0 0
      %1016 = vmatpush1.bf16.msra.mxu0 0
      %1017 = vmatprep.subr.bf16.mxu0 0
      %1018 = vmatpush1.bf16.msra.mxu0 0
      %1019 = vmatprep.subr.bf16.mxu0 0
      %1020 = vmatpush1.bf16.msra.mxu0 0
      %1021 = vmatprep.subr.bf16.mxu0 0
      %1022 = vmatpush1.bf16.msra.mxu0 0
      %1023 = vmatprep.subr.bf16.mxu0 0
      %1024 = vmatpush1.bf16.msra.mxu0 0
      %1025 = vmatprep.subr.bf16.mxu0 0
      %1026 = vmatpush1.bf16.msra.mxu0 0
      %1027 = vmatprep.subr.bf16.mxu0 0
      %1028 = vmatpush1.bf16.msra.mxu0 0
      %1029 = vmatprep.subr.bf16.mxu0 0
      %1030 = vmatpush1.bf16.msra.mxu0 0
      %1031 = vmatprep.mubr.bf16.mxu0 0
      %1032 = vmatmul.mubr.bf16.gmra.mrb[0].mxu0 %v985
      %v1033 = vpop.f32.mrb[0].mxu0
      %v1034 = vadd.f32 0.0, %v1033
      %v1035 = vpop.f32.mrb[0].mxu0
      %v1036 = vadd.f32 0.0, %v1035
      %v1037 = vpop.f32.mrb[0].mxu0
      %v1038 = vadd.f32 0.0, %v1037
      %v1039 = vpop.f32.mrb[0].mxu0
      %v1040 = vadd.f32 0.0, %v1039
      %1041 = vmatprep.mubr.bf16.mxu0 0
      %1042 = vmatmul.mubr.bf16.gmra.mrb[0].mxu0 %v988
      %v1043 = vpop.f32.mrb[0].mxu0
      %v1044 = vadd.f32 0.0, %v1043
      %v1045 = vpop.f32.mrb[0].mxu0
      %v1046 = vadd.f32 0.0, %v1045
      %v1047 = vpop.f32.mrb[0].mxu0
      %v1048 = vadd.f32 0.0, %v1047
      %v1049 = vpop.f32.mrb[0].mxu0
      %v1050 = vadd.f32 0.0, %v1049
      %1051 = vdwg.mxu0
      %1052 = vmatprep.subr.bf16.mxu0 0
      %1053 = vmatpush1.bf16.msra.mxu0 %v997
      %1054 = vmatprep.subr.bf16.mxu0 0
      %1055 = vmatpush1.bf16.msra.mxu0 0
      %1056 = vmatprep.subr.bf16.mxu0 0
      %1057 = vmatpush1.bf16.msra.mxu0 0
      %1058 = vmatprep.subr.bf16.mxu0 0
      %1059 = vmatpush1.bf16.msra.mxu0 0
      %1060 = vmatprep.subr.bf16.mxu0 0
      %1061 = vmatpush1.bf16.msra.mxu0 0
      %1062 = vmatprep.subr.bf16.mxu0 0
      %1063 = vmatpush1.bf16.msra.mxu0 0
      %1064 = vmatprep.subr.bf16.mxu0 0
      %1065 = vmatpush1.bf16.msra.mxu0 0
      %1066 = vmatprep.subr.bf16.mxu0 0
      %1067 = vmatpush1.bf16.msra.mxu0 0
      %1068 = vmatprep.subr.bf16.mxu0 0
      %1069 = vmatpush1.bf16.msra.mxu0 0
      %1070 = vmatprep.subr.bf16.mxu0 0
      %1071 = vmatpush1.bf16.msra.mxu0 0
      %1072 = vmatprep.subr.bf16.mxu0 0
      %1073 = vmatpush1.bf16.msra.mxu0 0
      %1074 = vmatprep.subr.bf16.mxu0 0
      %1075 = vmatpush1.bf16.msra.mxu0 0
      %1076 = vmatprep.subr.bf16.mxu0 0
      %1077 = vmatpush1.bf16.msra.mxu0 0
      %1078 = vmatprep.subr.bf16.mxu0 0
      %1079 = vmatpush1.bf16.msra.mxu0 0
      %1080 = vmatprep.subr.bf16.mxu0 0
      %1081 = vmatpush1.bf16.msra.mxu0 0
      %1082 = vmatprep.subr.bf16.mxu0 0
      %1083 = vmatpush1.bf16.msra.mxu0 0
      %1084 = vmatprep.mubr.bf16.mxu0 0
      %1085 = vmatmul.mubr.bf16.gmra.mrb[0].mxu0 %v985
      %v1086 = vpop.f32.mrb[0].mxu0
      %v1087 = vadd.f32 0.0, %v1086
      %v1088 = vpop.f32.mrb[0].mxu0
      %v1089 = vpop.f32.mrb[0].mxu0
      %v1090 = vadd.f32 0.0, %v1089
      %v1091 = vpop.f32.mrb[0].mxu0
      %1092 = vmatprep.mubr.bf16.mxu0 0
      %1093 = vmatmul.mubr.bf16.gmra.mrb[0].mxu0 %v988
      %v1094 = vpop.f32.mrb[0].mxu0
      %v1095 = vadd.f32 0.0, %v1094
      %v1096 = vpop.f32.mrb[0].mxu0
      %v1097 = vpop.f32.mrb[0].mxu0
      %v1098 = vadd.f32 0.0, %v1097
      %v1099 = vpop.f32.mrb[0].mxu0
      %1100 = vdwg.mxu0
      %v1101 = vadd.f32 %v945, %v1034
      %v1102 = vadd.f32 %v946, %v1036
      %v1103 = vadd.f32 %v947, %v1087
      %v1104 = vadd.f32 %v948, %v1038
      %v1105 = vadd.f32 %v949, %v1040
      %v1106 = vadd.f32 %v950, %v1090
      %v1107 = vadd.f32 %v951, %v1044
      %v1108 = vadd.f32 %v952, %v1046
      %v1109 = vadd.f32 %v953, %v1095
      %v1110 = vadd.f32 %v954, %v1048
      %v1111 = vadd.f32 %v955, %v1050
      %v1112 = vadd.f32 %v956, %v1098
      %s1113 = scalar_lea.vmem %s1, 96
      %v1114 = vld [vmem:[%s1113] sm:$0xf]
      %v1115 = vld [vmem:[%s1113 + $0x4] sm:$0xf]
      %v1116 = vld [vmem:[%s1113 + $0x8] sm:$0xf]
      %v1117 = vld [vmem:[%s1113 + $0xc] sm:$0xf]
      %v1122 = vunpack.c.l.b16 %v1114
      %v1123 = vunpack.c.l.b16 %v1115
      %v1124 = vunpack.c.l.b16 %v1116
      %v1125 = vunpack.c.l.b16 %v1117
      %v1126 = vpack.c.b16 %v1123, %v1122
      %v1127 = vpack.c.b16 %v1125, %v1124
      %1128 = vrot.lane.b32.xlu0 %v227, 92
      %v1129 = vpop.permute.xlu0 %1128
      %1130 = vrot.lane.b32.xlu0 %v228, 92
      %v1131 = vpop.permute.xlu0 %1130
      %1132 = vrot.lane.b32.xlu0 %v229, 92
      %v1133 = vpop.permute.xlu0 %1132
      %1134 = vrot.lane.b32.xlu0 %v230, 92
      %v1135 = vpop.permute.xlu0 %1134
      %vm1136 = vcmask 752640
      %v1137 = vsel %vm1136, %v1129, %v1131
      %v1138 = vsel %vm1136, %v1131, %v1133
      %v1139 = vsel %vm1136, %v1133, %v1135
      %v1141 = vsel %vm243, %v1126, 0
      %v1144 = vsel %vm243, %v1127, 0
      %v1147 = vsel %vm250, %v1137, 0
      %v1150 = vsel %vm250, %v1138, 0
      %v1153 = vsel %vm250, %v1139, 0
      %1155 = vmatprep.subr.bf16.mxu0 %v1150
      %1156 = vmatpush1.bf16.msra.mxu0 %v1147
      %1157 = vmatprep.subr.bf16.mxu0 0
      %1158 = vmatpush1.bf16.msra.mxu0 0
      %1159 = vmatprep.subr.bf16.mxu0 0
      %1160 = vmatpush1.bf16.msra.mxu0 0
      %1161 = vmatprep.subr.bf16.mxu0 0
      %1162 = vmatpush1.bf16.msra.mxu0 0
      %1163 = vmatprep.subr.bf16.mxu0 0
      %1164 = vmatpush1.bf16.msra.mxu0 0
      %1165 = vmatprep.subr.bf16.mxu0 0
      %1166 = vmatpush1.bf16.msra.mxu0 0
      %1167 = vmatprep.subr.bf16.mxu0 0
      %1168 = vmatpush1.bf16.msra.mxu0 0
      %1169 = vmatprep.subr.bf16.mxu0 0
      %1170 = vmatpush1.bf16.msra.mxu0 0
      %1171 = vmatprep.subr.bf16.mxu0 0
      %1172 = vmatpush1.bf16.msra.mxu0 0
      %1173 = vmatprep.subr.bf16.mxu0 0
      %1174 = vmatpush1.bf16.msra.mxu0 0
      %1175 = vmatprep.subr.bf16.mxu0 0
      %1176 = vmatpush1.bf16.msra.mxu0 0
      %1177 = vmatprep.subr.bf16.mxu0 0
      %1178 = vmatpush1.bf16.msra.mxu0 0
      %1179 = vmatprep.subr.bf16.mxu0 0
      %1180 = vmatpush1.bf16.msra.mxu0 0
      %1181 = vmatprep.subr.bf16.mxu0 0
      %1182 = vmatpush1.bf16.msra.mxu0 0
      %1183 = vmatprep.subr.bf16.mxu0 0
      %1184 = vmatpush1.bf16.msra.mxu0 0
      %1185 = vmatprep.subr.bf16.mxu0 0
      %1186 = vmatpush1.bf16.msra.mxu0 0
      %1187 = vmatprep.mubr.bf16.mxu0 0
      %1188 = vmatmul.mubr.bf16.gmra.mrb[0].mxu0 %v1141
      %v1189 = vpop.f32.mrb[0].mxu0
      %v1190 = vadd.f32 0.0, %v1189
      %v1191 = vpop.f32.mrb[0].mxu0
      %v1192 = vadd.f32 0.0, %v1191
      %v1193 = vpop.f32.mrb[0].mxu0
      %v1194 = vadd.f32 0.0, %v1193
      %v1195 = vpop.f32.mrb[0].mxu0
      %v1196 = vadd.f32 0.0, %v1195
      %1197 = vmatprep.mubr.bf16.mxu0 0
      %1198 = vmatmul.mubr.bf16.gmra.mrb[0].mxu0 %v1144
      %v1199 = vpop.f32.mrb[0].mxu0
      %v1200 = vadd.f32 0.0, %v1199
      %v1201 = vpop.f32.mrb[0].mxu0
      %v1202 = vadd.f32 0.0, %v1201
      %v1203 = vpop.f32.mrb[0].mxu0
      %v1204 = vadd.f32 0.0, %v1203
      %v1205 = vpop.f32.mrb[0].mxu0
      %v1206 = vadd.f32 0.0, %v1205
      %1207 = vdwg.mxu0
      %1208 = vmatprep.subr.bf16.mxu0 0
      %1209 = vmatpush1.bf16.msra.mxu0 %v1153
      %1210 = vmatprep.subr.bf16.mxu0 0
      %1211 = vmatpush1.bf16.msra.mxu0 0
      %1212 = vmatprep.subr.bf16.mxu0 0
      %1213 = vmatpush1.bf16.msra.mxu0 0
      %1214 = vmatprep.subr.bf16.mxu0 0
      %1215 = vmatpush1.bf16.msra.mxu0 0
      %1216 = vmatprep.subr.bf16.mxu0 0
      %1217 = vmatpush1.bf16.msra.mxu0 0
      %1218 = vmatprep.subr.bf16.mxu0 0
      %1219 = vmatpush1.bf16.msra.mxu0 0
      %1220 = vmatprep.subr.bf16.mxu0 0
      %1221 = vmatpush1.bf16.msra.mxu0 0
      %1222 = vmatprep.subr.bf16.mxu0 0
      %1223 = vmatpush1.bf16.msra.mxu0 0
      %1224 = vmatprep.subr.bf16.mxu0 0
      %1225 = vmatpush1.bf16.msra.mxu0 0
      %1226 = vmatprep.subr.bf16.mxu0 0
      %1227 = vmatpush1.bf16.msra.mxu0 0
      %1228 = vmatprep.subr.bf16.mxu0 0
      %1229 = vmatpush1.bf16.msra.mxu0 0
      %1230 = vmatprep.subr.bf16.mxu0 0
      %1231 = vmatpush1.bf16.msra.mxu0 0
      %1232 = vmatprep.subr.bf16.mxu0 0
      %1233 = vmatpush1.bf16.msra.mxu0 0
      %1234 = vmatprep.subr.bf16.mxu0 0
      %1235 = vmatpush1.bf16.msra.mxu0 0
      %1236 = vmatprep.subr.bf16.mxu0 0
      %1237 = vmatpush1.bf16.msra.mxu0 0
      %1238 = vmatprep.subr.bf16.mxu0 0
      %1239 = vmatpush1.bf16.msra.mxu0 0
      %1240 = vmatprep.mubr.bf16.mxu0 0
      %1241 = vmatmul.mubr.bf16.gmra.mrb[0].mxu0 %v1141
      %v1242 = vpop.f32.mrb[0].mxu0
      %v1243 = vadd.f32 0.0, %v1242
      %v1244 = vpop.f32.mrb[0].mxu0
      %v1245 = vpop.f32.mrb[0].mxu0
      %v1246 = vadd.f32 0.0, %v1245
      %v1247 = vpop.f32.mrb[0].mxu0
      %1248 = vmatprep.mubr.bf16.mxu0 0
      %1249 = vmatmul.mubr.bf16.gmra.mrb[0].mxu0 %v1144
      %v1250 = vpop.f32.mrb[0].mxu0
      %v1251 = vadd.f32 0.0, %v1250
      %v1252 = vpop.f32.mrb[0].mxu0
      %v1253 = vpop.f32.mrb[0].mxu0
      %v1254 = vadd.f32 0.0, %v1253
      %v1255 = vpop.f32.mrb[0].mxu0
      %1256 = vdwg.mxu0
      %v1257 = vadd.f32 %v1101, %v1190
      %v1258 = vadd.f32 %v1102, %v1192
      %v1259 = vadd.f32 %v1103, %v1243
      %v1260 = vadd.f32 %v1104, %v1194
      %v1261 = vadd.f32 %v1105, %v1196
      %v1262 = vadd.f32 %v1106, %v1246
      %v1263 = vadd.f32 %v1107, %v1200
      %v1264 = vadd.f32 %v1108, %v1202
      %v1265 = vadd.f32 %v1109, %v1251
      %v1266 = vadd.f32 %v1110, %v1204
      %v1267 = vadd.f32 %v1111, %v1206
      %v1268 = vadd.f32 %v1112, %v1254
      %s1269 = scalar_lea.vmem %s1, 112
      %v1270 = vld [vmem:[%s1269] sm:$0xf]
      %v1271 = vld [vmem:[%s1269 + $0x4] sm:$0xf]
      %v1272 = vld [vmem:[%s1269 + $0x8] sm:$0xf]
      %v1273 = vld [vmem:[%s1269 + $0xc] sm:$0xf]
      %v1278 = vunpack.c.l.b16 %v1270
      %v1279 = vunpack.c.l.b16 %v1271
      %v1280 = vunpack.c.l.b16 %v1272
      %v1281 = vunpack.c.l.b16 %v1273
      %v1282 = vpack.c.b16 %v1279, %v1278
      %v1283 = vpack.c.b16 %v1281, %v1280
      %1284 = vrot.lane.b32.xlu0 %v227, 91
      %v1285 = vpop.permute.xlu0 %1284
      %1286 = vrot.lane.b32.xlu0 %v228, 91
      %v1287 = vpop.permute.xlu0 %1286
      %1288 = vrot.lane.b32.xlu0 %v229, 91
      %v1289 = vpop.permute.xlu0 %1288
      %1290 = vrot.lane.b32.xlu0 %v230, 91
      %v1291 = vpop.permute.xlu0 %1290
      %vm1292 = vcmask 744448
      %v1293 = vsel %vm1292, %v1285, %v1287
      %v1294 = vsel %vm1292, %v1287, %v1289
      %v1295 = vsel %vm1292, %v1289, %v1291
      %v1297 = vsel %vm243, %v1282, 0
      %v1300 = vsel %vm243, %v1283, 0
      %v1303 = vsel %vm250, %v1293, 0
      %v1306 = vsel %vm250, %v1294, 0
      %v1309 = vsel %vm250, %v1295, 0
      %1311 = vmatprep.subr.bf16.mxu0 %v1306
      %1312 = vmatpush1.bf16.msra.mxu0 %v1303
      %1313 = vmatprep.subr.bf16.mxu0 0
      %1314 = vmatpush1.bf16.msra.mxu0 0
      %1315 = vmatprep.subr.bf16.mxu0 0
      %1316 = vmatpush1.bf16.msra.mxu0 0
      %1317 = vmatprep.subr.bf16.mxu0 0
      %1318 = vmatpush1.bf16.msra.mxu0 0
      %1319 = vmatprep.subr.bf16.mxu0 0
      %1320 = vmatpush1.bf16.msra.mxu0 0
      %1321 = vmatprep.subr.bf16.mxu0 0
      %1322 = vmatpush1.bf16.msra.mxu0 0
      %1323 = vmatprep.subr.bf16.mxu0 0
      %1324 = vmatpush1.bf16.msra.mxu0 0
      %1325 = vmatprep.subr.bf16.mxu0 0
      %1326 = vmatpush1.bf16.msra.mxu0 0
      %1327 = vmatprep.subr.bf16.mxu0 0
      %1328 = vmatpush1.bf16.msra.mxu0 0
      %1329 = vmatprep.subr.bf16.mxu0 0
      %1330 = vmatpush1.bf16.msra.mxu0 0
      %1331 = vmatprep.subr.bf16.mxu0 0
      %1332 = vmatpush1.bf16.msra.mxu0 0
      %1333 = vmatprep.subr.bf16.mxu0 0
      %1334 = vmatpush1.bf16.msra.mxu0 0
      %1335 = vmatprep.subr.bf16.mxu0 0
      %1336 = vmatpush1.bf16.msra.mxu0 0
      %1337 = vmatprep.subr.bf16.mxu0 0
      %1338 = vmatpush1.bf16.msra.mxu0 0
      %1339 = vmatprep.subr.bf16.mxu0 0
      %1340 = vmatpush1.bf16.msra.mxu0 0
      %1341 = vmatprep.subr.bf16.mxu0 0
      %1342 = vmatpush1.bf16.msra.mxu0 0
      %1343 = vmatprep.mubr.bf16.mxu0 0
      %1344 = vmatmul.mubr.bf16.gmra.mrb[0].mxu0 %v1297
      %v1345 = vpop.f32.mrb[0].mxu0
      %v1346 = vadd.f32 0.0, %v1345
      %v1347 = vpop.f32.mrb[0].mxu0
      %v1348 = vadd.f32 0.0, %v1347
      %v1349 = vpop.f32.mrb[0].mxu0
      %v1350 = vadd.f32 0.0, %v1349
      %v1351 = vpop.f32.mrb[0].mxu0
      %v1352 = vadd.f32 0.0, %v1351
      %1353 = vmatprep.mubr.bf16.mxu0 0
      %1354 = vmatmul.mubr.bf16.gmra.mrb[0].mxu0 %v1300
      %v1355 = vpop.f32.mrb[0].mxu0
      %v1356 = vadd.f32 0.0, %v1355
      %v1357 = vpop.f32.mrb[0].mxu0
      %v1358 = vadd.f32 0.0, %v1357
      %v1359 = vpop.f32.mrb[0].mxu0
      %v1360 = vadd.f32 0.0, %v1359
      %v1361 = vpop.f32.mrb[0].mxu0
      %v1362 = vadd.f32 0.0, %v1361
      %1363 = vdwg.mxu0
      %1364 = vmatprep.subr.bf16.mxu0 0
      %1365 = vmatpush1.bf16.msra.mxu0 %v1309
      %1366 = vmatprep.subr.bf16.mxu0 0
      %1367 = vmatpush1.bf16.msra.mxu0 0
      %1368 = vmatprep.subr.bf16.mxu0 0
      %1369 = vmatpush1.bf16.msra.mxu0 0
      %1370 = vmatprep.subr.bf16.mxu0 0
      %1371 = vmatpush1.bf16.msra.mxu0 0
      %1372 = vmatprep.subr.bf16.mxu0 0
      %1373 = vmatpush1.bf16.msra.mxu0 0
      %1374 = vmatprep.subr.bf16.mxu0 0
      %1375 = vmatpush1.bf16.msra.mxu0 0
      %1376 = vmatprep.subr.bf16.mxu0 0
      %1377 = vmatpush1.bf16.msra.mxu0 0
      %1378 = vmatprep.subr.bf16.mxu0 0
      %1379 = vmatpush1.bf16.msra.mxu0 0
      %1380 = vmatprep.subr.bf16.mxu0 0
      %1381 = vmatpush1.bf16.msra.mxu0 0
      %1382 = vmatprep.subr.bf16.mxu0 0
      %1383 = vmatpush1.bf16.msra.mxu0 0
      %1384 = vmatprep.subr.bf16.mxu0 0
      %1385 = vmatpush1.bf16.msra.mxu0 0
      %1386 = vmatprep.subr.bf16.mxu0 0
      %1387 = vmatpush1.bf16.msra.mxu0 0
      %1388 = vmatprep.subr.bf16.mxu0 0
      %1389 = vmatpush1.bf16.msra.mxu0 0
      %1390 = vmatprep.subr.bf16.mxu0 0
      %1391 = vmatpush1.bf16.msra.mxu0 0
      %1392 = vmatprep.subr.bf16.mxu0 0
      %1393 = vmatpush1.bf16.msra.mxu0 0
      %1394 = vmatprep.subr.bf16.mxu0 0
      %1395 = vmatpush1.bf16.msra.mxu0 0
      %1396 = vmatprep.mubr.bf16.mxu0 0
      %1397 = vmatmul.mubr.bf16.gmra.mrb[0].mxu0 %v1297
      %v1398 = vpop.f32.mrb[0].mxu0
      %v1399 = vadd.f32 0.0, %v1398
      %v1400 = vpop.f32.mrb[0].mxu0
      %v1401 = vpop.f32.mrb[0].mxu0
      %v1402 = vadd.f32 0.0, %v1401
      %v1403 = vpop.f32.mrb[0].mxu0
      %1404 = vmatprep.mubr.bf16.mxu0 0
      %1405 = vmatmul.mubr.bf16.gmra.mrb[0].mxu0 %v1300
      %v1406 = vpop.f32.mrb[0].mxu0
      %v1407 = vadd.f32 0.0, %v1406
      %v1408 = vpop.f32.mrb[0].mxu0
      %v1409 = vpop.f32.mrb[0].mxu0
      %v1410 = vadd.f32 0.0, %v1409
      %v1411 = vpop.f32.mrb[0].mxu0
      %1412 = vdwg.mxu0
      %v1413 = vadd.f32 %v1257, %v1346
      %v1414 = vadd.f32 %v1258, %v1348
      %v1415 = vadd.f32 %v1259, %v1399
      %v1416 = vadd.f32 %v1260, %v1350
      %v1417 = vadd.f32 %v1261, %v1352
      %v1418 = vadd.f32 %v1262, %v1402
      %v1419 = vadd.f32 %v1263, %v1356
      %v1420 = vadd.f32 %v1264, %v1358
      %v1421 = vadd.f32 %v1265, %v1407
      %v1422 = vadd.f32 %v1266, %v1360
      %v1423 = vadd.f32 %v1267, %v1362
      %v1424 = vadd.f32 %v1268, %v1410
      %s1425 = scalar_lea.vmem %s1, 128
      %v1426 = vld [vmem:[%s1425] sm:$0xf]
      %v1427 = vld [vmem:[%s1425 + $0x4] sm:$0xf]
      %v1428 = vld [vmem:[%s1425 + $0x8] sm:$0xf]
      %v1429 = vld [vmem:[%s1425 + $0xc] sm:$0xf]
      %v1434 = vunpack.c.l.b16 %v1426
      %v1435 = vunpack.c.l.b16 %v1427
      %v1436 = vunpack.c.l.b16 %v1428
      %v1437 = vunpack.c.l.b16 %v1429
      %v1438 = vpack.c.b16 %v1435, %v1434
      %v1439 = vpack.c.b16 %v1437, %v1436
      %1440 = vrot.lane.b32.xlu0 %v227, 90
      %v1441 = vpop.permute.xlu0 %1440
      %1442 = vrot.lane.b32.xlu0 %v228, 90
      %v1443 = vpop.permute.xlu0 %1442
      %1444 = vrot.lane.b32.xlu0 %v229, 90
      %v1445 = vpop.permute.xlu0 %1444
      %1446 = vrot.lane.b32.xlu0 %v230, 90
      %v1447 = vpop.permute.xlu0 %1446
      %vm1448 = vcmask 736256
      %v1449 = vsel %vm1448, %v1441, %v1443
      %v1450 = vsel %vm1448, %v1443, %v1445
      %v1451 = vsel %vm1448, %v1445, %v1447
      %v1453 = vsel %vm243, %v1438, 0
      %v1456 = vsel %vm243, %v1439, 0
      %v1459 = vsel %vm250, %v1449, 0
      %v1462 = vsel %vm250, %v1450, 0
      %v1465 = vsel %vm250, %v1451, 0
      %1467 = vmatprep.subr.bf16.mxu0 %v1462
      %1468 = vmatpush1.bf16.msra.mxu0 %v1459
      %1469 = vmatprep.subr.bf16.mxu0 0
      %1470 = vmatpush1.bf16.msra.mxu0 0
      %1471 = vmatprep.subr.bf16.mxu0 0
      %1472 = vmatpush1.bf16.msra.mxu0 0
      %1473 = vmatprep.subr.bf16.mxu0 0
      %1474 = vmatpush1.bf16.msra.mxu0 0
      %1475 = vmatprep.subr.bf16.mxu0 0
      %1476 = vmatpush1.bf16.msra.mxu0 0
      %1477 = vmatprep.subr.bf16.mxu0 0
      %1478 = vmatpush1.bf16.msra.mxu0 0
      %1479 = vmatprep.subr.bf16.mxu0 0
      %1480 = vmatpush1.bf16.msra.mxu0 0
      %1481 = vmatprep.subr.bf16.mxu0 0
      %1482 = vmatpush1.bf16.msra.mxu0 0
      %1483 = vmatprep.subr.bf16.mxu0 0
      %1484 = vmatpush1.bf16.msra.mxu0 0
      %1485 = vmatprep.subr.bf16.mxu0 0
      %1486 = vmatpush1.bf16.msra.mxu0 0
      %1487 = vmatprep.subr.bf16.mxu0 0
      %1488 = vmatpush1.bf16.msra.mxu0 0
      %1489 = vmatprep.subr.bf16.mxu0 0
      %1490 = vmatpush1.bf16.msra.mxu0 0
      %1491 = vmatprep.subr.bf16.mxu0 0
      %1492 = vmatpush1.bf16.msra.mxu0 0
      %1493 = vmatprep.subr.bf16.mxu0 0
      %1494 = vmatpush1.bf16.msra.mxu0 0
      %1495 = vmatprep.subr.bf16.mxu0 0
      %1496 = vmatpush1.bf16.msra.mxu0 0
      %1497 = vmatprep.subr.bf16.mxu0 0
      %1498 = vmatpush1.bf16.msra.mxu0 0
      %1499 = vmatprep.mubr.bf16.mxu0 0
      %1500 = vmatmul.mubr.bf16.gmra.mrb[0].mxu0 %v1453
      %v1501 = vpop.f32.mrb[0].mxu0
      %v1502 = vadd.f32 0.0, %v1501
      %v1503 = vpop.f32.mrb[0].mxu0
      %v1504 = vadd.f32 0.0, %v1503
      %v1505 = vpop.f32.mrb[0].mxu0
      %v1506 = vadd.f32 0.0, %v1505
      %v1507 = vpop.f32.mrb[0].mxu0
      %v1508 = vadd.f32 0.0, %v1507
      %1509 = vmatprep.mubr.bf16.mxu0 0
      %1510 = vmatmul.mubr.bf16.gmra.mrb[0].mxu0 %v1456
      %v1511 = vpop.f32.mrb[0].mxu0
      %v1512 = vadd.f32 0.0, %v1511
      %v1513 = vpop.f32.mrb[0].mxu0
      %v1514 = vadd.f32 0.0, %v1513
      %v1515 = vpop.f32.mrb[0].mxu0
      %v1516 = vadd.f32 0.0, %v1515
      %v1517 = vpop.f32.mrb[0].mxu0
      %v1518 = vadd.f32 0.0, %v1517
      %1519 = vdwg.mxu0
      %1520 = vmatprep.subr.bf16.mxu0 0
      %1521 = vmatpush1.bf16.msra.mxu0 %v1465
      %1522 = vmatprep.subr.bf16.mxu0 0
      %1523 = vmatpush1.bf16.msra.mxu0 0
      %1524 = vmatprep.subr.bf16.mxu0 0
      %1525 = vmatpush1.bf16.msra.mxu0 0
      %1526 = vmatprep.subr.bf16.mxu0 0
      %1527 = vmatpush1.bf16.msra.mxu0 0
      %1528 = vmatprep.subr.bf16.mxu0 0
      %1529 = vmatpush1.bf16.msra.mxu0 0
      %1530 = vmatprep.subr.bf16.mxu0 0
      %1531 = vmatpush1.bf16.msra.mxu0 0
      %1532 = vmatprep.subr.bf16.mxu0 0
      %1533 = vmatpush1.bf16.msra.mxu0 0
      %1534 = vmatprep.subr.bf16.mxu0 0
      %1535 = vmatpush1.bf16.msra.mxu0 0
      %1536 = vmatprep.subr.bf16.mxu0 0
      %1537 = vmatpush1.bf16.msra.mxu0 0
      %1538 = vmatprep.subr.bf16.mxu0 0
      %1539 = vmatpush1.bf16.msra.mxu0 0
      %1540 = vmatprep.subr.bf16.mxu0 0
      %1541 = vmatpush1.bf16.msra.mxu0 0
      %1542 = vmatprep.subr.bf16.mxu0 0
      %1543 = vmatpush1.bf16.msra.mxu0 0
      %1544 = vmatprep.subr.bf16.mxu0 0
      %1545 = vmatpush1.bf16.msra.mxu0 0
      %1546 = vmatprep.subr.bf16.mxu0 0
      %1547 = vmatpush1.bf16.msra.mxu0 0
      %1548 = vmatprep.subr.bf16.mxu0 0
      %1549 = vmatpush1.bf16.msra.mxu0 0
      %1550 = vmatprep.subr.bf16.mxu0 0
      %1551 = vmatpush1.bf16.msra.mxu0 0
      %1552 = vmatprep.mubr.bf16.mxu0 0
      %1553 = vmatmul.mubr.bf16.gmra.mrb[0].mxu0 %v1453
      %v1554 = vpop.f32.mrb[0].mxu0
      %v1555 = vadd.f32 0.0, %v1554
      %v1556 = vpop.f32.mrb[0].mxu0
      %v1557 = vpop.f32.mrb[0].mxu0
      %v1558 = vadd.f32 0.0, %v1557
      %v1559 = vpop.f32.mrb[0].mxu0
      %1560 = vmatprep.mubr.bf16.mxu0 0
      %1561 = vmatmul.mubr.bf16.gmra.mrb[0].mxu0 %v1456
      %v1562 = vpop.f32.mrb[0].mxu0
      %v1563 = vadd.f32 0.0, %v1562
      %v1564 = vpop.f32.mrb[0].mxu0
      %v1565 = vpop.f32.mrb[0].mxu0
      %v1566 = vadd.f32 0.0, %v1565
      %v1567 = vpop.f32.mrb[0].mxu0
      %1568 = vdwg.mxu0
      %v1569 = vadd.f32 %v1413, %v1502
      %v1570 = vadd.f32 %v1414, %v1504
      %v1571 = vadd.f32 %v1415, %v1555
      %v1572 = vadd.f32 %v1416, %v1506
      %v1573 = vadd.f32 %v1417, %v1508
      %v1574 = vadd.f32 %v1418, %v1558
      %v1575 = vadd.f32 %v1419, %v1512
      %v1576 = vadd.f32 %v1420, %v1514
      %v1577 = vadd.f32 %v1421, %v1563
      %v1578 = vadd.f32 %v1422, %v1516
      %v1579 = vadd.f32 %v1423, %v1518
      %v1580 = vadd.f32 %v1424, %v1566
      %v1581 = vld [vmem:[%s2] sm:$0xff]
      %v1582 = vld [vmem:[%s2 + $0x8] sm:$0xff]
      %v1583 = vld [vmem:[%s2 + $0x10] sm:$0xff]
      %v1584 = vld [vmem:[%s2 + $0x18] sm:$0xff]
      %1586 = vset.pattern.permute.xlu0 0
      %1587 = vperm.xlu0 %1586, %v1581
      %v1588 = vpop.permute.xlu0 %1587
      %1591 = vset.pattern.permute.xlu0 0
      %1592 = vperm.xlu0 %1591, %v1582
      %v1593 = vpop.permute.xlu0 %1592
      %1596 = vset.pattern.permute.xlu0 0
      %1597 = vperm.xlu0 %1596, %v1583
      %v1598 = vpop.permute.xlu0 %1597
      %1601 = vset.pattern.permute.xlu0 0
      %1602 = vperm.xlu0 %1601, %v1584
      %v1603 = vpop.permute.xlu0 %1602
      %v1605 = vadd.f32 %v1569, %v1588
      %v1606 = vadd.f32 %v1570, %v1588
      %v1607 = vadd.f32 %v1571, %v1588
      %v1608 = vadd.f32 %v1572, %v1593
      %v1609 = vadd.f32 %v1573, %v1593
      %v1610 = vadd.f32 %v1574, %v1593
      %v1611 = vadd.f32 %v1575, %v1598
      %v1612 = vadd.f32 %v1576, %v1598
      %v1613 = vadd.f32 %v1577, %v1598
      %v1614 = vadd.f32 %v1578, %v1603
      %v1615 = vadd.f32 %v1579, %v1603
      %v1616 = vadd.f32 %v1580, %v1603
      %s1617 = sld [smem:[#allocation2]]
      %vm1618 = vcmp.ge.f32.partialorder %v1605, 0.0
      %vm1619 = vcmp.ge.f32.partialorder %v1606, 0.0
      %vm1620 = vcmp.ge.f32.partialorder %v1607, 0.0
      %vm1621 = vcmp.ge.f32.partialorder %v1608, 0.0
      %vm1622 = vcmp.ge.f32.partialorder %v1609, 0.0
      %vm1623 = vcmp.ge.f32.partialorder %v1610, 0.0
      %vm1624 = vcmp.ge.f32.partialorder %v1611, 0.0
      %vm1625 = vcmp.ge.f32.partialorder %v1612, 0.0
      %vm1626 = vcmp.ge.f32.partialorder %v1613, 0.0
      %vm1627 = vcmp.ge.f32.partialorder %v1614, 0.0
      %vm1628 = vcmp.ge.f32.partialorder %v1615, 0.0
      %vm1629 = vcmp.ge.f32.partialorder %v1616, 0.0
      %v1630 = vstv %s1617
      %v1631 = vmul.f32 %v1630, %v1605
      %v1632 = vmul.f32 %v1630, %v1606
      %v1633 = vmul.f32 %v1630, %v1607
      %v1634 = vmul.f32 %v1630, %v1608
      %v1635 = vmul.f32 %v1630, %v1609
      %v1636 = vmul.f32 %v1630, %v1610
      %v1637 = vmul.f32 %v1630, %v1611
      %v1638 = vmul.f32 %v1630, %v1612
      %v1639 = vmul.f32 %v1630, %v1613
      %v1640 = vmul.f32 %v1630, %v1614
      %v1641 = vmul.f32 %v1630, %v1615
      %v1642 = vmul.f32 %v1630, %v1616
      %v1643 = vsel %vm1618, %v1605, %v1631
      %v1644 = vsel %vm1619, %v1606, %v1632
      %v1645 = vsel %vm1620, %v1607, %v1633
      %v1646 = vsel %vm1621, %v1608, %v1634
      %v1647 = vsel %vm1622, %v1609, %v1635
      %v1648 = vsel %vm1623, %v1610, %v1636
      %v1649 = vsel %vm1624, %v1611, %v1637
      %v1650 = vsel %vm1625, %v1612, %v1638
      %v1651 = vsel %vm1626, %v1613, %v1639
      %v1652 = vsel %vm1627, %v1614, %v1640
      %v1653 = vsel %vm1628, %v1615, %v1641
      %v1654 = vsel %vm1629, %v1616, %v1642
      %v1655 = vpack.c.bf16 %v1646, %v1643
      %v1656 = vpack.c.bf16 %v1647, %v1644
      %v1657 = vpack.c.bf16 %v1648, %v1645
      %v1658 = vpack.c.bf16 %v1652, %v1649
      %v1659 = vpack.c.bf16 %v1653, %v1650
      %v1660 = vpack.c.bf16 %v1654, %v1651
      %v1667 = vunpack.c.l.b16 %v1655
      %v1668 = vunpack.c.l.b16 %v1656
      %v1669 = vunpack.c.l.b16 %v1657
      %v1670 = vunpack.c.h.b16 %v1655
      %v1671 = vunpack.c.h.b16 %v1656
      %v1672 = vunpack.c.h.b16 %v1657
      %v1673 = vunpack.c.l.b16 %v1658
      %v1674 = vunpack.c.l.b16 %v1659
      %v1675 = vunpack.c.l.b16 %v1660
      %v1676 = vunpack.c.h.b16 %v1658
      %v1677 = vunpack.c.h.b16 %v1659
      %v1678 = vunpack.c.h.b16 %v1660
      %v1679 = vpack.c.b16 %v1668, %v1667
      %v1680 = vpack.c.b16 %v1669, %v1669
      %v1681 = vpack.c.b16 %v1671, %v1670
      %v1682 = vpack.c.b16 %v1672, %v1672
      %v1683 = vpack.c.b16 %v1674, %v1673
      %v1684 = vpack.c.b16 %v1675, %v1675
      %v1685 = vpack.c.b16 %v1677, %v1676
      %v1686 = vpack.c.b16 %v1678, %v1678
      %1695 = vst [vmem:[%s198] sm:$0xff] %v1679
      %1696 = vst [vmem:[%s198 + $0x8] sm:$0xf] %v1680
      %1697 = vst [vmem:[%s198 + $0xc] sm:$0xff] %v1681
      %1698 = vst [vmem:[%s198 + $0x14] sm:$0xf] %v1682
      %1699 = vst [vmem:[%s198 + $0x18] sm:$0xff] %v1683
      %1700 = vst [vmem:[%s198 + $0x20] sm:$0xf] %v1684
      %1701 = vst [vmem:[%s198 + $0x24] sm:$0xff] %v1685
      %1702 = vst [vmem:[%s198 + $0x2c] sm:$0xf] %v1686
      %p1703 = scmp.lt.s32.totalorder %s16, 1
      %s1704 = scalar_select %p1703, %s16, 1
      %s1705 = smul.addr %s1704, 12
      %s1706 = smul.addr %s1705, 4
      %s1707 = scalar_lea.vmem %s4, %s1706
      // Predicated region
      $region37: #{feedback_block_custom_forward.9} parent=35 // pred_check
        %p1708 = pneg %p123
      $region38: #{feedback_block_custom_forward.9} parent=35 // pred_check_branch
        %1710 = sbr.rel (%p1708) target = $region40
      $region39: #{feedback_block_custom_forward.9} parent=35 // pred_region
        _
      $region40: #{feedback_block_custom_forward.9} parent=35 // pred_fallthru
        _
    $region36: #{feedback_block_custom_forward.9} parent=5 // pred_fallthru
      _
    %p1711 = scmp.le.s32.totalorder 2, %s11
    // Predicated region
    $region41: #{feedback_block_custom_forward.9} parent=5 // pred_check
      %p1712 = pneg %p1711
    $region42: #{feedback_block_custom_forward.9} parent=5 // pred_check_branch
      %1714 = sbr.rel (%p1712) target = $region44
    $region43: #{feedback_block_custom_forward.9} parent=5 // pred_region
      %s1715 = ssub.s32 %s11, 2
      // Predicated region
      $region45: #{feedback_block_custom_forward.9} parent=43 // pred_check
        %p1716 = pneg %p129
      $region46: #{feedback_block_custom_forward.9} parent=43 // pred_check_branch
        %1718 = sbr.rel (%p1716) target = $region48
      $region47: #{feedback_block_custom_forward.9} parent=43 // pred_region
        %p1719 = scmp.lt.s32.totalorder %s17, 1
        %s1720 = scalar_select %p1719, %s17, 1
        %s1721 = smul.addr %s1720, 12
        %s1722 = smul.addr %s1721, 4
        %s1723 = scalar_lea.vmem %s4, %s1722
      $region48: #{feedback_block_custom_forward.9} parent=43 // pred_fallthru
        _
    $region44: #{feedback_block_custom_forward.9} parent=5 // pred_fallthru
      _
  $region6: #{feedback_block_custom_forward.9} parent=0 // loop_footer
    %s15 = sadd.s32 1, %s11
  $region7: #{feedback_block_custom_forward.9} parent=0 // loop_footer_branch
    %10 = sbr.rel target = $region3
  $region8: #{feedback_block_custom_forward.9} parent=0 // loop_exit
    _

// kernel: feedback_block_custom_forward.11
$region0: #{feedback_block_custom_forward.11}
  #allocation0 [shape = 'u32[]', space=smem, size = 0x4, offset = 0x4, fixed_abs, tag = 'smem constant byte address 0x4 - core index']
  #allocation1 [shape = 'u32[144,128]{1,0:T(1,128)}', space=vmem, size = 0x12000, scoped, tag = 'internal scratch']
  #allocation2 [shape = 'f32[1]{0:T(128)S(6)}', space=smem, size = 0x200, scoped, tag = 'scoped memory for feedback_block_custom_forward.11']
  %s0 = inlined_call_operand.vmem [shape: bf16[2,16,256], index: 0, kind: input, shape index: {}]
  %s1 = inlined_call_operand.vmem [shape: bf16[1,8,16], index: 1, kind: input, shape index: {}]
  %s2 = inlined_call_operand.vmem [shape: f32[8,1], index: 2, kind: input, shape index: {}]
  %s3 = inlined_call_operand.<no memory space> [shape: f32[1], index: 3, kind: input, shape index: {}]
  %s4 = inlined_call_operand.vmem [shape: bf16[2,8,256], index: 4, kind: output, shape index: {}]
  %s5 = sld [smem:[#allocation0]]
  $region49: #{feedback_block_custom_forward.11} parent=0
    _
  %s7 = ssub.s32 1, %s5
  %s8 = scalar_select 0, %s7, %s5
  %9 = sst [smem:[#allocation2]] %s3
  loop: start=0, step=1, limit=4
  $region2: #{feedback_block_custom_forward.11} parent=0 // loop_pre_header
    _
  $region3: #{feedback_block_custom_forward.11} parent=0 // loop_header
    %s11 = sphi 0, %s15
    %p12 = scmp.ge.s32.totalorder %s11, 4
    %s21 = sphi 0, %s23
    %s24 = sphi 0, %s21
    %s25 = sphi 0, %s24
    %s41 = sphi 0, %s25
    %s45 = sphi 0, %s45
    %s47 = sphi 0, %s45
    %s48 = sphi 0, %s47
    %s62 = sphi 0, %s48
    %s66 = sphi 0, %s66
    %s68 = sphi 0, %s66
    %s69 = sphi 0, %s68
    %s83 = sphi 0, %s69
    %s87 = sphi 0, %s87
    %s89 = sphi 0, %s87
    %s90 = sphi 0, %s89
    %s104 = sphi 0, %s90
    %s110 = sphi 0, %s112
    %s113 = sphi 0, %s110
    %s114 = sphi 0, %s113
    %s130 = sphi 0, %s114
  $region4: #{feedback_block_custom_forward.11} parent=0 // loop_header_branch
    %14 = sbr.rel (%p12) target = $region8
  $region5: #{feedback_block_custom_forward.11} parent=0 // loop_body
    %s16 = ssub.s32 %s11, 1
    %s17 = ssub.s32 %s11, 2
    %s18 = sadd.s32 %s11, 1
    %s19 = ssub.s32 %s11, %s18
    %p20 = scmp.eq.s32.totalorder %s19, 0
    %s22 = sadd.s32 %s21, 1
    %s23 = scalar_select %p20, %s21, %s22
    %p26 = pneg %p20
    %p27 = scmp.eq.s32.totalorder %s11, 1
    %p28 = por %p26, %p27
    %p29 = scmp.ne.s32.totalorder %s21, %s24
    %p30 = scmp.eq.s32.totalorder %s11, 0
    %p31 = por %p29, %p30
    %p32 = scmp.ne.s32.totalorder %s21, %s24
    %p33 = scmp.eq.s32.totalorder %s16, 1
    %p34 = por %p32, %p33
    %p35 = scmp.ne.s32.totalorder %s24, %s25
    %p36 = scmp.eq.s32.totalorder %s16, 0
    %p37 = por %p35, %p36
    %p38 = scmp.ne.s32.totalorder %s24, %s25
    %p39 = scmp.eq.s32.totalorder %s17, 1
    %p40 = por %p38, %p39
    %p42 = scmp.ne.s32.totalorder %s25, %s41
    %p43 = scmp.eq.s32.totalorder %s17, 0
    %p44 = por %p42, %p43
    %s46 = sadd.s32 %s45, 1
    %p49 = scmp.eq.s32.totalorder %s11, 1
    %p50 = scmp.ne.s32.totalorder %s45, %s47
    %p51 = scmp.eq.s32.totalorder %s11, 0
    %p52 = por %p50, %p51
    %p53 = scmp.ne.s32.totalorder %s45, %s47
    %p54 = scmp.eq.s32.totalorder %s16, 1
    %p55 = por %p53, %p54
    %p56 = scmp.ne.s32.totalorder %s47, %s48
    %p57 = scmp.eq.s32.totalorder %s16, 0
    %p58 = por %p56, %p57
    %p59 = scmp.ne.s32.totalorder %s47, %s48
    %p60 = scmp.eq.s32.totalorder %s17, 1
    %p61 = por %p59, %p60
    %p63 = scmp.ne.s32.totalorder %s48, %s62
    %p64 = scmp.eq.s32.totalorder %s17, 0
    %p65 = por %p63, %p64
    %s67 = sadd.s32 %s66, 1
    %p70 = scmp.eq.s32.totalorder %s11, 1
    %p71 = scmp.ne.s32.totalorder %s66, %s68
    %p72 = scmp.eq.s32.totalorder %s11, 0
    %p73 = por %p71, %p72
    %p74 = scmp.ne.s32.totalorder %s66, %s68
    %p75 = scmp.eq.s32.totalorder %s16, 1
    %p76 = por %p74, %p75
    %p77 = scmp.ne.s32.totalorder %s68, %s69
    %p78 = scmp.eq.s32.totalorder %s16, 0
    %p79 = por %p77, %p78
    %p80 = scmp.ne.s32.totalorder %s68, %s69
    %p81 = scmp.eq.s32.totalorder %s17, 1
    %p82 = por %p80, %p81
    %p84 = scmp.ne.s32.totalorder %s69, %s83
    %p85 = scmp.eq.s32.totalorder %s17, 0
    %p86 = por %p84, %p85
    %s88 = sadd.s32 %s87, 1
    %p91 = scmp.eq.s32.totalorder %s11, 1
    %p92 = scmp.ne.s32.totalorder %s87, %s89
    %p93 = scmp.eq.s32.totalorder %s11, 0
    %p94 = por %p92, %p93
    %p95 = scmp.ne.s32.totalorder %s87, %s89
    %p96 = scmp.eq.s32.totalorder %s16, 1
    %p97 = por %p95, %p96
    %p98 = scmp.ne.s32.totalorder %s89, %s90
    %p99 = scmp.eq.s32.totalorder %s16, 0
    %p100 = por %p98, %p99
    %p101 = scmp.ne.s32.totalorder %s89, %s90
    %p102 = scmp.eq.s32.totalorder %s17, 1
    %p103 = por %p101, %p102
    %p105 = scmp.ne.s32.totalorder %s90, %s104
    %p106 = scmp.eq.s32.totalorder %s17, 0
    %p107 = por %p105, %p106
    %s108 = ssub.s32 %s11, %s18
    %p109 = scmp.eq.s32.totalorder %s108, 0
    %s111 = sadd.s32 %s110, 1
    %s112 = scalar_select %p109, %s110, %s111
    %p115 = pneg %p109
    %p116 = scmp.eq.s32.totalorder %s11, 1
    %p117 = por %p115, %p116
    %p118 = scmp.ne.s32.totalorder %s110, %s113
    %p119 = scmp.eq.s32.totalorder %s11, 0
    %p120 = por %p118, %p119
    %p121 = scmp.ne.s32.totalorder %s110, %s113
    %p122 = scmp.eq.s32.totalorder %s16, 1
    %p123 = por %p121, %p122
    %p124 = scmp.ne.s32.totalorder %s113, %s114
    %p125 = scmp.eq.s32.totalorder %s16, 0
    %p126 = por %p124, %p125
    %p127 = scmp.ne.s32.totalorder %s113, %s114
    %p128 = scmp.eq.s32.totalorder %s17, 1
    %p129 = por %p127, %p128
    %p131 = scmp.ne.s32.totalorder %s114, %s130
    %p132 = scmp.eq.s32.totalorder %s17, 0
    %p133 = por %p131, %p132
    %p134 = scmp.le.s32.totalorder 1, %s11
    %p135 = scmp.lt.s32.totalorder %s11, 3
    %p136 = pnand %p134, %p135
    %p137 = pneg %p136
    // Predicated region
    $region9: #{feedback_block_custom_forward.11} parent=5 // pred_check
      _
    $region10: #{feedback_block_custom_forward.11} parent=5 // pred_check_branch
      %139 = sbr.rel (%p136) target = $region12
    $region11: #{feedback_block_custom_forward.11} parent=5 // pred_region
      %s140 = ssub.s32 %s11, 1
      // Predicated region
      $region13: #{feedback_block_custom_forward.11} parent=11 // pred_check
        %p141 = pneg %p58
      $region14: #{feedback_block_custom_forward.11} parent=11 // pred_check_branch
        %143 = sbr.rel (%p141) target = $region16
      $region15: #{feedback_block_custom_forward.11} parent=11 // pred_region
        _
      $region16: #{feedback_block_custom_forward.11} parent=11 // pred_fallthru
        _
      // Predicated region
      $region17: #{feedback_block_custom_forward.11} parent=11 // pred_check
        %p144 = pneg %p79
      $region18: #{feedback_block_custom_forward.11} parent=11 // pred_check_branch
        %146 = sbr.rel (%p144) target = $region20
      $region19: #{feedback_block_custom_forward.11} parent=11 // pred_region
        _
      $region20: #{feedback_block_custom_forward.11} parent=11 // pred_fallthru
        _
      // Predicated region
      $region21: #{feedback_block_custom_forward.11} parent=11 // pred_check
        %p147 = pneg %p100
      $region22: #{feedback_block_custom_forward.11} parent=11 // pred_check_branch
        %149 = sbr.rel (%p147) target = $region24
      $region23: #{feedback_block_custom_forward.11} parent=11 // pred_region
        _
      $region24: #{feedback_block_custom_forward.11} parent=11 // pred_fallthru
        _
    $region12: #{feedback_block_custom_forward.11} parent=5 // pred_fallthru
      _
    %p150 = scmp.lt.s32.totalorder %s11, 2
    // Predicated region
    $region25: #{feedback_block_custom_forward.11} parent=5 // pred_check
      %p151 = pneg %p150
    $region26: #{feedback_block_custom_forward.11} parent=5 // pred_check_branch
      %153 = sbr.rel (%p151) target = $region28
    $region27: #{feedback_block_custom_forward.11} parent=5 // pred_region
      // Predicated region
      $region29: #{feedback_block_custom_forward.11} parent=27 // pred_check
        %p154 = pneg %p31
      $region30: #{feedback_block_custom_forward.11} parent=27 // pred_check_branch
        %156 = sbr.rel (%p154) target = $region32
      $region31: #{feedback_block_custom_forward.11} parent=27 // pred_region
        %p157 = scmp.lt.s32.totalorder %s11, 1
        %s158 = scalar_select %p157, %s11, 1
        %s159 = smul.addr %s158, 4
        %s160 = smul.addr %s159, 4
        %s161 = scalar_lea.vmem %s0, %s160
      $region32: #{feedback_block_custom_forward.11} parent=27 // pred_fallthru
        _
    $region28: #{feedback_block_custom_forward.11} parent=5 // pred_fallthru
      _
    %p162 = scmp.le.s32.totalorder 1, %s11
    %p163 = scmp.lt.s32.totalorder %s11, 3
    %p164 = pnand %p162, %p163
    %p165 = pneg %p164
    // Predicated region
    $region33: #{feedback_block_custom_forward.11} parent=5 // pred_check
      _
    $region34: #{feedback_block_custom_forward.11} parent=5 // pred_check_branch
      %167 = sbr.rel (%p164) target = $region36
    $region35: #{feedback_block_custom_forward.11} parent=5 // pred_region
      %s168 = ssub.s32 %s11, 1
      %p169 = scmp.lt.s32.totalorder %s16, 1
      %s170 = scalar_select %p169, %s16, 1
      %s171 = smul.addr %s170, 4
      %s172 = smul.addr %s171, 4
      %s173 = scalar_lea.vmem %s0, %s172
      %p174 = pneg %p37
      %p175 = pneg %p34
      %p176 = pneg %p58
      %p177 = pneg %p55
      %p178 = pneg %p79
      %p179 = pneg %p76
      %p180 = pneg %p100
      %p181 = pneg %p97
      %p182 = pneg %p126
      %p183 = pneg %p123
      %p184 = scmp.lt.s32.totalorder %s16, 1
      %s185 = scalar_select %p184, %s16, 1
      %s186 = smul.addr %s185, 2
      %s187 = smul.addr %s186, 4
      %s188 = scalar_lea.vmem %s4, %s187
      %p189 = scmp.lt.s32.totalorder %s16, 1
      %s190 = scalar_select %p189, %s16, 1
      %s191 = smul.addr %s190, 4
      %s192 = smul.addr %s191, 4
      %s193 = scalar_lea.vmem %s0, %s192
      %p194 = scmp.lt.s32.totalorder %s16, 1
      %s195 = scalar_select %p194, %s16, 1
      %s196 = smul.addr %s195, 2
      %s197 = smul.addr %s196, 4
      %s198 = scalar_lea.vmem %s4, %s197
      %v200 = vld [vmem:[%s193] sm:$0xff]
      %v201 = vld [vmem:[%s193 + $0x8] sm:$0xff]
      %v202 = vld [vmem:[%s1] sm:$0xf]
      %v203 = vld [vmem:[%s2] sm:$0xff]
      %205 = vset.pattern.permute.xlu0 0
      %206 = vperm.xlu0 %205, %v203
      %v207 = vpop.permute.xlu0 %206
      %v211 = vunpack.c.l.b16 %v200
      %v212 = vunpack.c.h.b16 %v200
      %v213 = vunpack.c.l.b16 %v201
      %v214 = vunpack.c.h.b16 %v201
      %v215 = vpack.c.b16 %v213, %v211
      %v216 = vpack.c.b16 %v214, %v212
      %vm219 = vcmask 130048
      %v221 = vsel %vm219, %v202, 0
      %223 = vmatprep.subr.bf16.mxu0 %v216
      %224 = vmatpush1.bf16.msra.mxu0 %v215
      %225 = vmatprep.subr.bf16.mxu0 0
      %226 = vmatpush1.bf16.msra.mxu0 0
      %227 = vmatprep.subr.bf16.mxu0 0
      %228 = vmatpush1.bf16.msra.mxu0 0
      %229 = vmatprep.subr.bf16.mxu0 0
      %230 = vmatpush1.bf16.msra.mxu0 0
      %231 = vmatprep.subr.bf16.mxu0 0
      %232 = vmatpush1.bf16.msra.mxu0 0
      %233 = vmatprep.subr.bf16.mxu0 0
      %234 = vmatpush1.bf16.msra.mxu0 0
      %235 = vmatprep.subr.bf16.mxu0 0
      %236 = vmatpush1.bf16.msra.mxu0 0
      %237 = vmatprep.subr.bf16.mxu0 0
      %238 = vmatpush1.bf16.msra.mxu0 0
      %239 = vmatprep.subr.bf16.mxu0 0
      %240 = vmatpush1.bf16.msra.mxu0 0
      %241 = vmatprep.subr.bf16.mxu0 0
      %242 = vmatpush1.bf16.msra.mxu0 0
      %243 = vmatprep.subr.bf16.mxu0 0
      %244 = vmatpush1.bf16.msra.mxu0 0
      %245 = vmatprep.subr.bf16.mxu0 0
      %246 = vmatpush1.bf16.msra.mxu0 0
      %247 = vmatprep.subr.bf16.mxu0 0
      %248 = vmatpush1.bf16.msra.mxu0 0
      %249 = vmatprep.subr.bf16.mxu0 0
      %250 = vmatpush1.bf16.msra.mxu0 0
      %251 = vmatprep.subr.bf16.mxu0 0
      %252 = vmatpush1.bf16.msra.mxu0 0
      %253 = vmatprep.subr.bf16.mxu0 0
      %254 = vmatpush1.bf16.msra.mxu0 0
      %255 = vmatprep.mubr.bf16.mxu0 0
      %256 = vmatmul.mubr.bf16.gmra.mrb[0].mxu0 %v221
      %v257 = vpop.f32.mrb[0].mxu0
      %v258 = vadd.f32 %v207, %v257
      %v259 = vpop.f32.mrb[0].mxu0
      %v260 = vadd.f32 %v207, %v259
      %v261 = vpop.f32.mrb[0].mxu0
      %v262 = vpop.f32.mrb[0].mxu0
      %263 = vdwg.mxu0
      %s264 = sld [smem:[#allocation2]]
      %vm265 = vcmp.ge.f32.partialorder %v258, 0.0
      %vm266 = vcmp.ge.f32.partialorder %v260, 0.0
      %v267 = vstv %s264
      %v268 = vmul.f32 %v267, %v258
      %v269 = vmul.f32 %v267, %v260
      %v270 = vsel %vm265, %v258, %v268
      %v271 = vsel %vm266, %v260, %v269
      %v272 = vpack.c.bf16 %v270, %v270
      %v273 = vpack.c.bf16 %v271, %v271
      %v276 = vunpack.c.l.b16 %v272
      %v277 = vunpack.c.l.b16 %v273
      %v278 = vpack.c.b16 %v277, %v276
      %280 = vst [vmem:[%s198] sm:$0xff] %v278
      %p281 = scmp.lt.s32.totalorder %s16, 1
      %s282 = scalar_select %p281, %s16, 1
      %s283 = smul.addr %s282, 2
      %s284 = smul.addr %s283, 4
      %s285 = scalar_lea.vmem %s4, %s284
      // Predicated region
      $region37: #{feedback_block_custom_forward.11} parent=35 // pred_check
        %p286 = pneg %p123
      $region38: #{feedback_block_custom_forward.11} parent=35 // pred_check_branch
        %288 = sbr.rel (%p286) target = $region40
      $region39: #{feedback_block_custom_forward.11} parent=35 // pred_region
        _
      $region40: #{feedback_block_custom_forward.11} parent=35 // pred_fallthru
        _
    $region36: #{feedback_block_custom_forward.11} parent=5 // pred_fallthru
      _
    %p289 = scmp.le.s32.totalorder 2, %s11
    // Predicated region
    $region41: #{feedback_block_custom_forward.11} parent=5 // pred_check
      %p290 = pneg %p289
    $region42: #{feedback_block_custom_forward.11} parent=5 // pred_check_branch
      %292 = sbr.rel (%p290) target = $region44
    $region43: #{feedback_block_custom_forward.11} parent=5 // pred_region
      %s293 = ssub.s32 %s11, 2
      // Predicated region
      $region45: #{feedback_block_custom_forward.11} parent=43 // pred_check
        %p294 = pneg %p129
      $region46: #{feedback_block_custom_forward.11} parent=43 // pred_check_branch
        %296 = sbr.rel (%p294) target = $region48
      $region47: #{feedback_block_custom_forward.11} parent=43 // pred_region
        %p297 = scmp.lt.s32.totalorder %s17, 1
        %s298 = scalar_select %p297, %s17, 1
        %s299 = smul.addr %s298, 2
        %s300 = smul.addr %s299, 4
        %s301 = scalar_lea.vmem %s4, %s300
      $region48: #{feedback_block_custom_forward.11} parent=43 // pred_fallthru
        _
    $region44: #{feedback_block_custom_forward.11} parent=5 // pred_fallthru
      _
  $region6: #{feedback_block_custom_forward.11} parent=0 // loop_footer
    %s15 = sadd.s32 1, %s11
  $region7: #{feedback_block_custom_forward.11} parent=0 // loop_footer_branch
    %10 = sbr.rel target = $region3
  $region8: #{feedback_block_custom_forward.11} parent=0 // loop_exit
    _

// kernel: feedback_block_custom_forward.10
$region0: #{feedback_block_custom_forward.10}
  #allocation0 [shape = 'u32[]', space=smem, size = 0x4, offset = 0x4, fixed_abs, tag = 'smem constant byte address 0x4 - core index']
  #allocation1 [shape = 'u32[144,128]{1,0:T(1,128)}', space=vmem, size = 0x12000, scoped, tag = 'internal scratch']
  #allocation2 [shape = 'f32[1]{0:T(128)S(6)}', space=smem, size = 0x200, scoped, tag = 'scoped memory for feedback_block_custom_forward.10']
  %s0 = inlined_call_operand.vmem [shape: bf16[2,32,512], index: 0, kind: input, shape index: {}]
  %s1 = inlined_call_operand.vmem [shape: bf16[9,8,32], index: 1, kind: input, shape index: {}]
  %s2 = inlined_call_operand.vmem [shape: f32[8,1], index: 2, kind: input, shape index: {}]
  %s3 = inlined_call_operand.<no memory space> [shape: f32[1], index: 3, kind: input, shape index: {}]
  %s4 = inlined_call_operand.vmem [shape: bf16[2,8,384], index: 4, kind: output, shape index: {}]
  %s5 = sld [smem:[#allocation0]]
  $region49: #{feedback_block_custom_forward.10} parent=0
    _
  %s7 = ssub.s32 1, %s5
  %s8 = scalar_select 0, %s7, %s5
  %9 = sst [smem:[#allocation2]] %s3
  loop: start=0, step=1, limit=4
  $region2: #{feedback_block_custom_forward.10} parent=0 // loop_pre_header
    _
  $region3: #{feedback_block_custom_forward.10} parent=0 // loop_header
    %s11 = sphi 0, %s15
    %p12 = scmp.ge.s32.totalorder %s11, 4
    %s21 = sphi 0, %s23
    %s24 = sphi 0, %s21
    %s25 = sphi 0, %s24
    %s41 = sphi 0, %s25
    %s45 = sphi 0, %s45
    %s47 = sphi 0, %s45
    %s48 = sphi 0, %s47
    %s62 = sphi 0, %s48
    %s66 = sphi 0, %s66
    %s68 = sphi 0, %s66
    %s69 = sphi 0, %s68
    %s83 = sphi 0, %s69
    %s87 = sphi 0, %s87
    %s89 = sphi 0, %s87
    %s90 = sphi 0, %s89
    %s104 = sphi 0, %s90
    %s110 = sphi 0, %s112
    %s113 = sphi 0, %s110
    %s114 = sphi 0, %s113
    %s130 = sphi 0, %s114
  $region4: #{feedback_block_custom_forward.10} parent=0 // loop_header_branch
    %14 = sbr.rel (%p12) target = $region8
  $region5: #{feedback_block_custom_forward.10} parent=0 // loop_body
    %s16 = ssub.s32 %s11, 1
    %s17 = ssub.s32 %s11, 2
    %s18 = sadd.s32 %s11, 1
    %s19 = ssub.s32 %s11, %s18
    %p20 = scmp.eq.s32.totalorder %s19, 0
    %s22 = sadd.s32 %s21, 1
    %s23 = scalar_select %p20, %s21, %s22
    %p26 = pneg %p20
    %p27 = scmp.eq.s32.totalorder %s11, 1
    %p28 = por %p26, %p27
    %p29 = scmp.ne.s32.totalorder %s21, %s24
    %p30 = scmp.eq.s32.totalorder %s11, 0
    %p31 = por %p29, %p30
    %p32 = scmp.ne.s32.totalorder %s21, %s24
    %p33 = scmp.eq.s32.totalorder %s16, 1
    %p34 = por %p32, %p33
    %p35 = scmp.ne.s32.totalorder %s24, %s25
    %p36 = scmp.eq.s32.totalorder %s16, 0
    %p37 = por %p35, %p36
    %p38 = scmp.ne.s32.totalorder %s24, %s25
    %p39 = scmp.eq.s32.totalorder %s17, 1
    %p40 = por %p38, %p39
    %p42 = scmp.ne.s32.totalorder %s25, %s41
    %p43 = scmp.eq.s32.totalorder %s17, 0
    %p44 = por %p42, %p43
    %s46 = sadd.s32 %s45, 1
    %p49 = scmp.eq.s32.totalorder %s11, 1
    %p50 = scmp.ne.s32.totalorder %s45, %s47
    %p51 = scmp.eq.s32.totalorder %s11, 0
    %p52 = por %p50, %p51
    %p53 = scmp.ne.s32.totalorder %s45, %s47
    %p54 = scmp.eq.s32.totalorder %s16, 1
    %p55 = por %p53, %p54
    %p56 = scmp.ne.s32.totalorder %s47, %s48
    %p57 = scmp.eq.s32.totalorder %s16, 0
    %p58 = por %p56, %p57
    %p59 = scmp.ne.s32.totalorder %s47, %s48
    %p60 = scmp.eq.s32.totalorder %s17, 1
    %p61 = por %p59, %p60
    %p63 = scmp.ne.s32.totalorder %s48, %s62
    %p64 = scmp.eq.s32.totalorder %s17, 0
    %p65 = por %p63, %p64
    %s67 = sadd.s32 %s66, 1
    %p70 = scmp.eq.s32.totalorder %s11, 1
    %p71 = scmp.ne.s32.totalorder %s66, %s68
    %p72 = scmp.eq.s32.totalorder %s11, 0
    %p73 = por %p71, %p72
    %p74 = scmp.ne.s32.totalorder %s66, %s68
    %p75 = scmp.eq.s32.totalorder %s16, 1
    %p76 = por %p74, %p75
    %p77 = scmp.ne.s32.totalorder %s68, %s69
    %p78 = scmp.eq.s32.totalorder %s16, 0
    %p79 = por %p77, %p78
    %p80 = scmp.ne.s32.totalorder %s68, %s69
    %p81 = scmp.eq.s32.totalorder %s17, 1
    %p82 = por %p80, %p81
    %p84 = scmp.ne.s32.totalorder %s69, %s83
    %p85 = scmp.eq.s32.totalorder %s17, 0
    %p86 = por %p84, %p85
    %s88 = sadd.s32 %s87, 1
    %p91 = scmp.eq.s32.totalorder %s11, 1
    %p92 = scmp.ne.s32.totalorder %s87, %s89
    %p93 = scmp.eq.s32.totalorder %s11, 0
    %p94 = por %p92, %p93
    %p95 = scmp.ne.s32.totalorder %s87, %s89
    %p96 = scmp.eq.s32.totalorder %s16, 1
    %p97 = por %p95, %p96
    %p98 = scmp.ne.s32.totalorder %s89, %s90
    %p99 = scmp.eq.s32.totalorder %s16, 0
    %p100 = por %p98, %p99
    %p101 = scmp.ne.s32.totalorder %s89, %s90
    %p102 = scmp.eq.s32.totalorder %s17, 1
    %p103 = por %p101, %p102
    %p105 = scmp.ne.s32.totalorder %s90, %s104
    %p106 = scmp.eq.s32.totalorder %s17, 0
    %p107 = por %p105, %p106
    %s108 = ssub.s32 %s11, %s18
    %p109 = scmp.eq.s32.totalorder %s108, 0
    %s111 = sadd.s32 %s110, 1
    %s112 = scalar_select %p109, %s110, %s111
    %p115 = pneg %p109
    %p116 = scmp.eq.s32.totalorder %s11, 1
    %p117 = por %p115, %p116
    %p118 = scmp.ne.s32.totalorder %s110, %s113
    %p119 = scmp.eq.s32.totalorder %s11, 0
    %p120 = por %p118, %p119
    %p121 = scmp.ne.s32.totalorder %s110, %s113
    %p122 = scmp.eq.s32.totalorder %s16, 1
    %p123 = por %p121, %p122
    %p124 = scmp.ne.s32.totalorder %s113, %s114
    %p125 = scmp.eq.s32.totalorder %s16, 0
    %p126 = por %p124, %p125
    %p127 = scmp.ne.s32.totalorder %s113, %s114
    %p128 = scmp.eq.s32.totalorder %s17, 1
    %p129 = por %p127, %p128
    %p131 = scmp.ne.s32.totalorder %s114, %s130
    %p132 = scmp.eq.s32.totalorder %s17, 0
    %p133 = por %p131, %p132
    %p134 = scmp.le.s32.totalorder 1, %s11
    %p135 = scmp.lt.s32.totalorder %s11, 3
    %p136 = pnand %p134, %p135
    %p137 = pneg %p136
    // Predicated region
    $region9: #{feedback_block_custom_forward.10} parent=5 // pred_check
      _
    $region10: #{feedback_block_custom_forward.10} parent=5 // pred_check_branch
      %139 = sbr.rel (%p136) target = $region12
    $region11: #{feedback_block_custom_forward.10} parent=5 // pred_region
      %s140 = ssub.s32 %s11, 1
      // Predicated region
      $region13: #{feedback_block_custom_forward.10} parent=11 // pred_check
        %p141 = pneg %p58
      $region14: #{feedback_block_custom_forward.10} parent=11 // pred_check_branch
        %143 = sbr.rel (%p141) target = $region16
      $region15: #{feedback_block_custom_forward.10} parent=11 // pred_region
        _
      $region16: #{feedback_block_custom_forward.10} parent=11 // pred_fallthru
        _
      // Predicated region
      $region17: #{feedback_block_custom_forward.10} parent=11 // pred_check
        %p144 = pneg %p79
      $region18: #{feedback_block_custom_forward.10} parent=11 // pred_check_branch
        %146 = sbr.rel (%p144) target = $region20
      $region19: #{feedback_block_custom_forward.10} parent=11 // pred_region
        _
      $region20: #{feedback_block_custom_forward.10} parent=11 // pred_fallthru
        _
      // Predicated region
      $region21: #{feedback_block_custom_forward.10} parent=11 // pred_check
        %p147 = pneg %p100
      $region22: #{feedback_block_custom_forward.10} parent=11 // pred_check_branch
        %149 = sbr.rel (%p147) target = $region24
      $region23: #{feedback_block_custom_forward.10} parent=11 // pred_region
        _
      $region24: #{feedback_block_custom_forward.10} parent=11 // pred_fallthru
        _
    $region12: #{feedback_block_custom_forward.10} parent=5 // pred_fallthru
      _
    %p150 = scmp.lt.s32.totalorder %s11, 2
    // Predicated region
    $region25: #{feedback_block_custom_forward.10} parent=5 // pred_check
      %p151 = pneg %p150
    $region26: #{feedback_block_custom_forward.10} parent=5 // pred_check_branch
      %153 = sbr.rel (%p151) target = $region28
    $region27: #{feedback_block_custom_forward.10} parent=5 // pred_region
      // Predicated region
      $region29: #{feedback_block_custom_forward.10} parent=27 // pred_check
        %p154 = pneg %p31
      $region30: #{feedback_block_custom_forward.10} parent=27 // pred_check_branch
        %156 = sbr.rel (%p154) target = $region32
      $region31: #{feedback_block_custom_forward.10} parent=27 // pred_region
        %p157 = scmp.lt.s32.totalorder %s11, 1
        %s158 = scalar_select %p157, %s11, 1
        %s159 = smul.addr %s158, 16
        %s160 = smul.addr %s159, 4
        %s161 = scalar_lea.vmem %s0, %s160
      $region32: #{feedback_block_custom_forward.10} parent=27 // pred_fallthru
        _
    $region28: #{feedback_block_custom_forward.10} parent=5 // pred_fallthru
      _
    %p162 = scmp.le.s32.totalorder 1, %s11
    %p163 = scmp.lt.s32.totalorder %s11, 3
    %p164 = pnand %p162, %p163
    %p165 = pneg %p164
    // Predicated region
    $region33: #{feedback_block_custom_forward.10} parent=5 // pred_check
      _
    $region34: #{feedback_block_custom_forward.10} parent=5 // pred_check_branch
      %167 = sbr.rel (%p164) target = $region36
    $region35: #{feedback_block_custom_forward.10} parent=5 // pred_region
      %s168 = ssub.s32 %s11, 1
      %p169 = scmp.lt.s32.totalorder %s16, 1
      %s170 = scalar_select %p169, %s16, 1
      %s171 = smul.addr %s170, 16
      %s172 = smul.addr %s171, 4
      %s173 = scalar_lea.vmem %s0, %s172
      %p174 = pneg %p37
      %p175 = pneg %p34
      %p176 = pneg %p58
      %p177 = pneg %p55
      %p178 = pneg %p79
      %p179 = pneg %p76
      %p180 = pneg %p100
      %p181 = pneg %p97
      %p182 = pneg %p126
      %p183 = pneg %p123
      %p184 = scmp.lt.s32.totalorder %s16, 1
      %s185 = scalar_select %p184, %s16, 1
      %s186 = smul.addr %s185, 3
      %s187 = smul.addr %s186, 4
      %s188 = scalar_lea.vmem %s4, %s187
      %p189 = scmp.lt.s32.totalorder %s16, 1
      %s190 = scalar_select %p189, %s16, 1
      %s191 = smul.addr %s190, 16
      %s192 = smul.addr %s191, 4
      %s193 = scalar_lea.vmem %s0, %s192
      %p194 = scmp.lt.s32.totalorder %s16, 1
      %s195 = scalar_select %p194, %s16, 1
      %s196 = smul.addr %s195, 3
      %s197 = smul.addr %s196, 4
      %s198 = scalar_lea.vmem %s4, %s197
      %v200 = vld [vmem:[%s193] sm:$0xff]
      %v201 = vld [vmem:[%s193 + $0x8] sm:$0xff]
      %v202 = vld [vmem:[%s193 + $0x10] sm:$0xff]
      %v203 = vld [vmem:[%s193 + $0x18] sm:$0xff]
      %v204 = vld [vmem:[%s193 + $0x20] sm:$0xff]
      %v205 = vld [vmem:[%s193 + $0x28] sm:$0xff]
      %v206 = vld [vmem:[%s193 + $0x30] sm:$0xff]
      %v207 = vld [vmem:[%s193 + $0x38] sm:$0xff]
      %v208 = vld [vmem:[%s1] sm:$0xf]
      %s209 = scalar_lea.vmem %s1, 4
      %v210 = vld [vmem:[%s209] sm:$0xf]
      %v219 = vunpack.c.l.b16 %v200
      %v220 = vunpack.c.h.b16 %v200
      %v221 = vunpack.c.l.b16 %v201
      %v222 = vunpack.c.h.b16 %v201
      %v223 = vunpack.c.l.b16 %v202
      %v224 = vunpack.c.h.b16 %v202
      %v225 = vunpack.c.l.b16 %v203
      %v226 = vunpack.c.h.b16 %v203
      %v227 = vunpack.c.l.b16 %v204
      %v228 = vunpack.c.h.b16 %v204
      %v229 = vunpack.c.l.b16 %v205
      %v230 = vunpack.c.h.b16 %v205
      %v231 = vunpack.c.l.b16 %v206
      %v232 = vunpack.c.h.b16 %v206
      %v233 = vunpack.c.l.b16 %v207
      %v234 = vunpack.c.h.b16 %v207
      %v235 = vpack.c.b16 %v223, %v219
      %v236 = vpack.c.b16 %v224, %v220
      %v237 = vpack.c.b16 %v225, %v221
      %v238 = vpack.c.b16 %v226, %v222
      %v239 = vpack.c.b16 %v231, %v227
      %v240 = vpack.c.b16 %v232, %v228
      %v241 = vpack.c.b16 %v233, %v229
      %v242 = vpack.c.b16 %v234, %v230
      %243 = vrot.lane.b32.xlu0 %v235, 127
      %v244 = vpop.permute.xlu0 %243
      %245 = vrot.lane.b32.xlu0 %v236, 127
      %v246 = vpop.permute.xlu0 %245
      %247 = vrot.lane.b32.xlu0 %v237, 127
      %v248 = vpop.permute.xlu0 %247
      %249 = vrot.lane.b32.xlu0 %v238, 127
      %v250 = vpop.permute.xlu0 %249
      %251 = vrot.lane.b32.xlu0 %v239, 127
      %v252 = vpop.permute.xlu0 %251
      %253 = vrot.lane.b32.xlu0 %v240, 127
      %v254 = vpop.permute.xlu0 %253
      %255 = vrot.lane.b32.xlu0 %v241, 127
      %v256 = vpop.permute.xlu0 %255
      %257 = vrot.lane.b32.xlu0 %v242, 127
      %v258 = vpop.permute.xlu0 %257
      %vm259 = vcmask 1039360
      %v260 = vsel %vm259, %v244, %v246
      %v261 = vsel %vm259, %v246, %v248
      %v262 = vsel %vm259, %v248, %v250
      %v263 = vsel %vm259, %v252, %v254
      %v264 = vsel %vm259, %v254, %v256
      %v265 = vsel %vm259, %v256, %v258
      %vm272 = vcmask 261120
      %v274 = vsel %vm272, %v210, 0
      %276 = vmatprep.subr.bf16.mxu0 %v261
      %277 = vmatpush1.bf16.msra.mxu0 %v260
      %278 = vmatprep.subr.bf16.mxu0 %v264
      %279 = vmatpush1.bf16.msra.mxu0 %v263
      %280 = vmatprep.subr.bf16.mxu0 0
      %281 = vmatpush1.bf16.msra.mxu0 0
      %282 = vmatprep.subr.bf16.mxu0 0
      %283 = vmatpush1.bf16.msra.mxu0 0
      %284 = vmatprep.subr.bf16.mxu0 0
      %285 = vmatpush1.bf16.msra.mxu0 0
      %286 = vmatprep.subr.bf16.mxu0 0
      %287 = vmatpush1.bf16.msra.mxu0 0
      %288 = vmatprep.subr.bf16.mxu0 0
      %289 = vmatpush1.bf16.msra.mxu0 0
      %290 = vmatprep.subr.bf16.mxu0 0
      %291 = vmatpush1.bf16.msra.mxu0 0
      %292 = vmatprep.subr.bf16.mxu0 0
      %293 = vmatpush1.bf16.msra.mxu0 0
      %294 = vmatprep.subr.bf16.mxu0 0
      %295 = vmatpush1.bf16.msra.mxu0 0
      %296 = vmatprep.subr.bf16.mxu0 0
      %297 = vmatpush1.bf16.msra.mxu0 0
      %298 = vmatprep.subr.bf16.mxu0 0
      %299 = vmatpush1.bf16.msra.mxu0 0
      %300 = vmatprep.subr.bf16.mxu0 0
      %301 = vmatpush1.bf16.msra.mxu0 0
      %302 = vmatprep.subr.bf16.mxu0 0
      %303 = vmatpush1.bf16.msra.mxu0 0
      %304 = vmatprep.subr.bf16.mxu0 0
      %305 = vmatpush1.bf16.msra.mxu0 0
      %306 = vmatprep.subr.bf16.mxu0 0
      %307 = vmatpush1.bf16.msra.mxu0 0
      %308 = vmatprep.mubr.bf16.mxu0 0
      %309 = vmatmul.mubr.bf16.gmra.mrb[0].mxu0 %v274
      %v310 = vpop.f32.mrb[0].mxu0
      %v311 = vadd.f32 0.0, %v310
      %v312 = vpop.f32.mrb[0].mxu0
      %v313 = vadd.f32 0.0, %v312
      %v314 = vpop.f32.mrb[0].mxu0
      %v315 = vpop.f32.mrb[0].mxu0
      %316 = vdwg.mxu0
      %317 = vmatprep.subr.bf16.mxu0 0
      %318 = vmatpush1.bf16.msra.mxu0 %v262
      %319 = vmatprep.subr.bf16.mxu0 0
      %320 = vmatpush1.bf16.msra.mxu0 %v265
      %321 = vmatprep.subr.bf16.mxu0 0
      %322 = vmatpush1.bf16.msra.mxu0 0
      %323 = vmatprep.subr.bf16.mxu0 0
      %324 = vmatpush1.bf16.msra.mxu0 0
      %325 = vmatprep.subr.bf16.mxu0 0
      %326 = vmatpush1.bf16.msra.mxu0 0
      %327 = vmatprep.subr.bf16.mxu0 0
      %328 = vmatpush1.bf16.msra.mxu0 0
      %329 = vmatprep.subr.bf16.mxu0 0
      %330 = vmatpush1.bf16.msra.mxu0 0
      %331 = vmatprep.subr.bf16.mxu0 0
      %332 = vmatpush1.bf16.msra.mxu0 0
      %333 = vmatprep.subr.bf16.mxu0 0
      %334 = vmatpush1.bf16.msra.mxu0 0
      %335 = vmatprep.subr.bf16.mxu0 0
      %336 = vmatpush1.bf16.msra.mxu0 0
      %337 = vmatprep.subr.bf16.mxu0 0
      %338 = vmatpush1.bf16.msra.mxu0 0
      %339 = vmatprep.subr.bf16.mxu0 0
      %340 = vmatpush1.bf16.msra.mxu0 0
      %341 = vmatprep.subr.bf16.mxu0 0
      %342 = vmatpush1.bf16.msra.mxu0 0
      %343 = vmatprep.subr.bf16.mxu0 0
      %344 = vmatpush1.bf16.msra.mxu0 0
      %345 = vmatprep.subr.bf16.mxu0 0
      %346 = vmatpush1.bf16.msra.mxu0 0
      %347 = vmatprep.subr.bf16.mxu0 0
      %348 = vmatpush1.bf16.msra.mxu0 0
      %349 = vmatprep.mubr.bf16.mxu0 0
      %350 = vmatmul.mubr.bf16.gmra.mrb[0].mxu0 %v274
      %v351 = vpop.f32.mrb[0].mxu0
      %v352 = vadd.f32 0.0, %v351
      %v353 = vpop.f32.mrb[0].mxu0
      %v354 = vpop.f32.mrb[0].mxu0
      %v355 = vpop.f32.mrb[0].mxu0
      %356 = vdwg.mxu0
      %v364 = vsel %vm272, %v208, 0
      %366 = vmatprep.subr.bf16.mxu0 %v236
      %367 = vmatpush1.bf16.msra.mxu0 %v235
      %368 = vmatprep.subr.bf16.mxu0 %v240
      %369 = vmatpush1.bf16.msra.mxu0 %v239
      %370 = vmatprep.subr.bf16.mxu0 0
      %371 = vmatpush1.bf16.msra.mxu0 0
      %372 = vmatprep.subr.bf16.mxu0 0
      %373 = vmatpush1.bf16.msra.mxu0 0
      %374 = vmatprep.subr.bf16.mxu0 0
      %375 = vmatpush1.bf16.msra.mxu0 0
      %376 = vmatprep.subr.bf16.mxu0 0
      %377 = vmatpush1.bf16.msra.mxu0 0
      %378 = vmatprep.subr.bf16.mxu0 0
      %379 = vmatpush1.bf16.msra.mxu0 0
      %380 = vmatprep.subr.bf16.mxu0 0
      %381 = vmatpush1.bf16.msra.mxu0 0
      %382 = vmatprep.subr.bf16.mxu0 0
      %383 = vmatpush1.bf16.msra.mxu0 0
      %384 = vmatprep.subr.bf16.mxu0 0
      %385 = vmatpush1.bf16.msra.mxu0 0
      %386 = vmatprep.subr.bf16.mxu0 0
      %387 = vmatpush1.bf16.msra.mxu0 0
      %388 = vmatprep.subr.bf16.mxu0 0
      %389 = vmatpush1.bf16.msra.mxu0 0
      %390 = vmatprep.subr.bf16.mxu0 0
      %391 = vmatpush1.bf16.msra.mxu0 0
      %392 = vmatprep.subr.bf16.mxu0 0
      %393 = vmatpush1.bf16.msra.mxu0 0
      %394 = vmatprep.subr.bf16.mxu0 0
      %395 = vmatpush1.bf16.msra.mxu0 0
      %396 = vmatprep.subr.bf16.mxu0 0
      %397 = vmatpush1.bf16.msra.mxu0 0
      %398 = vmatprep.mubr.bf16.mxu0 0
      %399 = vmatmul.mubr.bf16.gmra.mrb[0].mxu0 %v364
      %v400 = vpop.f32.mrb[0].mxu0
      %v401 = vadd.f32 %v311, %v400
      %v402 = vpop.f32.mrb[0].mxu0
      %v403 = vadd.f32 %v313, %v402
      %v404 = vpop.f32.mrb[0].mxu0
      %v405 = vpop.f32.mrb[0].mxu0
      %406 = vdwg.mxu0
      %407 = vmatprep.subr.bf16.mxu0 0
      %408 = vmatpush1.bf16.msra.mxu0 %v237
      %409 = vmatprep.subr.bf16.mxu0 0
      %410 = vmatpush1.bf16.msra.mxu0 %v241
      %411 = vmatprep.subr.bf16.mxu0 0
      %412 = vmatpush1.bf16.msra.mxu0 0
      %413 = vmatprep.subr.bf16.mxu0 0
      %414 = vmatpush1.bf16.msra.mxu0 0
      %415 = vmatprep.subr.bf16.mxu0 0
      %416 = vmatpush1.bf16.msra.mxu0 0
      %417 = vmatprep.subr.bf16.mxu0 0
      %418 = vmatpush1.bf16.msra.mxu0 0
      %419 = vmatprep.subr.bf16.mxu0 0
      %420 = vmatpush1.bf16.msra.mxu0 0
      %421 = vmatprep.subr.bf16.mxu0 0
      %422 = vmatpush1.bf16.msra.mxu0 0
      %423 = vmatprep.subr.bf16.mxu0 0
      %424 = vmatpush1.bf16.msra.mxu0 0
      %425 = vmatprep.subr.bf16.mxu0 0
      %426 = vmatpush1.bf16.msra.mxu0 0
      %427 = vmatprep.subr.bf16.mxu0 0
      %428 = vmatpush1.bf16.msra.mxu0 0
      %429 = vmatprep.subr.bf16.mxu0 0
      %430 = vmatpush1.bf16.msra.mxu0 0
      %431 = vmatprep.subr.bf16.mxu0 0
      %432 = vmatpush1.bf16.msra.mxu0 0
      %433 = vmatprep.subr.bf16.mxu0 0
      %434 = vmatpush1.bf16.msra.mxu0 0
      %435 = vmatprep.subr.bf16.mxu0 0
      %436 = vmatpush1.bf16.msra.mxu0 0
      %437 = vmatprep.subr.bf16.mxu0 0
      %438 = vmatpush1.bf16.msra.mxu0 0
      %439 = vmatprep.mubr.bf16.mxu0 0
      %440 = vmatmul.mubr.bf16.gmra.mrb[0].mxu0 %v364
      %v441 = vpop.f32.mrb[0].mxu0
      %v442 = vadd.f32 %v352, %v441
      %v443 = vpop.f32.mrb[0].mxu0
      %v444 = vpop.f32.mrb[0].mxu0
      %v445 = vpop.f32.mrb[0].mxu0
      %446 = vdwg.mxu0
      %s447 = scalar_lea.vmem %s1, 8
      %v448 = vld [vmem:[%s447] sm:$0xf]
      %449 = vrot.lane.b32.xlu0 %v235, 126
      %v450 = vpop.permute.xlu0 %449
      %451 = vrot.lane.b32.xlu0 %v236, 126
      %v452 = vpop.permute.xlu0 %451
      %453 = vrot.lane.b32.xlu0 %v237, 126
      %v454 = vpop.permute.xlu0 %453
      %455 = vrot.lane.b32.xlu0 %v238, 126
      %v456 = vpop.permute.xlu0 %455
      %457 = vrot.lane.b32.xlu0 %v239, 126
      %v458 = vpop.permute.xlu0 %457
      %459 = vrot.lane.b32.xlu0 %v240, 126
      %v460 = vpop.permute.xlu0 %459
      %461 = vrot.lane.b32.xlu0 %v241, 126
      %v462 = vpop.permute.xlu0 %461
      %463 = vrot.lane.b32.xlu0 %v242, 126
      %v464 = vpop.permute.xlu0 %463
      %vm465 = vcmask 1031168
      %v466 = vsel %vm465, %v450, %v452
      %v467 = vsel %vm465, %v452, %v454
      %v468 = vsel %vm465, %v454, %v456
      %v469 = vsel %vm465, %v458, %v460
      %v470 = vsel %vm465, %v460, %v462
      %v471 = vsel %vm465, %v462, %v464
      %v479 = vsel %vm272, %v448, 0
      %481 = vmatprep.subr.bf16.mxu0 %v467
      %482 = vmatpush1.bf16.msra.mxu0 %v466
      %483 = vmatprep.subr.bf16.mxu0 %v470
      %484 = vmatpush1.bf16.msra.mxu0 %v469
      %485 = vmatprep.subr.bf16.mxu0 0
      %486 = vmatpush1.bf16.msra.mxu0 0
      %487 = vmatprep.subr.bf16.mxu0 0
      %488 = vmatpush1.bf16.msra.mxu0 0
      %489 = vmatprep.subr.bf16.mxu0 0
      %490 = vmatpush1.bf16.msra.mxu0 0
      %491 = vmatprep.subr.bf16.mxu0 0
      %492 = vmatpush1.bf16.msra.mxu0 0
      %493 = vmatprep.subr.bf16.mxu0 0
      %494 = vmatpush1.bf16.msra.mxu0 0
      %495 = vmatprep.subr.bf16.mxu0 0
      %496 = vmatpush1.bf16.msra.mxu0 0
      %497 = vmatprep.subr.bf16.mxu0 0
      %498 = vmatpush1.bf16.msra.mxu0 0
      %499 = vmatprep.subr.bf16.mxu0 0
      %500 = vmatpush1.bf16.msra.mxu0 0
      %501 = vmatprep.subr.bf16.mxu0 0
      %502 = vmatpush1.bf16.msra.mxu0 0
      %503 = vmatprep.subr.bf16.mxu0 0
      %504 = vmatpush1.bf16.msra.mxu0 0
      %505 = vmatprep.subr.bf16.mxu0 0
      %506 = vmatpush1.bf16.msra.mxu0 0
      %507 = vmatprep.subr.bf16.mxu0 0
      %508 = vmatpush1.bf16.msra.mxu0 0
      %509 = vmatprep.subr.bf16.mxu0 0
      %510 = vmatpush1.bf16.msra.mxu0 0
      %511 = vmatprep.subr.bf16.mxu0 0
      %512 = vmatpush1.bf16.msra.mxu0 0
      %513 = vmatprep.mubr.bf16.mxu0 0
      %514 = vmatmul.mubr.bf16.gmra.mrb[0].mxu0 %v479
      %v515 = vpop.f32.mrb[0].mxu0
      %v516 = vadd.f32 0.0, %v515
      %v517 = vpop.f32.mrb[0].mxu0
      %v518 = vadd.f32 0.0, %v517
      %v519 = vpop.f32.mrb[0].mxu0
      %v520 = vpop.f32.mrb[0].mxu0
      %521 = vdwg.mxu0
      %522 = vmatprep.subr.bf16.mxu0 0
      %523 = vmatpush1.bf16.msra.mxu0 %v468
      %524 = vmatprep.subr.bf16.mxu0 0
      %525 = vmatpush1.bf16.msra.mxu0 %v471
      %526 = vmatprep.subr.bf16.mxu0 0
      %527 = vmatpush1.bf16.msra.mxu0 0
      %528 = vmatprep.subr.bf16.mxu0 0
      %529 = vmatpush1.bf16.msra.mxu0 0
      %530 = vmatprep.subr.bf16.mxu0 0
      %531 = vmatpush1.bf16.msra.mxu0 0
      %532 = vmatprep.subr.bf16.mxu0 0
      %533 = vmatpush1.bf16.msra.mxu0 0
      %534 = vmatprep.subr.bf16.mxu0 0
      %535 = vmatpush1.bf16.msra.mxu0 0
      %536 = vmatprep.subr.bf16.mxu0 0
      %537 = vmatpush1.bf16.msra.mxu0 0
      %538 = vmatprep.subr.bf16.mxu0 0
      %539 = vmatpush1.bf16.msra.mxu0 0
      %540 = vmatprep.subr.bf16.mxu0 0
      %541 = vmatpush1.bf16.msra.mxu0 0
      %542 = vmatprep.subr.bf16.mxu0 0
      %543 = vmatpush1.bf16.msra.mxu0 0
      %544 = vmatprep.subr.bf16.mxu0 0
      %545 = vmatpush1.bf16.msra.mxu0 0
      %546 = vmatprep.subr.bf16.mxu0 0
      %547 = vmatpush1.bf16.msra.mxu0 0
      %548 = vmatprep.subr.bf16.mxu0 0
      %549 = vmatpush1.bf16.msra.mxu0 0
      %550 = vmatprep.subr.bf16.mxu0 0
      %551 = vmatpush1.bf16.msra.mxu0 0
      %552 = vmatprep.subr.bf16.mxu0 0
      %553 = vmatpush1.bf16.msra.mxu0 0
      %554 = vmatprep.mubr.bf16.mxu0 0
      %555 = vmatmul.mubr.bf16.gmra.mrb[0].mxu0 %v479
      %v556 = vpop.f32.mrb[0].mxu0
      %v557 = vadd.f32 0.0, %v556
      %v558 = vpop.f32.mrb[0].mxu0
      %v559 = vpop.f32.mrb[0].mxu0
      %v560 = vpop.f32.mrb[0].mxu0
      %561 = vdwg.mxu0
      %v562 = vadd.f32 %v401, %v516
      %v563 = vadd.f32 %v403, %v518
      %v564 = vadd.f32 %v442, %v557
      %s565 = scalar_lea.vmem %s1, 12
      %v566 = vld [vmem:[%s565] sm:$0xf]
      %567 = vrot.lane.b32.xlu0 %v235, 110
      %v568 = vpop.permute.xlu0 %567
      %569 = vrot.lane.b32.xlu0 %v236, 110
      %v570 = vpop.permute.xlu0 %569
      %571 = vrot.lane.b32.xlu0 %v237, 110
      %v572 = vpop.permute.xlu0 %571
      %573 = vrot.lane.b32.xlu0 %v238, 110
      %v574 = vpop.permute.xlu0 %573
      %575 = vrot.lane.b32.xlu0 %v239, 110
      %v576 = vpop.permute.xlu0 %575
      %577 = vrot.lane.b32.xlu0 %v240, 110
      %v578 = vpop.permute.xlu0 %577
      %579 = vrot.lane.b32.xlu0 %v241, 110
      %v580 = vpop.permute.xlu0 %579
      %581 = vrot.lane.b32.xlu0 %v242, 110
      %v582 = vpop.permute.xlu0 %581
      %vm583 = vcmask 900096
      %v584 = vsel %vm583, %v568, %v570
      %v585 = vsel %vm583, %v570, %v572
      %v586 = vsel %vm583, %v572, %v574
      %v587 = vsel %vm583, %v576, %v578
      %v588 = vsel %vm583, %v578, %v580
      %v589 = vsel %vm583, %v580, %v582
      %v597 = vsel %vm272, %v566, 0
      %599 = vmatprep.subr.bf16.mxu0 %v585
      %600 = vmatpush1.bf16.msra.mxu0 %v584
      %601 = vmatprep.subr.bf16.mxu0 %v588
      %602 = vmatpush1.bf16.msra.mxu0 %v587
      %603 = vmatprep.subr.bf16.mxu0 0
      %604 = vmatpush1.bf16.msra.mxu0 0
      %605 = vmatprep.subr.bf16.mxu0 0
      %606 = vmatpush1.bf16.msra.mxu0 0
      %607 = vmatprep.subr.bf16.mxu0 0
      %608 = vmatpush1.bf16.msra.mxu0 0
      %609 = vmatprep.subr.bf16.mxu0 0
      %610 = vmatpush1.bf16.msra.mxu0 0
      %611 = vmatprep.subr.bf16.mxu0 0
      %612 = vmatpush1.bf16.msra.mxu0 0
      %613 = vmatprep.subr.bf16.mxu0 0
      %614 = vmatpush1.bf16.msra.mxu0 0
      %615 = vmatprep.subr.bf16.mxu0 0
      %616 = vmatpush1.bf16.msra.mxu0 0
      %617 = vmatprep.subr.bf16.mxu0 0
      %618 = vmatpush1.bf16.msra.mxu0 0
      %619 = vmatprep.subr.bf16.mxu0 0
      %620 = vmatpush1.bf16.msra.mxu0 0
      %621 = vmatprep.subr.bf16.mxu0 0
      %622 = vmatpush1.bf16.msra.mxu0 0
      %623 = vmatprep.subr.bf16.mxu0 0
      %624 = vmatpush1.bf16.msra.mxu0 0
      %625 = vmatprep.subr.bf16.mxu0 0
      %626 = vmatpush1.bf16.msra.mxu0 0
      %627 = vmatprep.subr.bf16.mxu0 0
      %628 = vmatpush1.bf16.msra.mxu0 0
      %629 = vmatprep.subr.bf16.mxu0 0
      %630 = vmatpush1.bf16.msra.mxu0 0
      %631 = vmatprep.mubr.bf16.mxu0 0
      %632 = vmatmul.mubr.bf16.gmra.mrb[0].mxu0 %v597
      %v633 = vpop.f32.mrb[0].mxu0
      %v634 = vadd.f32 0.0, %v633
      %v635 = vpop.f32.mrb[0].mxu0
      %v636 = vadd.f32 0.0, %v635
      %v637 = vpop.f32.mrb[0].mxu0
      %v638 = vpop.f32.mrb[0].mxu0
      %639 = vdwg.mxu0
      %640 = vmatprep.subr.bf16.mxu0 0
      %641 = vmatpush1.bf16.msra.mxu0 %v586
      %642 = vmatprep.subr.bf16.mxu0 0
      %643 = vmatpush1.bf16.msra.mxu0 %v589
      %644 = vmatprep.subr.bf16.mxu0 0
      %645 = vmatpush1.bf16.msra.mxu0 0
      %646 = vmatprep.subr.bf16.mxu0 0
      %647 = vmatpush1.bf16.msra.mxu0 0
      %648 = vmatprep.subr.bf16.mxu0 0
      %649 = vmatpush1.bf16.msra.mxu0 0
      %650 = vmatprep.subr.bf16.mxu0 0
      %651 = vmatpush1.bf16.msra.mxu0 0
      %652 = vmatprep.subr.bf16.mxu0 0
      %653 = vmatpush1.bf16.msra.mxu0 0
      %654 = vmatprep.subr.bf16.mxu0 0
      %655 = vmatpush1.bf16.msra.mxu0 0
      %656 = vmatprep.subr.bf16.mxu0 0
      %657 = vmatpush1.bf16.msra.mxu0 0
      %658 = vmatprep.subr.bf16.mxu0 0
      %659 = vmatpush1.bf16.msra.mxu0 0
      %660 = vmatprep.subr.bf16.mxu0 0
      %661 = vmatpush1.bf16.msra.mxu0 0
      %662 = vmatprep.subr.bf16.mxu0 0
      %663 = vmatpush1.bf16.msra.mxu0 0
      %664 = vmatprep.subr.bf16.mxu0 0
      %665 = vmatpush1.bf16.msra.mxu0 0
      %666 = vmatprep.subr.bf16.mxu0 0
      %667 = vmatpush1.bf16.msra.mxu0 0
      %668 = vmatprep.subr.bf16.mxu0 0
      %669 = vmatpush1.bf16.msra.mxu0 0
      %670 = vmatprep.subr.bf16.mxu0 0
      %671 = vmatpush1.bf16.msra.mxu0 0
      %672 = vmatprep.mubr.bf16.mxu0 0
      %673 = vmatmul.mubr.bf16.gmra.mrb[0].mxu0 %v597
      %v674 = vpop.f32.mrb[0].mxu0
      %v675 = vadd.f32 0.0, %v674
      %v676 = vpop.f32.mrb[0].mxu0
      %v677 = vpop.f32.mrb[0].mxu0
      %v678 = vpop.f32.mrb[0].mxu0
      %679 = vdwg.mxu0
      %v680 = vadd.f32 %v562, %v634
      %v681 = vadd.f32 %v563, %v636
      %v682 = vadd.f32 %v564, %v675
      %s683 = scalar_lea.vmem %s1, 16
      %v684 = vld [vmem:[%s683] sm:$0xf]
      %685 = vrot.lane.b32.xlu0 %v235, 109
      %v686 = vpop.permute.xlu0 %685
      %687 = vrot.lane.b32.xlu0 %v236, 109
      %v688 = vpop.permute.xlu0 %687
      %689 = vrot.lane.b32.xlu0 %v237, 109
      %v690 = vpop.permute.xlu0 %689
      %691 = vrot.lane.b32.xlu0 %v238, 109
      %v692 = vpop.permute.xlu0 %691
      %693 = vrot.lane.b32.xlu0 %v239, 109
      %v694 = vpop.permute.xlu0 %693
      %695 = vrot.lane.b32.xlu0 %v240, 109
      %v696 = vpop.permute.xlu0 %695
      %697 = vrot.lane.b32.xlu0 %v241, 109
      %v698 = vpop.permute.xlu0 %697
      %699 = vrot.lane.b32.xlu0 %v242, 109
      %v700 = vpop.permute.xlu0 %699
      %vm701 = vcmask 891904
      %v702 = vsel %vm701, %v686, %v688
      %v703 = vsel %vm701, %v688, %v690
      %v704 = vsel %vm701, %v690, %v692
      %v705 = vsel %vm701, %v694, %v696
      %v706 = vsel %vm701, %v696, %v698
      %v707 = vsel %vm701, %v698, %v700
      %v715 = vsel %vm272, %v684, 0
      %717 = vmatprep.subr.bf16.mxu0 %v703
      %718 = vmatpush1.bf16.msra.mxu0 %v702
      %719 = vmatprep.subr.bf16.mxu0 %v706
      %720 = vmatpush1.bf16.msra.mxu0 %v705
      %721 = vmatprep.subr.bf16.mxu0 0
      %722 = vmatpush1.bf16.msra.mxu0 0
      %723 = vmatprep.subr.bf16.mxu0 0
      %724 = vmatpush1.bf16.msra.mxu0 0
      %725 = vmatprep.subr.bf16.mxu0 0
      %726 = vmatpush1.bf16.msra.mxu0 0
      %727 = vmatprep.subr.bf16.mxu0 0
      %728 = vmatpush1.bf16.msra.mxu0 0
      %729 = vmatprep.subr.bf16.mxu0 0
      %730 = vmatpush1.bf16.msra.mxu0 0
      %731 = vmatprep.subr.bf16.mxu0 0
      %732 = vmatpush1.bf16.msra.mxu0 0
      %733 = vmatprep.subr.bf16.mxu0 0
      %734 = vmatpush1.bf16.msra.mxu0 0
      %735 = vmatprep.subr.bf16.mxu0 0
      %736 = vmatpush1.bf16.msra.mxu0 0
      %737 = vmatprep.subr.bf16.mxu0 0
      %738 = vmatpush1.bf16.msra.mxu0 0
      %739 = vmatprep.subr.bf16.mxu0 0
      %740 = vmatpush1.bf16.msra.mxu0 0
      %741 = vmatprep.subr.bf16.mxu0 0
      %742 = vmatpush1.bf16.msra.mxu0 0
      %743 = vmatprep.subr.bf16.mxu0 0
      %744 = vmatpush1.bf16.msra.mxu0 0
      %745 = vmatprep.subr.bf16.mxu0 0
      %746 = vmatpush1.bf16.msra.mxu0 0
      %747 = vmatprep.subr.bf16.mxu0 0
      %748 = vmatpush1.bf16.msra.mxu0 0
      %749 = vmatprep.mubr.bf16.mxu0 0
      %750 = vmatmul.mubr.bf16.gmra.mrb[0].mxu0 %v715
      %v751 = vpop.f32.mrb[0].mxu0
      %v752 = vadd.f32 0.0, %v751
      %v753 = vpop.f32.mrb[0].mxu0
      %v754 = vadd.f32 0.0, %v753
      %v755 = vpop.f32.mrb[0].mxu0
      %v756 = vpop.f32.mrb[0].mxu0
      %757 = vdwg.mxu0
      %758 = vmatprep.subr.bf16.mxu0 0
      %759 = vmatpush1.bf16.msra.mxu0 %v704
      %760 = vmatprep.subr.bf16.mxu0 0
      %761 = vmatpush1.bf16.msra.mxu0 %v707
      %762 = vmatprep.subr.bf16.mxu0 0
      %763 = vmatpush1.bf16.msra.mxu0 0
      %764 = vmatprep.subr.bf16.mxu0 0
      %765 = vmatpush1.bf16.msra.mxu0 0
      %766 = vmatprep.subr.bf16.mxu0 0
      %767 = vmatpush1.bf16.msra.mxu0 0
      %768 = vmatprep.subr.bf16.mxu0 0
      %769 = vmatpush1.bf16.msra.mxu0 0
      %770 = vmatprep.subr.bf16.mxu0 0
      %771 = vmatpush1.bf16.msra.mxu0 0
      %772 = vmatprep.subr.bf16.mxu0 0
      %773 = vmatpush1.bf16.msra.mxu0 0
      %774 = vmatprep.subr.bf16.mxu0 0
      %775 = vmatpush1.bf16.msra.mxu0 0
      %776 = vmatprep.subr.bf16.mxu0 0
      %777 = vmatpush1.bf16.msra.mxu0 0
      %778 = vmatprep.subr.bf16.mxu0 0
      %779 = vmatpush1.bf16.msra.mxu0 0
      %780 = vmatprep.subr.bf16.mxu0 0
      %781 = vmatpush1.bf16.msra.mxu0 0
      %782 = vmatprep.subr.bf16.mxu0 0
      %783 = vmatpush1.bf16.msra.mxu0 0
      %784 = vmatprep.subr.bf16.mxu0 0
      %785 = vmatpush1.bf16.msra.mxu0 0
      %786 = vmatprep.subr.bf16.mxu0 0
      %787 = vmatpush1.bf16.msra.mxu0 0
      %788 = vmatprep.subr.bf16.mxu0 0
      %789 = vmatpush1.bf16.msra.mxu0 0
      %790 = vmatprep.mubr.bf16.mxu0 0
      %791 = vmatmul.mubr.bf16.gmra.mrb[0].mxu0 %v715
      %v792 = vpop.f32.mrb[0].mxu0
      %v793 = vadd.f32 0.0, %v792
      %v794 = vpop.f32.mrb[0].mxu0
      %v795 = vpop.f32.mrb[0].mxu0
      %v796 = vpop.f32.mrb[0].mxu0
      %797 = vdwg.mxu0
      %v798 = vadd.f32 %v680, %v752
      %v799 = vadd.f32 %v681, %v754
      %v800 = vadd.f32 %v682, %v793
      %s801 = scalar_lea.vmem %s1, 20
      %v802 = vld [vmem:[%s801] sm:$0xf]
      %803 = vrot.lane.b32.xlu0 %v235, 108
      %v804 = vpop.permute.xlu0 %803
      %805 = vrot.lane.b32.xlu0 %v236, 108
      %v806 = vpop.permute.xlu0 %805
      %807 = vrot.lane.b32.xlu0 %v237, 108
      %v808 = vpop.permute.xlu0 %807
      %809 = vrot.lane.b32.xlu0 %v238, 108
      %v810 = vpop.permute.xlu0 %809
      %811 = vrot.lane.b32.xlu0 %v239, 108
      %v812 = vpop.permute.xlu0 %811
      %813 = vrot.lane.b32.xlu0 %v240, 108
      %v814 = vpop.permute.xlu0 %813
      %815 = vrot.lane.b32.xlu0 %v241, 108
      %v816 = vpop.permute.xlu0 %815
      %817 = vrot.lane.b32.xlu0 %v242, 108
      %v818 = vpop.permute.xlu0 %817
      %vm819 = vcmask 883712
      %v820 = vsel %vm819, %v804, %v806
      %v821 = vsel %vm819, %v806, %v808
      %v822 = vsel %vm819, %v808, %v810
      %v823 = vsel %vm819, %v812, %v814
      %v824 = vsel %vm819, %v814, %v816
      %v825 = vsel %vm819, %v816, %v818
      %v833 = vsel %vm272, %v802, 0
      %835 = vmatprep.subr.bf16.mxu0 %v821
      %836 = vmatpush1.bf16.msra.mxu0 %v820
      %837 = vmatprep.subr.bf16.mxu0 %v824
      %838 = vmatpush1.bf16.msra.mxu0 %v823
      %839 = vmatprep.subr.bf16.mxu0 0
      %840 = vmatpush1.bf16.msra.mxu0 0
      %841 = vmatprep.subr.bf16.mxu0 0
      %842 = vmatpush1.bf16.msra.mxu0 0
      %843 = vmatprep.subr.bf16.mxu0 0
      %844 = vmatpush1.bf16.msra.mxu0 0
      %845 = vmatprep.subr.bf16.mxu0 0
      %846 = vmatpush1.bf16.msra.mxu0 0
      %847 = vmatprep.subr.bf16.mxu0 0
      %848 = vmatpush1.bf16.msra.mxu0 0
      %849 = vmatprep.subr.bf16.mxu0 0
      %850 = vmatpush1.bf16.msra.mxu0 0
      %851 = vmatprep.subr.bf16.mxu0 0
      %852 = vmatpush1.bf16.msra.mxu0 0
      %853 = vmatprep.subr.bf16.mxu0 0
      %854 = vmatpush1.bf16.msra.mxu0 0
      %855 = vmatprep.subr.bf16.mxu0 0
      %856 = vmatpush1.bf16.msra.mxu0 0
      %857 = vmatprep.subr.bf16.mxu0 0
      %858 = vmatpush1.bf16.msra.mxu0 0
      %859 = vmatprep.subr.bf16.mxu0 0
      %860 = vmatpush1.bf16.msra.mxu0 0
      %861 = vmatprep.subr.bf16.mxu0 0
      %862 = vmatpush1.bf16.msra.mxu0 0
      %863 = vmatprep.subr.bf16.mxu0 0
      %864 = vmatpush1.bf16.msra.mxu0 0
      %865 = vmatprep.subr.bf16.mxu0 0
      %866 = vmatpush1.bf16.msra.mxu0 0
      %867 = vmatprep.mubr.bf16.mxu0 0
      %868 = vmatmul.mubr.bf16.gmra.mrb[0].mxu0 %v833
      %v869 = vpop.f32.mrb[0].mxu0
      %v870 = vadd.f32 0.0, %v869
      %v871 = vpop.f32.mrb[0].mxu0
      %v872 = vadd.f32 0.0, %v871
      %v873 = vpop.f32.mrb[0].mxu0
      %v874 = vpop.f32.mrb[0].mxu0
      %875 = vdwg.mxu0
      %876 = vmatprep.subr.bf16.mxu0 0
      %877 = vmatpush1.bf16.msra.mxu0 %v822
      %878 = vmatprep.subr.bf16.mxu0 0
      %879 = vmatpush1.bf16.msra.mxu0 %v825
      %880 = vmatprep.subr.bf16.mxu0 0
      %881 = vmatpush1.bf16.msra.mxu0 0
      %882 = vmatprep.subr.bf16.mxu0 0
      %883 = vmatpush1.bf16.msra.mxu0 0
      %884 = vmatprep.subr.bf16.mxu0 0
      %885 = vmatpush1.bf16.msra.mxu0 0
      %886 = vmatprep.subr.bf16.mxu0 0
      %887 = vmatpush1.bf16.msra.mxu0 0
      %888 = vmatprep.subr.bf16.mxu0 0
      %889 = vmatpush1.bf16.msra.mxu0 0
      %890 = vmatprep.subr.bf16.mxu0 0
      %891 = vmatpush1.bf16.msra.mxu0 0
      %892 = vmatprep.subr.bf16.mxu0 0
      %893 = vmatpush1.bf16.msra.mxu0 0
      %894 = vmatprep.subr.bf16.mxu0 0
      %895 = vmatpush1.bf16.msra.mxu0 0
      %896 = vmatprep.subr.bf16.mxu0 0
      %897 = vmatpush1.bf16.msra.mxu0 0
      %898 = vmatprep.subr.bf16.mxu0 0
      %899 = vmatpush1.bf16.msra.mxu0 0
      %900 = vmatprep.subr.bf16.mxu0 0
      %901 = vmatpush1.bf16.msra.mxu0 0
      %902 = vmatprep.subr.bf16.mxu0 0
      %903 = vmatpush1.bf16.msra.mxu0 0
      %904 = vmatprep.subr.bf16.mxu0 0
      %905 = vmatpush1.bf16.msra.mxu0 0
      %906 = vmatprep.subr.bf16.mxu0 0
      %907 = vmatpush1.bf16.msra.mxu0 0
      %908 = vmatprep.mubr.bf16.mxu0 0
      %909 = vmatmul.mubr.bf16.gmra.mrb[0].mxu0 %v833
      %v910 = vpop.f32.mrb[0].mxu0
      %v911 = vadd.f32 0.0, %v910
      %v912 = vpop.f32.mrb[0].mxu0
      %v913 = vpop.f32.mrb[0].mxu0
      %v914 = vpop.f32.mrb[0].mxu0
      %915 = vdwg.mxu0
      %v916 = vadd.f32 %v798, %v870
      %v917 = vadd.f32 %v799, %v872
      %v918 = vadd.f32 %v800, %v911
      %s919 = scalar_lea.vmem %s1, 24
      %v920 = vld [vmem:[%s919] sm:$0xf]
      %921 = vrot.lane.b32.xlu0 %v235, 92
      %v922 = vpop.permute.xlu0 %921
      %923 = vrot.lane.b32.xlu0 %v236, 92
      %v924 = vpop.permute.xlu0 %923
      %925 = vrot.lane.b32.xlu0 %v237, 92
      %v926 = vpop.permute.xlu0 %925
      %927 = vrot.lane.b32.xlu0 %v238, 92
      %v928 = vpop.permute.xlu0 %927
      %929 = vrot.lane.b32.xlu0 %v239, 92
      %v930 = vpop.permute.xlu0 %929
      %931 = vrot.lane.b32.xlu0 %v240, 92
      %v932 = vpop.permute.xlu0 %931
      %933 = vrot.lane.b32.xlu0 %v241, 92
      %v934 = vpop.permute.xlu0 %933
      %935 = vrot.lane.b32.xlu0 %v242, 92
      %v936 = vpop.permute.xlu0 %935
      %vm937 = vcmask 752640
      %v938 = vsel %vm937, %v922, %v924
      %v939 = vsel %vm937, %v924, %v926
      %v940 = vsel %vm937, %v926, %v928
      %v941 = vsel %vm937, %v930, %v932
      %v942 = vsel %vm937, %v932, %v934
      %v943 = vsel %vm937, %v934, %v936
      %v951 = vsel %vm272, %v920, 0
      %953 = vmatprep.subr.bf16.mxu0 %v939
      %954 = vmatpush1.bf16.msra.mxu0 %v938
      %955 = vmatprep.subr.bf16.mxu0 %v942
      %956 = vmatpush1.bf16.msra.mxu0 %v941
      %957 = vmatprep.subr.bf16.mxu0 0
      %958 = vmatpush1.bf16.msra.mxu0 0
      %959 = vmatprep.subr.bf16.mxu0 0
      %960 = vmatpush1.bf16.msra.mxu0 0
      %961 = vmatprep.subr.bf16.mxu0 0
      %962 = vmatpush1.bf16.msra.mxu0 0
      %963 = vmatprep.subr.bf16.mxu0 0
      %964 = vmatpush1.bf16.msra.mxu0 0
      %965 = vmatprep.subr.bf16.mxu0 0
      %966 = vmatpush1.bf16.msra.mxu0 0
      %967 = vmatprep.subr.bf16.mxu0 0
      %968 = vmatpush1.bf16.msra.mxu0 0
      %969 = vmatprep.subr.bf16.mxu0 0
      %970 = vmatpush1.bf16.msra.mxu0 0
      %971 = vmatprep.subr.bf16.mxu0 0
      %972 = vmatpush1.bf16.msra.mxu0 0
      %973 = vmatprep.subr.bf16.mxu0 0
      %974 = vmatpush1.bf16.msra.mxu0 0
      %975 = vmatprep.subr.bf16.mxu0 0
      %976 = vmatpush1.bf16.msra.mxu0 0
      %977 = vmatprep.subr.bf16.mxu0 0
      %978 = vmatpush1.bf16.msra.mxu0 0
      %979 = vmatprep.subr.bf16.mxu0 0
      %980 = vmatpush1.bf16.msra.mxu0 0
      %981 = vmatprep.subr.bf16.mxu0 0
      %982 = vmatpush1.bf16.msra.mxu0 0
      %983 = vmatprep.subr.bf16.mxu0 0
      %984 = vmatpush1.bf16.msra.mxu0 0
      %985 = vmatprep.mubr.bf16.mxu0 0
      %986 = vmatmul.mubr.bf16.gmra.mrb[0].mxu0 %v951
      %v987 = vpop.f32.mrb[0].mxu0
      %v988 = vadd.f32 0.0, %v987
      %v989 = vpop.f32.mrb[0].mxu0
      %v990 = vadd.f32 0.0, %v989
      %v991 = vpop.f32.mrb[0].mxu0
      %v992 = vpop.f32.mrb[0].mxu0
      %993 = vdwg.mxu0
      %994 = vmatprep.subr.bf16.mxu0 0
      %995 = vmatpush1.bf16.msra.mxu0 %v940
      %996 = vmatprep.subr.bf16.mxu0 0
      %997 = vmatpush1.bf16.msra.mxu0 %v943
      %998 = vmatprep.subr.bf16.mxu0 0
      %999 = vmatpush1.bf16.msra.mxu0 0
      %1000 = vmatprep.subr.bf16.mxu0 0
      %1001 = vmatpush1.bf16.msra.mxu0 0
      %1002 = vmatprep.subr.bf16.mxu0 0
      %1003 = vmatpush1.bf16.msra.mxu0 0
      %1004 = vmatprep.subr.bf16.mxu0 0
      %1005 = vmatpush1.bf16.msra.mxu0 0
      %1006 = vmatprep.subr.bf16.mxu0 0
      %1007 = vmatpush1.bf16.msra.mxu0 0
      %1008 = vmatprep.subr.bf16.mxu0 0
      %1009 = vmatpush1.bf16.msra.mxu0 0
      %1010 = vmatprep.subr.bf16.mxu0 0
      %1011 = vmatpush1.bf16.msra.mxu0 0
      %1012 = vmatprep.subr.bf16.mxu0 0
      %1013 = vmatpush1.bf16.msra.mxu0 0
      %1014 = vmatprep.subr.bf16.mxu0 0
      %1015 = vmatpush1.bf16.msra.mxu0 0
      %1016 = vmatprep.subr.bf16.mxu0 0
      %1017 = vmatpush1.bf16.msra.mxu0 0
      %1018 = vmatprep.subr.bf16.mxu0 0
      %1019 = vmatpush1.bf16.msra.mxu0 0
      %1020 = vmatprep.subr.bf16.mxu0 0
      %1021 = vmatpush1.bf16.msra.mxu0 0
      %1022 = vmatprep.subr.bf16.mxu0 0
      %1023 = vmatpush1.bf16.msra.mxu0 0
      %1024 = vmatprep.subr.bf16.mxu0 0
      %1025 = vmatpush1.bf16.msra.mxu0 0
      %1026 = vmatprep.mubr.bf16.mxu0 0
      %1027 = vmatmul.mubr.bf16.gmra.mrb[0].mxu0 %v951
      %v1028 = vpop.f32.mrb[0].mxu0
      %v1029 = vadd.f32 0.0, %v1028
      %v1030 = vpop.f32.mrb[0].mxu0
      %v1031 = vpop.f32.mrb[0].mxu0
      %v1032 = vpop.f32.mrb[0].mxu0
      %1033 = vdwg.mxu0
      %v1034 = vadd.f32 %v916, %v988
      %v1035 = vadd.f32 %v917, %v990
      %v1036 = vadd.f32 %v918, %v1029
      %s1037 = scalar_lea.vmem %s1, 28
      %v1038 = vld [vmem:[%s1037] sm:$0xf]
      %1039 = vrot.lane.b32.xlu0 %v235, 91
      %v1040 = vpop.permute.xlu0 %1039
      %1041 = vrot.lane.b32.xlu0 %v236, 91
      %v1042 = vpop.permute.xlu0 %1041
      %1043 = vrot.lane.b32.xlu0 %v237, 91
      %v1044 = vpop.permute.xlu0 %1043
      %1045 = vrot.lane.b32.xlu0 %v238, 91
      %v1046 = vpop.permute.xlu0 %1045
      %1047 = vrot.lane.b32.xlu0 %v239, 91
      %v1048 = vpop.permute.xlu0 %1047
      %1049 = vrot.lane.b32.xlu0 %v240, 91
      %v1050 = vpop.permute.xlu0 %1049
      %1051 = vrot.lane.b32.xlu0 %v241, 91
      %v1052 = vpop.permute.xlu0 %1051
      %1053 = vrot.lane.b32.xlu0 %v242, 91
      %v1054 = vpop.permute.xlu0 %1053
      %vm1055 = vcmask 744448
      %v1056 = vsel %vm1055, %v1040, %v1042
      %v1057 = vsel %vm1055, %v1042, %v1044
      %v1058 = vsel %vm1055, %v1044, %v1046
      %v1059 = vsel %vm1055, %v1048, %v1050
      %v1060 = vsel %vm1055, %v1050, %v1052
      %v1061 = vsel %vm1055, %v1052, %v1054
      %v1069 = vsel %vm272, %v1038, 0
      %1071 = vmatprep.subr.bf16.mxu0 %v1057
      %1072 = vmatpush1.bf16.msra.mxu0 %v1056
      %1073 = vmatprep.subr.bf16.mxu0 %v1060
      %1074 = vmatpush1.bf16.msra.mxu0 %v1059
      %1075 = vmatprep.subr.bf16.mxu0 0
      %1076 = vmatpush1.bf16.msra.mxu0 0
      %1077 = vmatprep.subr.bf16.mxu0 0
      %1078 = vmatpush1.bf16.msra.mxu0 0
      %1079 = vmatprep.subr.bf16.mxu0 0
      %1080 = vmatpush1.bf16.msra.mxu0 0
      %1081 = vmatprep.subr.bf16.mxu0 0
      %1082 = vmatpush1.bf16.msra.mxu0 0
      %1083 = vmatprep.subr.bf16.mxu0 0
      %1084 = vmatpush1.bf16.msra.mxu0 0
      %1085 = vmatprep.subr.bf16.mxu0 0
      %1086 = vmatpush1.bf16.msra.mxu0 0
      %1087 = vmatprep.subr.bf16.mxu0 0
      %1088 = vmatpush1.bf16.msra.mxu0 0
      %1089 = vmatprep.subr.bf16.mxu0 0
      %1090 = vmatpush1.bf16.msra.mxu0 0
      %1091 = vmatprep.subr.bf16.mxu0 0
      %1092 = vmatpush1.bf16.msra.mxu0 0
      %1093 = vmatprep.subr.bf16.mxu0 0
      %1094 = vmatpush1.bf16.msra.mxu0 0
      %1095 = vmatprep.subr.bf16.mxu0 0
      %1096 = vmatpush1.bf16.msra.mxu0 0
      %1097 = vmatprep.subr.bf16.mxu0 0
      %1098 = vmatpush1.bf16.msra.mxu0 0
      %1099 = vmatprep.subr.bf16.mxu0 0
      %1100 = vmatpush1.bf16.msra.mxu0 0
      %1101 = vmatprep.subr.bf16.mxu0 0
      %1102 = vmatpush1.bf16.msra.mxu0 0
      %1103 = vmatprep.mubr.bf16.mxu0 0
      %1104 = vmatmul.mubr.bf16.gmra.mrb[0].mxu0 %v1069
      %v1105 = vpop.f32.mrb[0].mxu0
      %v1106 = vadd.f32 0.0, %v1105
      %v1107 = vpop.f32.mrb[0].mxu0
      %v1108 = vadd.f32 0.0, %v1107
      %v1109 = vpop.f32.mrb[0].mxu0
      %v1110 = vpop.f32.mrb[0].mxu0
      %1111 = vdwg.mxu0
      %1112 = vmatprep.subr.bf16.mxu0 0
      %1113 = vmatpush1.bf16.msra.mxu0 %v1058
      %1114 = vmatprep.subr.bf16.mxu0 0
      %1115 = vmatpush1.bf16.msra.mxu0 %v1061
      %1116 = vmatprep.subr.bf16.mxu0 0
      %1117 = vmatpush1.bf16.msra.mxu0 0
      %1118 = vmatprep.subr.bf16.mxu0 0
      %1119 = vmatpush1.bf16.msra.mxu0 0
      %1120 = vmatprep.subr.bf16.mxu0 0
      %1121 = vmatpush1.bf16.msra.mxu0 0
      %1122 = vmatprep.subr.bf16.mxu0 0
      %1123 = vmatpush1.bf16.msra.mxu0 0
      %1124 = vmatprep.subr.bf16.mxu0 0
      %1125 = vmatpush1.bf16.msra.mxu0 0
      %1126 = vmatprep.subr.bf16.mxu0 0
      %1127 = vmatpush1.bf16.msra.mxu0 0
      %1128 = vmatprep.subr.bf16.mxu0 0
      %1129 = vmatpush1.bf16.msra.mxu0 0
      %1130 = vmatprep.subr.bf16.mxu0 0
      %1131 = vmatpush1.bf16.msra.mxu0 0
      %1132 = vmatprep.subr.bf16.mxu0 0
      %1133 = vmatpush1.bf16.msra.mxu0 0
      %1134 = vmatprep.subr.bf16.mxu0 0
      %1135 = vmatpush1.bf16.msra.mxu0 0
      %1136 = vmatprep.subr.bf16.mxu0 0
      %1137 = vmatpush1.bf16.msra.mxu0 0
      %1138 = vmatprep.subr.bf16.mxu0 0
      %1139 = vmatpush1.bf16.msra.mxu0 0
      %1140 = vmatprep.subr.bf16.mxu0 0
      %1141 = vmatpush1.bf16.msra.mxu0 0
      %1142 = vmatprep.subr.bf16.mxu0 0
      %1143 = vmatpush1.bf16.msra.mxu0 0
      %1144 = vmatprep.mubr.bf16.mxu0 0
      %1145 = vmatmul.mubr.bf16.gmra.mrb[0].mxu0 %v1069
      %v1146 = vpop.f32.mrb[0].mxu0
      %v1147 = vadd.f32 0.0, %v1146
      %v1148 = vpop.f32.mrb[0].mxu0
      %v1149 = vpop.f32.mrb[0].mxu0
      %v1150 = vpop.f32.mrb[0].mxu0
      %1151 = vdwg.mxu0
      %v1152 = vadd.f32 %v1034, %v1106
      %v1153 = vadd.f32 %v1035, %v1108
      %v1154 = vadd.f32 %v1036, %v1147
      %s1155 = scalar_lea.vmem %s1, 32
      %v1156 = vld [vmem:[%s1155] sm:$0xf]
      %1157 = vrot.lane.b32.xlu0 %v235, 90
      %v1158 = vpop.permute.xlu0 %1157
      %1159 = vrot.lane.b32.xlu0 %v236, 90
      %v1160 = vpop.permute.xlu0 %1159
      %1161 = vrot.lane.b32.xlu0 %v237, 90
      %v1162 = vpop.permute.xlu0 %1161
      %1163 = vrot.lane.b32.xlu0 %v238, 90
      %v1164 = vpop.permute.xlu0 %1163
      %1165 = vrot.lane.b32.xlu0 %v239, 90
      %v1166 = vpop.permute.xlu0 %1165
      %1167 = vrot.lane.b32.xlu0 %v240, 90
      %v1168 = vpop.permute.xlu0 %1167
      %1169 = vrot.lane.b32.xlu0 %v241, 90
      %v1170 = vpop.permute.xlu0 %1169
      %1171 = vrot.lane.b32.xlu0 %v242, 90
      %v1172 = vpop.permute.xlu0 %1171
      %vm1173 = vcmask 736256
      %v1174 = vsel %vm1173, %v1158, %v1160
      %v1175 = vsel %vm1173, %v1160, %v1162
      %v1176 = vsel %vm1173, %v1162, %v1164
      %v1177 = vsel %vm1173, %v1166, %v1168
      %v1178 = vsel %vm1173, %v1168, %v1170
      %v1179 = vsel %vm1173, %v1170, %v1172
      %v1187 = vsel %vm272, %v1156, 0
      %1189 = vmatprep.subr.bf16.mxu0 %v1175
      %1190 = vmatpush1.bf16.msra.mxu0 %v1174
      %1191 = vmatprep.subr.bf16.mxu0 %v1178
      %1192 = vmatpush1.bf16.msra.mxu0 %v1177
      %1193 = vmatprep.subr.bf16.mxu0 0
      %1194 = vmatpush1.bf16.msra.mxu0 0
      %1195 = vmatprep.subr.bf16.mxu0 0
      %1196 = vmatpush1.bf16.msra.mxu0 0
      %1197 = vmatprep.subr.bf16.mxu0 0
      %1198 = vmatpush1.bf16.msra.mxu0 0
      %1199 = vmatprep.subr.bf16.mxu0 0
      %1200 = vmatpush1.bf16.msra.mxu0 0
      %1201 = vmatprep.subr.bf16.mxu0 0
      %1202 = vmatpush1.bf16.msra.mxu0 0
      %1203 = vmatprep.subr.bf16.mxu0 0
      %1204 = vmatpush1.bf16.msra.mxu0 0
      %1205 = vmatprep.subr.bf16.mxu0 0
      %1206 = vmatpush1.bf16.msra.mxu0 0
      %1207 = vmatprep.subr.bf16.mxu0 0
      %1208 = vmatpush1.bf16.msra.mxu0 0
      %1209 = vmatprep.subr.bf16.mxu0 0
      %1210 = vmatpush1.bf16.msra.mxu0 0
      %1211 = vmatprep.subr.bf16.mxu0 0
      %1212 = vmatpush1.bf16.msra.mxu0 0
      %1213 = vmatprep.subr.bf16.mxu0 0
      %1214 = vmatpush1.bf16.msra.mxu0 0
      %1215 = vmatprep.subr.bf16.mxu0 0
      %1216 = vmatpush1.bf16.msra.mxu0 0
      %1217 = vmatprep.subr.bf16.mxu0 0
      %1218 = vmatpush1.bf16.msra.mxu0 0
      %1219 = vmatprep.subr.bf16.mxu0 0
      %1220 = vmatpush1.bf16.msra.mxu0 0
      %1221 = vmatprep.mubr.bf16.mxu0 0
      %1222 = vmatmul.mubr.bf16.gmra.mrb[0].mxu0 %v1187
      %v1223 = vpop.f32.mrb[0].mxu0
      %v1224 = vadd.f32 0.0, %v1223
      %v1225 = vpop.f32.mrb[0].mxu0
      %v1226 = vadd.f32 0.0, %v1225
      %v1227 = vpop.f32.mrb[0].mxu0
      %v1228 = vpop.f32.mrb[0].mxu0
      %1229 = vdwg.mxu0
      %1230 = vmatprep.subr.bf16.mxu0 0
      %1231 = vmatpush1.bf16.msra.mxu0 %v1176
      %1232 = vmatprep.subr.bf16.mxu0 0
      %1233 = vmatpush1.bf16.msra.mxu0 %v1179
      %1234 = vmatprep.subr.bf16.mxu0 0
      %1235 = vmatpush1.bf16.msra.mxu0 0
      %1236 = vmatprep.subr.bf16.mxu0 0
      %1237 = vmatpush1.bf16.msra.mxu0 0
      %1238 = vmatprep.subr.bf16.mxu0 0
      %1239 = vmatpush1.bf16.msra.mxu0 0
      %1240 = vmatprep.subr.bf16.mxu0 0
      %1241 = vmatpush1.bf16.msra.mxu0 0
      %1242 = vmatprep.subr.bf16.mxu0 0
      %1243 = vmatpush1.bf16.msra.mxu0 0
      %1244 = vmatprep.subr.bf16.mxu0 0
      %1245 = vmatpush1.bf16.msra.mxu0 0
      %1246 = vmatprep.subr.bf16.mxu0 0
      %1247 = vmatpush1.bf16.msra.mxu0 0
      %1248 = vmatprep.subr.bf16.mxu0 0
      %1249 = vmatpush1.bf16.msra.mxu0 0
      %1250 = vmatprep.subr.bf16.mxu0 0
      %1251 = vmatpush1.bf16.msra.mxu0 0
      %1252 = vmatprep.subr.bf16.mxu0 0
      %1253 = vmatpush1.bf16.msra.mxu0 0
      %1254 = vmatprep.subr.bf16.mxu0 0
      %1255 = vmatpush1.bf16.msra.mxu0 0
      %1256 = vmatprep.subr.bf16.mxu0 0
      %1257 = vmatpush1.bf16.msra.mxu0 0
      %1258 = vmatprep.subr.bf16.mxu0 0
      %1259 = vmatpush1.bf16.msra.mxu0 0
      %1260 = vmatprep.subr.bf16.mxu0 0
      %1261 = vmatpush1.bf16.msra.mxu0 0
      %1262 = vmatprep.mubr.bf16.mxu0 0
      %1263 = vmatmul.mubr.bf16.gmra.mrb[0].mxu0 %v1187
      %v1264 = vpop.f32.mrb[0].mxu0
      %v1265 = vadd.f32 0.0, %v1264
      %v1266 = vpop.f32.mrb[0].mxu0
      %v1267 = vpop.f32.mrb[0].mxu0
      %v1268 = vpop.f32.mrb[0].mxu0
      %1269 = vdwg.mxu0
      %v1270 = vadd.f32 %v1152, %v1224
      %v1271 = vadd.f32 %v1153, %v1226
      %v1272 = vadd.f32 %v1154, %v1265
      %v1273 = vld [vmem:[%s2] sm:$0xff]
      %1275 = vset.pattern.permute.xlu0 0
      %1276 = vperm.xlu0 %1275, %v1273
      %v1277 = vpop.permute.xlu0 %1276
      %v1279 = vadd.f32 %v1270, %v1277
      %v1280 = vadd.f32 %v1271, %v1277
      %v1281 = vadd.f32 %v1272, %v1277
      %s1282 = sld [smem:[#allocation2]]
      %vm1283 = vcmp.ge.f32.partialorder %v1279, 0.0
      %vm1284 = vcmp.ge.f32.partialorder %v1280, 0.0
      %vm1285 = vcmp.ge.f32.partialorder %v1281, 0.0
      %v1286 = vstv %s1282
      %v1287 = vmul.f32 %v1286, %v1279
      %v1288 = vmul.f32 %v1286, %v1280
      %v1289 = vmul.f32 %v1286, %v1281
      %v1290 = vsel %vm1283, %v1279, %v1287
      %v1291 = vsel %vm1284, %v1280, %v1288
      %v1292 = vsel %vm1285, %v1281, %v1289
      %v1293 = vpack.c.bf16 %v1290, %v1290
      %v1294 = vpack.c.bf16 %v1291, %v1291
      %v1295 = vpack.c.bf16 %v1292, %v1292
      %v1299 = vunpack.c.l.b16 %v1293
      %v1300 = vunpack.c.l.b16 %v1294
      %v1301 = vunpack.c.l.b16 %v1295
      %v1302 = vpack.c.b16 %v1300, %v1299
      %v1303 = vpack.c.b16 %v1301, %v1301
      %1306 = vst [vmem:[%s198] sm:$0xff] %v1302
      %1307 = vst [vmem:[%s198 + $0x8] sm:$0xf] %v1303
      %p1308 = scmp.lt.s32.totalorder %s16, 1
      %s1309 = scalar_select %p1308, %s16, 1
      %s1310 = smul.addr %s1309, 3
      %s1311 = smul.addr %s1310, 4
      %s1312 = scalar_lea.vmem %s4, %s1311
      // Predicated region
      $region37: #{feedback_block_custom_forward.10} parent=35 // pred_check
        %p1313 = pneg %p123
      $region38: #{feedback_block_custom_forward.10} parent=35 // pred_check_branch
        %1315 = sbr.rel (%p1313) target = $region40
      $region39: #{feedback_block_custom_forward.10} parent=35 // pred_region
        _
      $region40: #{feedback_block_custom_forward.10} parent=35 // pred_fallthru
        _
    $region36: #{feedback_block_custom_forward.10} parent=5 // pred_fallthru
      _
    %p1316 = scmp.le.s32.totalorder 2, %s11
    // Predicated region
    $region41: #{feedback_block_custom_forward.10} parent=5 // pred_check
      %p1317 = pneg %p1316
    $region42: #{feedback_block_custom_forward.10} parent=5 // pred_check_branch
      %1319 = sbr.rel (%p1317) target = $region44
    $region43: #{feedback_block_custom_forward.10} parent=5 // pred_region
      %s1320 = ssub.s32 %s11, 2
      // Predicated region
      $region45: #{feedback_block_custom_forward.10} parent=43 // pred_check
        %p1321 = pneg %p129
      $region46: #{feedback_block_custom_forward.10} parent=43 // pred_check_branch
        %1323 = sbr.rel (%p1321) target = $region48
      $region47: #{feedback_block_custom_forward.10} parent=43 // pred_region
        %p1324 = scmp.lt.s32.totalorder %s17, 1
        %s1325 = scalar_select %p1324, %s17, 1
        %s1326 = smul.addr %s1325, 3
        %s1327 = smul.addr %s1326, 4
        %s1328 = scalar_lea.vmem %s4, %s1327
      $region48: #{feedback_block_custom_forward.10} parent=43 // pred_fallthru
        _
    $region44: #{feedback_block_custom_forward.10} parent=5 // pred_fallthru
      _
  $region6: #{feedback_block_custom_forward.10} parent=0 // loop_footer
    %s15 = sadd.s32 1, %s11
  $region7: #{feedback_block_custom_forward.10} parent=0 // loop_footer_branch
    %10 = sbr.rel target = $region3
  $region8: #{feedback_block_custom_forward.10} parent=0 // loop_exit
    _

// kernel: feedback_block_custom_forward.13
$region0: #{feedback_block_custom_forward.13}
  #allocation0 [shape = 'u32[]', space=smem, size = 0x4, offset = 0x4, fixed_abs, tag = 'smem constant byte address 0x4 - core index']
  #allocation1 [shape = 'u32[144,128]{1,0:T(1,128)}', space=vmem, size = 0x12000, scoped, tag = 'internal scratch']
  #allocation2 [shape = 'f32[1]{0:T(128)S(6)}', space=smem, size = 0x200, scoped, tag = 'scoped memory for feedback_block_custom_forward.13']
  %s0 = inlined_call_operand.vmem [shape: bf16[2,16,1024], index: 0, kind: input, shape index: {}]
  %s1 = inlined_call_operand.vmem [shape: bf16[1,8,16], index: 1, kind: input, shape index: {}]
  %s2 = inlined_call_operand.vmem [shape: f32[8,1], index: 2, kind: input, shape index: {}]
  %s3 = inlined_call_operand.<no memory space> [shape: f32[1], index: 3, kind: input, shape index: {}]
  %s4 = inlined_call_operand.vmem [shape: bf16[2,8,1024], index: 4, kind: output, shape index: {}]
  %s5 = sld [smem:[#allocation0]]
  $region49: #{feedback_block_custom_forward.13} parent=0
    _
  %s7 = ssub.s32 1, %s5
  %s8 = scalar_select 0, %s7, %s5
  %9 = sst [smem:[#allocation2]] %s3
  loop: start=0, step=1, limit=4
  $region2: #{feedback_block_custom_forward.13} parent=0 // loop_pre_header
    _
  $region3: #{feedback_block_custom_forward.13} parent=0 // loop_header
    %s11 = sphi 0, %s15
    %p12 = scmp.ge.s32.totalorder %s11, 4
    %s21 = sphi 0, %s23
    %s24 = sphi 0, %s21
    %s25 = sphi 0, %s24
    %s41 = sphi 0, %s25
    %s45 = sphi 0, %s45
    %s47 = sphi 0, %s45
    %s48 = sphi 0, %s47
    %s62 = sphi 0, %s48
    %s66 = sphi 0, %s66
    %s68 = sphi 0, %s66
    %s69 = sphi 0, %s68
    %s83 = sphi 0, %s69
    %s87 = sphi 0, %s87
    %s89 = sphi 0, %s87
    %s90 = sphi 0, %s89
    %s104 = sphi 0, %s90
    %s110 = sphi 0, %s112
    %s113 = sphi 0, %s110
    %s114 = sphi 0, %s113
    %s130 = sphi 0, %s114
  $region4: #{feedback_block_custom_forward.13} parent=0 // loop_header_branch
    %14 = sbr.rel (%p12) target = $region8
  $region5: #{feedback_block_custom_forward.13} parent=0 // loop_body
    %s16 = ssub.s32 %s11, 1
    %s17 = ssub.s32 %s11, 2
    %s18 = sadd.s32 %s11, 1
    %s19 = ssub.s32 %s11, %s18
    %p20 = scmp.eq.s32.totalorder %s19, 0
    %s22 = sadd.s32 %s21, 1
    %s23 = scalar_select %p20, %s21, %s22
    %p26 = pneg %p20
    %p27 = scmp.eq.s32.totalorder %s11, 1
    %p28 = por %p26, %p27
    %p29 = scmp.ne.s32.totalorder %s21, %s24
    %p30 = scmp.eq.s32.totalorder %s11, 0
    %p31 = por %p29, %p30
    %p32 = scmp.ne.s32.totalorder %s21, %s24
    %p33 = scmp.eq.s32.totalorder %s16, 1
    %p34 = por %p32, %p33
    %p35 = scmp.ne.s32.totalorder %s24, %s25
    %p36 = scmp.eq.s32.totalorder %s16, 0
    %p37 = por %p35, %p36
    %p38 = scmp.ne.s32.totalorder %s24, %s25
    %p39 = scmp.eq.s32.totalorder %s17, 1
    %p40 = por %p38, %p39
    %p42 = scmp.ne.s32.totalorder %s25, %s41
    %p43 = scmp.eq.s32.totalorder %s17, 0
    %p44 = por %p42, %p43
    %s46 = sadd.s32 %s45, 1
    %p49 = scmp.eq.s32.totalorder %s11, 1
    %p50 = scmp.ne.s32.totalorder %s45, %s47
    %p51 = scmp.eq.s32.totalorder %s11, 0
    %p52 = por %p50, %p51
    %p53 = scmp.ne.s32.totalorder %s45, %s47
    %p54 = scmp.eq.s32.totalorder %s16, 1
    %p55 = por %p53, %p54
    %p56 = scmp.ne.s32.totalorder %s47, %s48
    %p57 = scmp.eq.s32.totalorder %s16, 0
    %p58 = por %p56, %p57
    %p59 = scmp.ne.s32.totalorder %s47, %s48
    %p60 = scmp.eq.s32.totalorder %s17, 1
    %p61 = por %p59, %p60
    %p63 = scmp.ne.s32.totalorder %s48, %s62
    %p64 = scmp.eq.s32.totalorder %s17, 0
    %p65 = por %p63, %p64
    %s67 = sadd.s32 %s66, 1
    %p70 = scmp.eq.s32.totalorder %s11, 1
    %p71 = scmp.ne.s32.totalorder %s66, %s68
    %p72 = scmp.eq.s32.totalorder %s11, 0
    %p73 = por %p71, %p72
    %p74 = scmp.ne.s32.totalorder %s66, %s68
    %p75 = scmp.eq.s32.totalorder %s16, 1
    %p76 = por %p74, %p75
    %p77 = scmp.ne.s32.totalorder %s68, %s69
    %p78 = scmp.eq.s32.totalorder %s16, 0
    %p79 = por %p77, %p78
    %p80 = scmp.ne.s32.totalorder %s68, %s69
    %p81 = scmp.eq.s32.totalorder %s17, 1
    %p82 = por %p80, %p81
    %p84 = scmp.ne.s32.totalorder %s69, %s83
    %p85 = scmp.eq.s32.totalorder %s17, 0
    %p86 = por %p84, %p85
    %s88 = sadd.s32 %s87, 1
    %p91 = scmp.eq.s32.totalorder %s11, 1
    %p92 = scmp.ne.s32.totalorder %s87, %s89
    %p93 = scmp.eq.s32.totalorder %s11, 0
    %p94 = por %p92, %p93
    %p95 = scmp.ne.s32.totalorder %s87, %s89
    %p96 = scmp.eq.s32.totalorder %s16, 1
    %p97 = por %p95, %p96
    %p98 = scmp.ne.s32.totalorder %s89, %s90
    %p99 = scmp.eq.s32.totalorder %s16, 0
    %p100 = por %p98, %p99
    %p101 = scmp.ne.s32.totalorder %s89, %s90
    %p102 = scmp.eq.s32.totalorder %s17, 1
    %p103 = por %p101, %p102
    %p105 = scmp.ne.s32.totalorder %s90, %s104
    %p106 = scmp.eq.s32.totalorder %s17, 0
    %p107 = por %p105, %p106
    %s108 = ssub.s32 %s11, %s18
    %p109 = scmp.eq.s32.totalorder %s108, 0
    %s111 = sadd.s32 %s110, 1
    %s112 = scalar_select %p109, %s110, %s111
    %p115 = pneg %p109
    %p116 = scmp.eq.s32.totalorder %s11, 1
    %p117 = por %p115, %p116
    %p118 = scmp.ne.s32.totalorder %s110, %s113
    %p119 = scmp.eq.s32.totalorder %s11, 0
    %p120 = por %p118, %p119
    %p121 = scmp.ne.s32.totalorder %s110, %s113
    %p122 = scmp.eq.s32.totalorder %s16, 1
    %p123 = por %p121, %p122
    %p124 = scmp.ne.s32.totalorder %s113, %s114
    %p125 = scmp.eq.s32.totalorder %s16, 0
    %p126 = por %p124, %p125
    %p127 = scmp.ne.s32.totalorder %s113, %s114
    %p128 = scmp.eq.s32.totalorder %s17, 1
    %p129 = por %p127, %p128
    %p131 = scmp.ne.s32.totalorder %s114, %s130
    %p132 = scmp.eq.s32.totalorder %s17, 0
    %p133 = por %p131, %p132
    %p134 = scmp.le.s32.totalorder 1, %s11
    %p135 = scmp.lt.s32.totalorder %s11, 3
    %p136 = pnand %p134, %p135
    %p137 = pneg %p136
    // Predicated region
    $region9: #{feedback_block_custom_forward.13} parent=5 // pred_check
      _
    $region10: #{feedback_block_custom_forward.13} parent=5 // pred_check_branch
      %139 = sbr.rel (%p136) target = $region12
    $region11: #{feedback_block_custom_forward.13} parent=5 // pred_region
      %s140 = ssub.s32 %s11, 1
      // Predicated region
      $region13: #{feedback_block_custom_forward.13} parent=11 // pred_check
        %p141 = pneg %p58
      $region14: #{feedback_block_custom_forward.13} parent=11 // pred_check_branch
        %143 = sbr.rel (%p141) target = $region16
      $region15: #{feedback_block_custom_forward.13} parent=11 // pred_region
        _
      $region16: #{feedback_block_custom_forward.13} parent=11 // pred_fallthru
        _
      // Predicated region
      $region17: #{feedback_block_custom_forward.13} parent=11 // pred_check
        %p144 = pneg %p79
      $region18: #{feedback_block_custom_forward.13} parent=11 // pred_check_branch
        %146 = sbr.rel (%p144) target = $region20
      $region19: #{feedback_block_custom_forward.13} parent=11 // pred_region
        _
      $region20: #{feedback_block_custom_forward.13} parent=11 // pred_fallthru
        _
      // Predicated region
      $region21: #{feedback_block_custom_forward.13} parent=11 // pred_check
        %p147 = pneg %p100
      $region22: #{feedback_block_custom_forward.13} parent=11 // pred_check_branch
        %149 = sbr.rel (%p147) target = $region24
      $region23: #{feedback_block_custom_forward.13} parent=11 // pred_region
        _
      $region24: #{feedback_block_custom_forward.13} parent=11 // pred_fallthru
        _
    $region12: #{feedback_block_custom_forward.13} parent=5 // pred_fallthru
      _
    %p150 = scmp.lt.s32.totalorder %s11, 2
    // Predicated region
    $region25: #{feedback_block_custom_forward.13} parent=5 // pred_check
      %p151 = pneg %p150
    $region26: #{feedback_block_custom_forward.13} parent=5 // pred_check_branch
      %153 = sbr.rel (%p151) target = $region28
    $region27: #{feedback_block_custom_forward.13} parent=5 // pred_region
      // Predicated region
      $region29: #{feedback_block_custom_forward.13} parent=27 // pred_check
        %p154 = pneg %p31
      $region30: #{feedback_block_custom_forward.13} parent=27 // pred_check_branch
        %156 = sbr.rel (%p154) target = $region32
      $region31: #{feedback_block_custom_forward.13} parent=27 // pred_region
        %p157 = scmp.lt.s32.totalorder %s11, 1
        %s158 = scalar_select %p157, %s11, 1
        %s159 = smul.addr %s158, 16
        %s160 = smul.addr %s159, 4
        %s161 = scalar_lea.vmem %s0, %s160
      $region32: #{feedback_block_custom_forward.13} parent=27 // pred_fallthru
        _
    $region28: #{feedback_block_custom_forward.13} parent=5 // pred_fallthru
      _
    %p162 = scmp.le.s32.totalorder 1, %s11
    %p163 = scmp.lt.s32.totalorder %s11, 3
    %p164 = pnand %p162, %p163
    %p165 = pneg %p164
    // Predicated region
    $region33: #{feedback_block_custom_forward.13} parent=5 // pred_check
      _
    $region34: #{feedback_block_custom_forward.13} parent=5 // pred_check_branch
      %167 = sbr.rel (%p164) target = $region36
    $region35: #{feedback_block_custom_forward.13} parent=5 // pred_region
      %s168 = ssub.s32 %s11, 1
      %p169 = scmp.lt.s32.totalorder %s16, 1
      %s170 = scalar_select %p169, %s16, 1
      %s171 = smul.addr %s170, 16
      %s172 = smul.addr %s171, 4
      %s173 = scalar_lea.vmem %s0, %s172
      %p174 = pneg %p37
      %p175 = pneg %p34
      %p176 = pneg %p58
      %p177 = pneg %p55
      %p178 = pneg %p79
      %p179 = pneg %p76
      %p180 = pneg %p100
      %p181 = pneg %p97
      %p182 = pneg %p126
      %p183 = pneg %p123
      %p184 = scmp.lt.s32.totalorder %s16, 1
      %s185 = scalar_select %p184, %s16, 1
      %s186 = smul.addr %s185, 8
      %s187 = smul.addr %s186, 4
      %s188 = scalar_lea.vmem %s4, %s187
      %p189 = scmp.lt.s32.totalorder %s16, 1
      %s190 = scalar_select %p189, %s16, 1
      %s191 = smul.addr %s190, 16
      %s192 = smul.addr %s191, 4
      %s193 = scalar_lea.vmem %s0, %s192
      %p194 = scmp.lt.s32.totalorder %s16, 1
      %s195 = scalar_select %p194, %s16, 1
      %s196 = smul.addr %s195, 8
      %s197 = smul.addr %s196, 4
      %s198 = scalar_lea.vmem %s4, %s197
      %v200 = vld [vmem:[%s193] sm:$0xff]
      %v201 = vld [vmem:[%s193 + $0x8] sm:$0xff]
      %v202 = vld [vmem:[%s193 + $0x10] sm:$0xff]
      %v203 = vld [vmem:[%s193 + $0x18] sm:$0xff]
      %v204 = vld [vmem:[%s193 + $0x20] sm:$0xff]
      %v205 = vld [vmem:[%s193 + $0x28] sm:$0xff]
      %v206 = vld [vmem:[%s193 + $0x30] sm:$0xff]
      %v207 = vld [vmem:[%s193 + $0x38] sm:$0xff]
      %v208 = vld [vmem:[%s1] sm:$0xf]
      %v209 = vld [vmem:[%s2] sm:$0xff]
      %211 = vset.pattern.permute.xlu0 0
      %212 = vperm.xlu0 %211, %v209
      %v213 = vpop.permute.xlu0 %212
      %v223 = vunpack.c.l.b16 %v200
      %v224 = vunpack.c.h.b16 %v200
      %v225 = vunpack.c.l.b16 %v201
      %v226 = vunpack.c.h.b16 %v201
      %v227 = vunpack.c.l.b16 %v202
      %v228 = vunpack.c.h.b16 %v202
      %v229 = vunpack.c.l.b16 %v203
      %v230 = vunpack.c.h.b16 %v203
      %v231 = vunpack.c.l.b16 %v204
      %v232 = vunpack.c.h.b16 %v204
      %v233 = vunpack.c.l.b16 %v205
      %v234 = vunpack.c.h.b16 %v205
      %v235 = vunpack.c.l.b16 %v206
      %v236 = vunpack.c.h.b16 %v206
      %v237 = vunpack.c.l.b16 %v207
      %v238 = vunpack.c.h.b16 %v207
      %v239 = vpack.c.b16 %v231, %v223
      %v240 = vpack.c.b16 %v232, %v224
      %v241 = vpack.c.b16 %v233, %v225
      %v242 = vpack.c.b16 %v234, %v226
      %v243 = vpack.c.b16 %v235, %v227
      %v244 = vpack.c.b16 %v236, %v228
      %v245 = vpack.c.b16 %v237, %v229
      %v246 = vpack.c.b16 %v238, %v230
      %vm255 = vcmask 130048
      %v257 = vsel %vm255, %v208, 0
      %259 = vmatprep.subr.bf16.mxu0 %v240
      %260 = vmatpush1.bf16.msra.mxu0 %v239
      %261 = vmatprep.subr.bf16.mxu0 0
      %262 = vmatpush1.bf16.msra.mxu0 0
      %263 = vmatprep.subr.bf16.mxu0 0
      %264 = vmatpush1.bf16.msra.mxu0 0
      %265 = vmatprep.subr.bf16.mxu0 0
      %266 = vmatpush1.bf16.msra.mxu0 0
      %267 = vmatprep.subr.bf16.mxu0 0
      %268 = vmatpush1.bf16.msra.mxu0 0
      %269 = vmatprep.subr.bf16.mxu0 0
      %270 = vmatpush1.bf16.msra.mxu0 0
      %271 = vmatprep.subr.bf16.mxu0 0
      %272 = vmatpush1.bf16.msra.mxu0 0
      %273 = vmatprep.subr.bf16.mxu0 0
      %274 = vmatpush1.bf16.msra.mxu0 0
      %275 = vmatprep.subr.bf16.mxu0 0
      %276 = vmatpush1.bf16.msra.mxu0 0
      %277 = vmatprep.subr.bf16.mxu0 0
      %278 = vmatpush1.bf16.msra.mxu0 0
      %279 = vmatprep.subr.bf16.mxu0 0
      %280 = vmatpush1.bf16.msra.mxu0 0
      %281 = vmatprep.subr.bf16.mxu0 0
      %282 = vmatpush1.bf16.msra.mxu0 0
      %283 = vmatprep.subr.bf16.mxu0 0
      %284 = vmatpush1.bf16.msra.mxu0 0
      %285 = vmatprep.subr.bf16.mxu0 0
      %286 = vmatpush1.bf16.msra.mxu0 0
      %287 = vmatprep.subr.bf16.mxu0 0
      %288 = vmatpush1.bf16.msra.mxu0 0
      %289 = vmatprep.subr.bf16.mxu0 0
      %290 = vmatpush1.bf16.msra.mxu0 0
      %291 = vmatprep.mubr.bf16.mxu0 0
      %292 = vmatmul.mubr.bf16.gmra.mrb[0].mxu0 %v257
      %v293 = vpop.f32.mrb[0].mxu0
      %v294 = vadd.f32 %v213, %v293
      %v295 = vpop.f32.mrb[0].mxu0
      %v296 = vadd.f32 %v213, %v295
      %v297 = vpop.f32.mrb[0].mxu0
      %v298 = vpop.f32.mrb[0].mxu0
      %299 = vdwg.mxu0
      %300 = vmatprep.subr.bf16.mxu0 %v242
      %301 = vmatpush1.bf16.msra.mxu0 %v241
      %302 = vmatprep.subr.bf16.mxu0 0
      %303 = vmatpush1.bf16.msra.mxu0 0
      %304 = vmatprep.subr.bf16.mxu0 0
      %305 = vmatpush1.bf16.msra.mxu0 0
      %306 = vmatprep.subr.bf16.mxu0 0
      %307 = vmatpush1.bf16.msra.mxu0 0
      %308 = vmatprep.subr.bf16.mxu0 0
      %309 = vmatpush1.bf16.msra.mxu0 0
      %310 = vmatprep.subr.bf16.mxu0 0
      %311 = vmatpush1.bf16.msra.mxu0 0
      %312 = vmatprep.subr.bf16.mxu0 0
      %313 = vmatpush1.bf16.msra.mxu0 0
      %314 = vmatprep.subr.bf16.mxu0 0
      %315 = vmatpush1.bf16.msra.mxu0 0
      %316 = vmatprep.subr.bf16.mxu0 0
      %317 = vmatpush1.bf16.msra.mxu0 0
      %318 = vmatprep.subr.bf16.mxu0 0
      %319 = vmatpush1.bf16.msra.mxu0 0
      %320 = vmatprep.subr.bf16.mxu0 0
      %321 = vmatpush1.bf16.msra.mxu0 0
      %322 = vmatprep.subr.bf16.mxu0 0
      %323 = vmatpush1.bf16.msra.mxu0 0
      %324 = vmatprep.subr.bf16.mxu0 0
      %325 = vmatpush1.bf16.msra.mxu0 0
      %326 = vmatprep.subr.bf16.mxu0 0
      %327 = vmatpush1.bf16.msra.mxu0 0
      %328 = vmatprep.subr.bf16.mxu0 0
      %329 = vmatpush1.bf16.msra.mxu0 0
      %330 = vmatprep.subr.bf16.mxu0 0
      %331 = vmatpush1.bf16.msra.mxu0 0
      %332 = vmatprep.mubr.bf16.mxu0 0
      %333 = vmatmul.mubr.bf16.gmra.mrb[0].mxu0 %v257
      %v334 = vpop.f32.mrb[0].mxu0
      %v335 = vadd.f32 %v213, %v334
      %v336 = vpop.f32.mrb[0].mxu0
      %v337 = vadd.f32 %v213, %v336
      %v338 = vpop.f32.mrb[0].mxu0
      %v339 = vpop.f32.mrb[0].mxu0
      %340 = vdwg.mxu0
      %341 = vmatprep.subr.bf16.mxu0 %v244
      %342 = vmatpush1.bf16.msra.mxu0 %v243
      %343 = vmatprep.subr.bf16.mxu0 0
      %344 = vmatpush1.bf16.msra.mxu0 0
      %345 = vmatprep.subr.bf16.mxu0 0
      %346 = vmatpush1.bf16.msra.mxu0 0
      %347 = vmatprep.subr.bf16.mxu0 0
      %348 = vmatpush1.bf16.msra.mxu0 0
      %349 = vmatprep.subr.bf16.mxu0 0
      %350 = vmatpush1.bf16.msra.mxu0 0
      %351 = vmatprep.subr.bf16.mxu0 0
      %352 = vmatpush1.bf16.msra.mxu0 0
      %353 = vmatprep.subr.bf16.mxu0 0
      %354 = vmatpush1.bf16.msra.mxu0 0
      %355 = vmatprep.subr.bf16.mxu0 0
      %356 = vmatpush1.bf16.msra.mxu0 0
      %357 = vmatprep.subr.bf16.mxu0 0
      %358 = vmatpush1.bf16.msra.mxu0 0
      %359 = vmatprep.subr.bf16.mxu0 0
      %360 = vmatpush1.bf16.msra.mxu0 0
      %361 = vmatprep.subr.bf16.mxu0 0
      %362 = vmatpush1.bf16.msra.mxu0 0
      %363 = vmatprep.subr.bf16.mxu0 0
      %364 = vmatpush1.bf16.msra.mxu0 0
      %365 = vmatprep.subr.bf16.mxu0 0
      %366 = vmatpush1.bf16.msra.mxu0 0
      %367 = vmatprep.subr.bf16.mxu0 0
      %368 = vmatpush1.bf16.msra.mxu0 0
      %369 = vmatprep.subr.bf16.mxu0 0
      %370 = vmatpush1.bf16.msra.mxu0 0
      %371 = vmatprep.subr.bf16.mxu0 0
      %372 = vmatpush1.bf16.msra.mxu0 0
      %373 = vmatprep.mubr.bf16.mxu0 0
      %374 = vmatmul.mubr.bf16.gmra.mrb[0].mxu0 %v257
      %v375 = vpop.f32.mrb[0].mxu0
      %v376 = vadd.f32 %v213, %v375
      %v377 = vpop.f32.mrb[0].mxu0
      %v378 = vadd.f32 %v213, %v377
      %v379 = vpop.f32.mrb[0].mxu0
      %v380 = vpop.f32.mrb[0].mxu0
      %381 = vdwg.mxu0
      %382 = vmatprep.subr.bf16.mxu0 %v246
      %383 = vmatpush1.bf16.msra.mxu0 %v245
      %384 = vmatprep.subr.bf16.mxu0 0
      %385 = vmatpush1.bf16.msra.mxu0 0
      %386 = vmatprep.subr.bf16.mxu0 0
      %387 = vmatpush1.bf16.msra.mxu0 0
      %388 = vmatprep.subr.bf16.mxu0 0
      %389 = vmatpush1.bf16.msra.mxu0 0
      %390 = vmatprep.subr.bf16.mxu0 0
      %391 = vmatpush1.bf16.msra.mxu0 0
      %392 = vmatprep.subr.bf16.mxu0 0
      %393 = vmatpush1.bf16.msra.mxu0 0
      %394 = vmatprep.subr.bf16.mxu0 0
      %395 = vmatpush1.bf16.msra.mxu0 0
      %396 = vmatprep.subr.bf16.mxu0 0
      %397 = vmatpush1.bf16.msra.mxu0 0
      %398 = vmatprep.subr.bf16.mxu0 0
      %399 = vmatpush1.bf16.msra.mxu0 0
      %400 = vmatprep.subr.bf16.mxu0 0
      %401 = vmatpush1.bf16.msra.mxu0 0
      %402 = vmatprep.subr.bf16.mxu0 0
      %403 = vmatpush1.bf16.msra.mxu0 0
      %404 = vmatprep.subr.bf16.mxu0 0
      %405 = vmatpush1.bf16.msra.mxu0 0
      %406 = vmatprep.subr.bf16.mxu0 0
      %407 = vmatpush1.bf16.msra.mxu0 0
      %408 = vmatprep.subr.bf16.mxu0 0
      %409 = vmatpush1.bf16.msra.mxu0 0
      %410 = vmatprep.subr.bf16.mxu0 0
      %411 = vmatpush1.bf16.msra.mxu0 0
      %412 = vmatprep.subr.bf16.mxu0 0
      %413 = vmatpush1.bf16.msra.mxu0 0
      %414 = vmatprep.mubr.bf16.mxu0 0
      %415 = vmatmul.mubr.bf16.gmra.mrb[0].mxu0 %v257
      %v416 = vpop.f32.mrb[0].mxu0
      %v417 = vadd.f32 %v213, %v416
      %v418 = vpop.f32.mrb[0].mxu0
      %v419 = vadd.f32 %v213, %v418
      %v420 = vpop.f32.mrb[0].mxu0
      %v421 = vpop.f32.mrb[0].mxu0
      %422 = vdwg.mxu0
      %s423 = sld [smem:[#allocation2]]
      %vm424 = vcmp.ge.f32.partialorder %v294, 0.0
      %vm425 = vcmp.ge.f32.partialorder %v296, 0.0
      %vm426 = vcmp.ge.f32.partialorder %v335, 0.0
      %vm427 = vcmp.ge.f32.partialorder %v337, 0.0
      %vm428 = vcmp.ge.f32.partialorder %v376, 0.0
      %vm429 = vcmp.ge.f32.partialorder %v378, 0.0
      %vm430 = vcmp.ge.f32.partialorder %v417, 0.0
      %vm431 = vcmp.ge.f32.partialorder %v419, 0.0
      %v432 = vstv %s423
      %v433 = vmul.f32 %v432, %v294
      %v434 = vmul.f32 %v432, %v296
      %v435 = vmul.f32 %v432, %v335
      %v436 = vmul.f32 %v432, %v337
      %v437 = vmul.f32 %v432, %v376
      %v438 = vmul.f32 %v432, %v378
      %v439 = vmul.f32 %v432, %v417
      %v440 = vmul.f32 %v432, %v419
      %v441 = vsel %vm424, %v294, %v433
      %v442 = vsel %vm425, %v296, %v434
      %v443 = vsel %vm426, %v335, %v435
      %v444 = vsel %vm427, %v337, %v436
      %v445 = vsel %vm428, %v376, %v437
      %v446 = vsel %vm429, %v378, %v438
      %v447 = vsel %vm430, %v417, %v439
      %v448 = vsel %vm431, %v419, %v440
      %v449 = vpack.c.bf16 %v441, %v441
      %v450 = vpack.c.bf16 %v442, %v442
      %v451 = vpack.c.bf16 %v443, %v443
      %v452 = vpack.c.bf16 %v444, %v444
      %v453 = vpack.c.bf16 %v445, %v445
      %v454 = vpack.c.bf16 %v446, %v446
      %v455 = vpack.c.bf16 %v447, %v447
      %v456 = vpack.c.bf16 %v448, %v448
      %v465 = vunpack.c.l.b16 %v449
      %v466 = vunpack.c.l.b16 %v450
      %v467 = vunpack.c.l.b16 %v451
      %v468 = vunpack.c.l.b16 %v452
      %v469 = vunpack.c.l.b16 %v453
      %v470 = vunpack.c.l.b16 %v454
      %v471 = vunpack.c.l.b16 %v455
      %v472 = vunpack.c.l.b16 %v456
      %v473 = vpack.c.b16 %v466, %v465
      %v474 = vpack.c.b16 %v468, %v467
      %v475 = vpack.c.b16 %v470, %v469
      %v476 = vpack.c.b16 %v472, %v471
      %481 = vst [vmem:[%s198] sm:$0xff] %v473
      %482 = vst [vmem:[%s198 + $0x8] sm:$0xff] %v474
      %483 = vst [vmem:[%s198 + $0x10] sm:$0xff] %v475
      %484 = vst [vmem:[%s198 + $0x18] sm:$0xff] %v476
      %p485 = scmp.lt.s32.totalorder %s16, 1
      %s486 = scalar_select %p485, %s16, 1
      %s487 = smul.addr %s486, 8
      %s488 = smul.addr %s487, 4
      %s489 = scalar_lea.vmem %s4, %s488
      // Predicated region
      $region37: #{feedback_block_custom_forward.13} parent=35 // pred_check
        %p490 = pneg %p123
      $region38: #{feedback_block_custom_forward.13} parent=35 // pred_check_branch
        %492 = sbr.rel (%p490) target = $region40
      $region39: #{feedback_block_custom_forward.13} parent=35 // pred_region
        _
      $region40: #{feedback_block_custom_forward.13} parent=35 // pred_fallthru
        _
    $region36: #{feedback_block_custom_forward.13} parent=5 // pred_fallthru
      _
    %p493 = scmp.le.s32.totalorder 2, %s11
    // Predicated region
    $region41: #{feedback_block_custom_forward.13} parent=5 // pred_check
      %p494 = pneg %p493
    $region42: #{feedback_block_custom_forward.13} parent=5 // pred_check_branch
      %496 = sbr.rel (%p494) target = $region44
    $region43: #{feedback_block_custom_forward.13} parent=5 // pred_region
      %s497 = ssub.s32 %s11, 2
      // Predicated region
      $region45: #{feedback_block_custom_forward.13} parent=43 // pred_check
        %p498 = pneg %p129
      $region46: #{feedback_block_custom_forward.13} parent=43 // pred_check_branch
        %500 = sbr.rel (%p498) target = $region48
      $region47: #{feedback_block_custom_forward.13} parent=43 // pred_region
        %p501 = scmp.lt.s32.totalorder %s17, 1
        %s502 = scalar_select %p501, %s17, 1
        %s503 = smul.addr %s502, 8
        %s504 = smul.addr %s503, 4
        %s505 = scalar_lea.vmem %s4, %s504
      $region48: #{feedback_block_custom_forward.13} parent=43 // pred_fallthru
        _
    $region44: #{feedback_block_custom_forward.13} parent=5 // pred_fallthru
      _
  $region6: #{feedback_block_custom_forward.13} parent=0 // loop_footer
    %s15 = sadd.s32 1, %s11
  $region7: #{feedback_block_custom_forward.13} parent=0 // loop_footer_branch
    %10 = sbr.rel target = $region3
  $region8: #{feedback_block_custom_forward.13} parent=0 // loop_exit
    _

</llo_original>
